<compile_context>
chip_gen: v7x
topology: tpu7x:2x2x1
jax: 0.10.0
libtpu: 0.0.40
codegen_flags: <defaults>
</compile_context>

<pallas_src>
import jax
import jax.numpy as jnp
from jax.experimental import pallas as pl
from jax.experimental.pallas import tpu as pltpu  # noqa: F401  (kept for completeness)

# ---- small synthetic BERT config (module __init__ implies these shapes) ----
BATCH = 2
SEQ = 8
PRE_SEQ = 8                      # pre_seq_len
HIDDEN = 32                      # bert.config.hidden_size
N_HEAD = 4                       # bert.config.num_attention_heads
HEAD_DIM = HIDDEN // N_HEAD      # n_embd
N_LAYER = 2                      # bert.config.num_hidden_layers
INTER = 4 * HIDDEN               # BERT intermediate size (=128, lane dense)
VOCAB = 64
MAX_POS = 64
N_CLASSES = 9                    # TokenC head: SSCModule(hidden, output_classes=9)
HEAD_PAD = 128                   # lane-dense padded classifier width
QKV_PAD = 128                    # lane-dense padded fused Q/K/V width
SKV = PRE_SEQ + SEQ              # key/value length = prefix + tokens
TOKENS = BATCH * SEQ
LANES = BATCH * N_HEAD * SKV     # block-diagonal key/value lane axis
LN_EPS = 1e-12
DTYPE = jnp.float32

assert LANES == 128, "block-diagonal attention layout assumes one full lane axis"


# ----------------------------- Pallas kernel --------------------------------
def _ln(x, g, b):
    mean = jnp.mean(x, axis=-1, keepdims=True)
    var = jnp.mean(jnp.square(x - mean), axis=-1, keepdims=True)
    return (x - mean) * jax.lax.rsqrt(var + LN_EPS) * g + b


def _bert_kernel(x0_ref, addmask_ref, pk_ref, pv_ref, pt_ref, hm_ref, seg_ref,
                 emb_g_ref, emb_b_ref,
                 qkv_w_ref, qkv_b_ref,
                 ao_w_ref, ao_b_ref, a_ln_g_ref, a_ln_b_ref,
                 i_w_ref, i_b_ref, o_w_ref, o_b_ref, o_ln_g_ref, o_ln_b_ref,
                 pool_w_ref, pool_b_ref, head_w_ref, head_b_ref,
                 logits_ref):
    f32 = jnp.float32
    scale = HEAD_DIM ** -0.5

    # loop-invariant constants: load once, reuse across layers
    addmask = addmask_ref[...]        # (TOKENS, LANES) additive mask (pad + x-batch)
    pt = pt_ref[...]                  # (LANES, TOKENS) placement of computed K/V rows
    hm = hm_ref[...]                  # (LANES, HIDDEN) head mask per lane
    seg = seg_ref[...]                # (LANES, LANES) block-diag ones (softmax groups)

    # fused BERT-embedding LayerNorm (dropout = identity at inference)
    x = _ln(x0_ref[...].astype(f32), emb_g_ref[...], emb_b_ref[...])   # (TOKENS, HIDDEN)

    for l in range(N_LAYER):          # static unrolled layer loop, x carried as value
        # ---- fused Q/K/V projection: one MXU matmul, output padded to 128 lanes ----
        qkv = jnp.dot(x, qkv_w_ref[l], preferred_element_type=f32) + qkv_b_ref[l]
        q = qkv[:, 0 * HIDDEN:1 * HIDDEN]
        k = qkv[:, 1 * HIDDEN:2 * HIDDEN]
        v = qkv[:, 2 * HIDDEN:3 * HIDDEN]

        # ---- block-diagonal K/V rows: prefix constant + placed computed rows ----
        k_rows = pk_ref[l] + hm * jnp.dot(pt, k, preferred_element_type=f32)   # (LANES, HIDDEN)
        v_rows = pv_ref[l] + hm * jnp.dot(pt, v, preferred_element_type=f32)   # (LANES, HIDDEN)

        # ---- scores over all (batch, head, key) lanes in one matmul ----
        s = jax.lax.dot_general(q, k_rows, (((1,), (1,)), ((), ())),
                                preferred_element_type=f32)                    # (TOKENS, LANES)
        s = s * scale + addmask
        s = s - jnp.max(s, axis=-1, keepdims=True)
        p = jnp.exp(s)                             # masked lanes underflow to exactly 0
        denom = jnp.dot(p, seg, preferred_element_type=f32)   # segmented (per-16-lane) sums
        p = p / (denom + 1e-30)                    # x-batch groups: 0 / eps = 0

        ctx = jnp.dot(p, v_rows, preferred_element_type=f32)                   # (TOKENS, HIDDEN)
        attn = jnp.dot(ctx, ao_w_ref[l], preferred_element_type=f32) + ao_b_ref[l]
        h1 = _ln(attn + x, a_ln_g_ref[l], a_ln_b_ref[l])

        # ---- fused FFN: (TOKENS, INTER) GELU intermediate never leaves VMEM ----
        inter = jnp.dot(h1, i_w_ref[l], preferred_element_type=f32) + i_b_ref[l]
        # TODO(synk): HF BERT uses exact erf-GELU; tanh approximation used here.
        inter = jax.nn.gelu(inter, approximate=True)
        ffn = jnp.dot(inter, o_w_ref[l], preferred_element_type=f32) + o_b_ref[l]
        x = _ln(ffn + h1, o_ln_g_ref[l], o_ln_b_ref[l])

    # ---- epilogue: pooler (tanh) + TokenC head (dropout = identity) ----
    # [CLS] rows picked with static sublane slices (no iota / one-hot matmul).
    cls = jnp.concatenate([x[b * SEQ:b * SEQ + 1, :] for b in range(BATCH)], axis=0)
    pooled = jnp.tanh(
        jnp.dot(cls, pool_w_ref[...], preferred_element_type=f32) + pool_b_ref[...])
    logits_ref[...] = (
        jnp.dot(pooled, head_w_ref[...], preferred_element_type=f32)
        + head_b_ref[...]).astype(logits_ref.dtype)


def bert_prefix_forward(x0, addmask, pk_rows, pv_rows, pt, hm, seg, p):
    # Single grid-less pallas_call: every operand is a full-array VMEM block
    # (total resident footprint is ~0.3 MiB, far under any VMEM limit).
    return pl.pallas_call(
        _bert_kernel,
        out_shape=jax.ShapeDtypeStruct((BATCH, HEAD_PAD), DTYPE),
    )(x0, addmask, pk_rows, pv_rows, pt, hm, seg,
      p["emb_ln_g"], p["emb_ln_b"],
      p["qkv_w"], p["qkv_b"],
      p["ao_w"], p["ao_b"], p["a_ln_g"], p["a_ln_b"],
      p["i_w"], p["i_b"], p["o_w"], p["o_b"], p["o_ln_g"], p["o_ln_b"],
      p["pool_w"], p["pool_b"], p["head_w"], p["head_b"])


# ------------------------------ parameters ----------------------------------
def init_params(key):
    def dense(k, fan_in, fan_out):
        k1, k2 = jax.random.split(k)
        w = jax.random.normal(k1, (fan_in, fan_out), DTYPE) * 0.02
        b = jax.random.normal(k2, (fan_out,), DTYPE) * 0.02
        return w, b

    n_keys = 6 + 6 * N_LAYER
    keys = jax.random.split(key, n_keys)
    ki = iter(range(n_keys))

    params = {
        "word_emb": jax.random.normal(keys[next(ki)], (VOCAB, HIDDEN), DTYPE) * 0.02,
        "pos_emb": jax.random.normal(keys[next(ki)], (MAX_POS, HIDDEN), DTYPE) * 0.02,
        "type_emb": jax.random.normal(keys[next(ki)], (2, HIDDEN), DTYPE) * 0.02,
        "emb_ln_g": jnp.ones((1, HIDDEN), DTYPE),
        "emb_ln_b": jnp.zeros((1, HIDDEN), DTYPE),
    }

    qkv_w, qkv_b = [], []
    ao_w, ao_b, a_g, a_b = [], [], [], []
    i_w, i_b, o_w, o_b, o_g, o_b2 = [], [], [], [], [], []
    wpad = jnp.zeros((HIDDEN, QKV_PAD - 3 * HIDDEN), DTYPE)
    bpad = jnp.zeros((QKV_PAD - 3 * HIDDEN,), DTYPE)
    for _ in range(N_LAYER):
        qw, qb = dense(keys[next(ki)], HIDDEN, HIDDEN)
        kw, kb = dense(keys[next(ki)], HIDDEN, HIDDEN)
        vw, vb = dense(keys[next(ki)], HIDDEN, HIDDEN)
        qkv_w.append(jnp.concatenate([qw, kw, vw, wpad], axis=1))       # (H, 128) padded
        qkv_b.append(jnp.concatenate([qb, kb, vb, bpad])[None, :])      # (1, 128)
        w, b = dense(keys[next(ki)], HIDDEN, HIDDEN)
        ao_w.append(w); ao_b.append(b[None, :])
        a_g.append(jnp.ones((1, HIDDEN), DTYPE)); a_b.append(jnp.zeros((1, HIDDEN), DTYPE))
        w, b = dense(keys[next(ki)], HIDDEN, INTER)
        i_w.append(w); i_b.append(b[None, :])
        w, b = dense(keys[next(ki)], INTER, HIDDEN)
        o_w.append(w); o_b.append(b[None, :])
        o_g.append(jnp.ones((1, HIDDEN), DTYPE)); o_b2.append(jnp.zeros((1, HIDDEN), DTYPE))

    params.update(
        qkv_w=jnp.stack(qkv_w), qkv_b=jnp.stack(qkv_b),
        ao_w=jnp.stack(ao_w), ao_b=jnp.stack(ao_b),
        a_ln_g=jnp.stack(a_g), a_ln_b=jnp.stack(a_b),
        i_w=jnp.stack(i_w), i_b=jnp.stack(i_b),
        o_w=jnp.stack(o_w), o_b=jnp.stack(o_b),
        o_ln_g=jnp.stack(o_g), o_ln_b=jnp.stack(o_b2),
    )

    pw, pb = dense(keys[next(ki)], HIDDEN, HIDDEN)
    params["pool_w"], params["pool_b"] = pw, pb[None, :]

    # PrefixEncoder_clean(prefix_projection=False): Embedding(pre_seq_len, 2*L*H)
    params["prefix_emb"] = jax.random.normal(
        keys[next(ki)], (PRE_SEQ, N_LAYER * 2 * HIDDEN), DTYPE) * 0.02

    # TokenC = SSCModule(hidden, output_classes=9); lane-pad to 128 so the final
    # store in-kernel is unmasked; wrapper slices back to 9.
    hw, hb = dense(keys[next(ki)], HIDDEN, N_CLASSES)
    params["head_w"] = jnp.zeros((HIDDEN, HEAD_PAD), DTYPE).at[:, :N_CLASSES].set(hw)
    params["head_b"] = jnp.zeros((1, HEAD_PAD), DTYPE).at[0, :N_CLASSES].set(hb)
    return params


# ------------------------------- forward -------------------------------------
def forward(params, input_ids, atten_mask):
    B, S = input_ids.shape

    # ---- BERT embeddings (gathers stay in plain JAX).  Positions are offset
    # by pre_seq_len, matching HF BertModel when past_key_values is given. ----
    pos_ids = jnp.arange(PRE_SEQ, PRE_SEQ + S)
    x0 = (jnp.take(params["word_emb"], input_ids, axis=0)
          + jnp.take(params["pos_emb"], pos_ids, axis=0)[None, :, :]
          + params["type_emb"][0][None, None, :]).reshape(B * S, HIDDEN)

    # ---- get_prompt: prefix embedding -> per-layer K/V, laid out directly in
    # the block-diagonal (LANES, HIDDEN) layout the kernel consumes.
    # Dropout(0.1) on past_key_values is identity at inference. ----
    pkv = jnp.broadcast_to(params["prefix_emb"][None],
                           (B, PRE_SEQ, 2 * N_LAYER * HIDDEN))
    pkv = pkv.reshape(B, PRE_SEQ, 2 * N_LAYER, N_HEAD, HEAD_DIM)
    pkv = jnp.transpose(pkv, (2, 0, 3, 1, 4))          # (2L, B, nH, P, D)
    k_all, v_all = pkv[0::2], pkv[1::2]                # each (L, B, nH, P, D)

    eye_h = jnp.eye(N_HEAD, dtype=DTYPE)

    def to_rows(t):                                    # (L,B,nH,P,D) -> (L, LANES, HIDDEN)
        r = jnp.einsum("lbhpd,hg->lbhpgd", t, eye_h)   # place into own head's columns
        r = jnp.pad(r, ((0, 0), (0, 0), (0, 0), (0, SEQ), (0, 0), (0, 0)))
        return r.reshape(N_LAYER, LANES, HIDDEN)

    pk_rows, pv_rows = to_rows(k_all), to_rows(v_all)

    # ---- static layout constants for the block-diagonal attention ----
    cols = jnp.arange(LANES)
    bc = cols // (N_HEAD * SKV)                        # batch of each lane
    hc = (cols % (N_HEAD * SKV)) // SKV                # head of each lane
    jc = cols % SKV                                    # key position of each lane
    tok_of_col = bc * SEQ + (jc - PRE_SEQ)
    is_tok = jc >= PRE_SEQ
    pt = (is_tok[:, None]
          & (tok_of_col[:, None] == jnp.arange(TOKENS)[None, :])).astype(DTYPE)   # (LANES, TOKENS)
    hm = (hc[:, None] == (jnp.arange(HIDDEN)[None, :] // HEAD_DIM)).astype(DTYPE)  # (LANES, HIDDEN)
    seg = ((cols[:, None] // SKV) == (cols[None, :] // SKV)).astype(DTYPE)          # (LANES, LANES)

    # ---- additive mask: padding (from atten_mask) + cross-batch lanes ----
    key_valid = jnp.concatenate(
        [jnp.ones((B, PRE_SEQ), DTYPE), atten_mask.astype(DTYPE)], axis=1)  # (B, SKV)
    tok_b = jnp.arange(TOKENS) // SEQ
    valid = (bc[None, :] == tok_b[:, None]) & (key_valid[bc, jc] > 0.5)[None, :]
    addmask = jnp.where(valid, 0.0, -10000.0).astype(DTYPE)                 # (TOKENS, LANES)

    logits_pad = bert_prefix_forward(x0, addmask, pk_rows, pv_rows, pt, hm, seg, params)
    return logits_pad[:, :N_CLASSES]


# ----------------------- pure-JAX reference (for checking) -------------------
def forward_reference(params, input_ids, atten_mask):
    B, S = input_ids.shape
    pos_ids = jnp.arange(PRE_SEQ, PRE_SEQ + S)
    x = (jnp.take(params["word_emb"], input_ids, axis=0)
         + jnp.take(params["pos_emb"], pos_ids, axis=0)[None]
         + params["type_emb"][0][None, None])

    def ln(x, g, b):
        m = jnp.mean(x, -1, keepdims=True)
        v = jnp.mean(jnp.square(x - m), -1, keepdims=True)
        return (x - m) * jax.lax.rsqrt(v + LN_EPS) * g + b

    x = ln(x.reshape(B * S, HIDDEN), params["emb_ln_g"], params["emb_ln_b"])

    pkv = jnp.broadcast_to(params["prefix_emb"][None], (B, PRE_SEQ, 2 * N_LAYER * HIDDEN))
    pkv = pkv.reshape(B, PRE_SEQ, 2 * N_LAYER, N_HEAD, HEAD_DIM)
    pkv = jnp.transpose(pkv, (2, 0, 3, 1, 4))                 # (2L, B, H, P, D)

    full_mask = jnp.concatenate([jnp.ones((B, PRE_SEQ), DTYPE), atten_mask.astype(DTYPE)], 1)
    ext = ((1.0 - full_mask) * -10000.0)[:, None, None, :]

    for l in range(N_LAYER):
        qkv = x @ params["qkv_w"][l][:, :3 * HIDDEN] + params["qkv_b"][l][:, :3 * HIDDEN]
        q, k, v = jnp.split(qkv, 3, axis=1)

        def heads(t):
            return jnp.transpose(t.reshape(B, S, N_HEAD, HEAD_DIM), (0, 2, 1, 3))

        qh, kh, vh = heads(q), heads(k), heads(v)
        kh = jnp.concatenate([pkv[2 * l], kh], axis=2)
        vh = jnp.concatenate([pkv[2 * l + 1], vh], axis=2)
        s = jnp.einsum("bhqd,bhkd->bhqk", qh, kh) * (HEAD_DIM ** -0.5) + ext
        p = jax.nn.softmax(s, axis=-1)
        ctx = jnp.einsum("bhqk,bhkd->bhqd", p, vh)
        ctx = jnp.transpose(ctx, (0, 2, 1, 3)).reshape(B * S, HIDDEN)
        h1 = ln(ctx @ params["ao_w"][l] + params["ao_b"][l] + x,
                params["a_ln_g"][l], params["a_ln_b"][l])
        inter = jax.nn.gelu(h1 @ params["i_w"][l] + params["i_b"][l], approximate=True)
        x = ln(inter @ params["o_w"][l] + params["o_b"][l] + h1,
               params["o_ln_g"][l], params["o_ln_b"][l])

    cls = x.reshape(B, S, HIDDEN)[:, 0, :]
    pooled = jnp.tanh(cls @ params["pool_w"] + params["pool_b"])
    return (pooled @ params["head_w"] + params["head_b"])[:, :N_CLASSES]


if __name__ == "__main__":
    key = jax.random.PRNGKey(0)
    pkey, ikey = jax.random.split(key)
    params = init_params(pkey)

    input_ids = jax.random.randint(ikey, (BATCH, SEQ), 0, VOCAB, dtype=jnp.int32)
    atten_mask = jnp.ones((BATCH, SEQ), dtype=jnp.int32)
    atten_mask = atten_mask.at[:, SEQ - 2:].set(0)   # a couple of padded positions

    logits = jax.jit(forward)(params, input_ids, atten_mask)
    jax.block_until_ready(logits)
    assert logits.shape == (BATCH, N_CLASSES)

    ref = jax.jit(forward_reference)(params, input_ids, atten_mask)
    jax.block_until_ready(ref)
    max_err = float(jnp.max(jnp.abs(logits - ref)))
    assert jnp.allclose(logits, ref, rtol=2e-3, atol=2e-3), f"max_err={max_err}"

    print("KERNEL_OK")
</pallas_src>

<mosaic_0001>
module attributes {stable_mosaic.version = 11 : i64} {
  func.func @_bert_kernel(%arg0: memref<16x32xf32, #tpu.memory_space<vmem>>, %arg1: memref<16x128xf32, #tpu.memory_space<vmem>>, %arg2: memref<2x128x32xf32, #tpu.memory_space<vmem>>, %arg3: memref<2x128x32xf32, #tpu.memory_space<vmem>>, %arg4: memref<128x16xf32, #tpu.memory_space<vmem>>, %arg5: memref<128x32xf32, #tpu.memory_space<vmem>>, %arg6: memref<128x128xf32, #tpu.memory_space<vmem>>, %arg7: memref<1x32xf32, #tpu.memory_space<vmem>>, %arg8: memref<1x32xf32, #tpu.memory_space<vmem>>, %arg9: memref<2x32x128xf32, #tpu.memory_space<vmem>>, %arg10: memref<2x1x128xf32, #tpu.memory_space<vmem>>, %arg11: memref<2x32x32xf32, #tpu.memory_space<vmem>>, %arg12: memref<2x1x32xf32, #tpu.memory_space<vmem>>, %arg13: memref<2x1x32xf32, #tpu.memory_space<vmem>>, %arg14: memref<2x1x32xf32, #tpu.memory_space<vmem>>, %arg15: memref<2x32x128xf32, #tpu.memory_space<vmem>>, %arg16: memref<2x1x128xf32, #tpu.memory_space<vmem>>, %arg17: memref<2x128x32xf32, #tpu.memory_space<vmem>>, %arg18: memref<2x1x32xf32, #tpu.memory_space<vmem>>, %arg19: memref<2x1x32xf32, #tpu.memory_space<vmem>>, %arg20: memref<2x1x32xf32, #tpu.memory_space<vmem>>, %arg21: memref<32x32xf32, #tpu.memory_space<vmem>>, %arg22: memref<1x32xf32, #tpu.memory_space<vmem>>, %arg23: memref<32x128xf32, #tpu.memory_space<vmem>>, %arg24: memref<1x128xf32, #tpu.memory_space<vmem>>, %arg25: memref<2x128xf32, #tpu.memory_space<vmem>>) attributes {dimension_semantics = [], scalar_prefetch = 0 : i64, scratch_operands = 0 : i64, tpu.core_type = #tpu.core_type<tc>} {
    %c0 = arith.constant 0 : index
    %c0_0 = arith.constant 0 : index
    %0 = vector.load %arg1[%c0, %c0_0] : memref<16x128xf32, #tpu.memory_space<vmem>>, vector<16x128xf32>
    %c0_1 = arith.constant 0 : index
    %c0_2 = arith.constant 0 : index
    %1 = vector.load %arg4[%c0_1, %c0_2] : memref<128x16xf32, #tpu.memory_space<vmem>>, vector<128x16xf32>
    %c0_3 = arith.constant 0 : index
    %c0_4 = arith.constant 0 : index
    %2 = vector.load %arg5[%c0_3, %c0_4] : memref<128x32xf32, #tpu.memory_space<vmem>>, vector<128x32xf32>
    %c0_5 = arith.constant 0 : index
    %c0_6 = arith.constant 0 : index
    %3 = vector.load %arg6[%c0_5, %c0_6] : memref<128x128xf32, #tpu.memory_space<vmem>>, vector<128x128xf32>
    %c0_7 = arith.constant 0 : index
    %c0_8 = arith.constant 0 : index
    %4 = vector.load %arg0[%c0_7, %c0_8] : memref<16x32xf32, #tpu.memory_space<vmem>>, vector<16x32xf32>
    %c0_9 = arith.constant 0 : index
    %c0_10 = arith.constant 0 : index
    %5 = vector.load %arg7[%c0_9, %c0_10] : memref<1x32xf32, #tpu.memory_space<vmem>>, vector<1x32xf32>
    %c0_11 = arith.constant 0 : index
    %c0_12 = arith.constant 0 : index
    %6 = vector.load %arg8[%c0_11, %c0_12] : memref<1x32xf32, #tpu.memory_space<vmem>>, vector<1x32xf32>
    %cst = arith.constant dense<0.000000e+00> : vector<16xf32>
    %7 = vector.multi_reduction <add>, %4, %cst [1] : vector<16x32xf32> to vector<16xf32>
    %8 = vector.shape_cast %7 : vector<16xf32> to vector<16x1xf32>
    %cst_13 = arith.constant 3.200000e+01 : f32
    %9 = vector.broadcast %cst_13 : f32 to vector<16x1xf32>
    %10 = arith.divf %8, %9 : vector<16x1xf32>
    %11 = vector.broadcast %10 : vector<16x1xf32> to vector<16x32xf32>
    %12 = arith.subf %4, %11 : vector<16x32xf32>
    %13 = arith.mulf %12, %12 : vector<16x32xf32>
    %cst_14 = arith.constant dense<0.000000e+00> : vector<16xf32>
    %14 = vector.multi_reduction <add>, %13, %cst_14 [1] : vector<16x32xf32> to vector<16xf32>
    %15 = vector.shape_cast %14 : vector<16xf32> to vector<16x1xf32>
    %cst_15 = arith.constant 3.200000e+01 : f32
    %16 = vector.broadcast %cst_15 : f32 to vector<16x1xf32>
    %17 = arith.divf %15, %16 : vector<16x1xf32>
    %18 = vector.broadcast %10 : vector<16x1xf32> to vector<16x32xf32>
    %19 = arith.subf %4, %18 : vector<16x32xf32>
    %cst_16 = arith.constant 9.99999996E-13 : f32
    %20 = vector.broadcast %cst_16 : f32 to vector<16x1xf32>
    %21 = arith.addf %17, %20 : vector<16x1xf32>
    %22 = math.rsqrt %21 : vector<16x1xf32>
    %23 = vector.broadcast %22 : vector<16x1xf32> to vector<16x32xf32>
    %24 = arith.mulf %19, %23 : vector<16x32xf32>
    %25 = vector.broadcast %5 : vector<1x32xf32> to vector<16x32xf32>
    %26 = arith.mulf %24, %25 : vector<16x32xf32>
    %27 = vector.broadcast %6 : vector<1x32xf32> to vector<16x32xf32>
    %28 = arith.addf %26, %27 : vector<16x32xf32>
    %c0_17 = arith.constant 0 : index
    %c0_18 = arith.constant 0 : index
    %c0_19 = arith.constant 0 : index
    %29 = vector.load %arg9[%c0_17, %c0_18, %c0_19] : memref<2x32x128xf32, #tpu.memory_space<vmem>>, vector<1x32x128xf32>
    %30 = vector.shape_cast %29 : vector<1x32x128xf32> to vector<32x128xf32>
    %cst_20 = arith.constant dense<0.000000e+00> : vector<16x128xf32>
    %31 = tpu.matmul %28, %30, %cst_20 {dimension_numbers = #tpu.dot_dimension_numbers<[1], [0], [0], [1], [0, 0, 1, 1], [], []>} : vector<16x32xf32>, vector<32x128xf32>, vector<16x128xf32> -> vector<16x128xf32>
    %c0_21 = arith.constant 0 : index
    %c0_22 = arith.constant 0 : index
    %c0_23 = arith.constant 0 : index
    %32 = vector.load %arg10[%c0_21, %c0_22, %c0_23] : memref<2x1x128xf32, #tpu.memory_space<vmem>>, vector<1x1x128xf32>
    %33 = vector.shape_cast %32 : vector<1x1x128xf32> to vector<1x128xf32>
    %34 = vector.broadcast %33 : vector<1x128xf32> to vector<16x128xf32>
    %35 = arith.addf %31, %34 : vector<16x128xf32>
    %36 = vector.extract_strided_slice %35 {offsets = [0, 0], sizes = [16, 32], strides = [1, 1]} : vector<16x128xf32> to vector<16x32xf32>
    %37 = vector.extract_strided_slice %35 {offsets = [0, 32], sizes = [16, 32], strides = [1, 1]} : vector<16x128xf32> to vector<16x32xf32>
    %38 = vector.extract_strided_slice %35 {offsets = [0, 64], sizes = [16, 32], strides = [1, 1]} : vector<16x128xf32> to vector<16x32xf32>
    %c0_24 = arith.constant 0 : index
    %c0_25 = arith.constant 0 : index
    %c0_26 = arith.constant 0 : index
    %39 = vector.load %arg2[%c0_24, %c0_25, %c0_26] : memref<2x128x32xf32, #tpu.memory_space<vmem>>, vector<1x128x32xf32>
    %40 = vector.shape_cast %39 : vector<1x128x32xf32> to vector<128x32xf32>
    %cst_27 = arith.constant dense<0.000000e+00> : vector<128x32xf32>
    %41 = tpu.matmul %1, %37, %cst_27 {dimension_numbers = #tpu.dot_dimension_numbers<[1], [0], [0], [1], [0, 0, 1, 1], [], []>} : vector<128x16xf32>, vector<16x32xf32>, vector<128x32xf32> -> vector<128x32xf32>
    %42 = arith.mulf %2, %41 : vector<128x32xf32>
    %43 = arith.addf %40, %42 : vector<128x32xf32>
    %c0_28 = arith.constant 0 : index
    %c0_29 = arith.constant 0 : index
    %c0_30 = arith.constant 0 : index
    %44 = vector.load %arg3[%c0_28, %c0_29, %c0_30] : memref<2x128x32xf32, #tpu.memory_space<vmem>>, vector<1x128x32xf32>
    %45 = vector.shape_cast %44 : vector<1x128x32xf32> to vector<128x32xf32>
    %cst_31 = arith.constant dense<0.000000e+00> : vector<128x32xf32>
    %46 = tpu.matmul %1, %38, %cst_31 {dimension_numbers = #tpu.dot_dimension_numbers<[1], [0], [0], [1], [0, 0, 1, 1], [], []>} : vector<128x16xf32>, vector<16x32xf32>, vector<128x32xf32> -> vector<128x32xf32>
    %47 = arith.mulf %2, %46 : vector<128x32xf32>
    %48 = arith.addf %45, %47 : vector<128x32xf32>
    %cst_32 = arith.constant dense<0.000000e+00> : vector<16x128xf32>
    %49 = tpu.matmul %36, %43, %cst_32 {dimension_numbers = #tpu.dot_dimension_numbers<[1], [1], [0], [0], [0, 0, 1, 0], [], []>} : vector<16x32xf32>, vector<128x32xf32>, vector<16x128xf32> -> vector<16x128xf32>
    %cst_33 = arith.constant 0.353553385 : f32
    %50 = vector.broadcast %cst_33 : f32 to vector<16x128xf32>
    %51 = arith.mulf %49, %50 : vector<16x128xf32>
    %52 = arith.addf %51, %0 : vector<16x128xf32>
    %cst_34 = arith.constant dense<0xFF800000> : vector<16xf32>
    %53 = vector.multi_reduction <maximumf>, %52, %cst_34 [1] : vector<16x128xf32> to vector<16xf32>
    %54 = vector.shape_cast %53 : vector<16xf32> to vector<16x1xf32>
    %55 = vector.broadcast %54 : vector<16x1xf32> to vector<16x128xf32>
    %56 = arith.subf %52, %55 : vector<16x128xf32>
    %57 = math.exp %56 : vector<16x128xf32>
    %cst_35 = arith.constant dense<0.000000e+00> : vector<16x128xf32>
    %58 = tpu.matmul %57, %3, %cst_35 {dimension_numbers = #tpu.dot_dimension_numbers<[1], [0], [0], [1], [0, 0, 1, 1], [], []>} : vector<16x128xf32>, vector<128x128xf32>, vector<16x128xf32> -> vector<16x128xf32>
    %cst_36 = arith.constant 1.000000e-30 : f32
    %59 = vector.broadcast %cst_36 : f32 to vector<16x128xf32>
    %60 = arith.addf %58, %59 : vector<16x128xf32>
    %61 = arith.divf %57, %60 : vector<16x128xf32>
    %cst_37 = arith.constant dense<0.000000e+00> : vector<16x32xf32>
    %62 = tpu.matmul %61, %48, %cst_37 {dimension_numbers = #tpu.dot_dimension_numbers<[1], [0], [0], [1], [0, 0, 1, 1], [], []>} : vector<16x128xf32>, vector<128x32xf32>, vector<16x32xf32> -> vector<16x32xf32>
    %c0_38 = arith.constant 0 : index
    %c0_39 = arith.constant 0 : index
    %c0_40 = arith.constant 0 : index
    %63 = vector.load %arg11[%c0_38, %c0_39, %c0_40] : memref<2x32x32xf32, #tpu.memory_space<vmem>>, vector<1x32x32xf32>
    %64 = vector.shape_cast %63 : vector<1x32x32xf32> to vector<32x32xf32>
    %cst_41 = arith.constant dense<0.000000e+00> : vector<16x32xf32>
    %65 = tpu.matmul %62, %64, %cst_41 {dimension_numbers = #tpu.dot_dimension_numbers<[1], [0], [0], [1], [0, 0, 1, 1], [], []>} : vector<16x32xf32>, vector<32x32xf32>, vector<16x32xf32> -> vector<16x32xf32>
    %c0_42 = arith.constant 0 : index
    %c0_43 = arith.constant 0 : index
    %c0_44 = arith.constant 0 : index
    %66 = vector.load %arg12[%c0_42, %c0_43, %c0_44] : memref<2x1x32xf32, #tpu.memory_space<vmem>>, vector<1x1x32xf32>
    %67 = vector.shape_cast %66 : vector<1x1x32xf32> to vector<1x32xf32>
    %68 = vector.broadcast %67 : vector<1x32xf32> to vector<16x32xf32>
    %69 = arith.addf %65, %68 : vector<16x32xf32>
    %70 = arith.addf %69, %28 : vector<16x32xf32>
    %c0_45 = arith.constant 0 : index
    %c0_46 = arith.constant 0 : index
    %c0_47 = arith.constant 0 : index
    %71 = vector.load %arg13[%c0_45, %c0_46, %c0_47] : memref<2x1x32xf32, #tpu.memory_space<vmem>>, vector<1x1x32xf32>
    %72 = vector.shape_cast %71 : vector<1x1x32xf32> to vector<1x32xf32>
    %c0_48 = arith.constant 0 : index
    %c0_49 = arith.constant 0 : index
    %c0_50 = arith.constant 0 : index
    %73 = vector.load %arg14[%c0_48, %c0_49, %c0_50] : memref<2x1x32xf32, #tpu.memory_space<vmem>>, vector<1x1x32xf32>
    %74 = vector.shape_cast %73 : vector<1x1x32xf32> to vector<1x32xf32>
    %cst_51 = arith.constant dense<0.000000e+00> : vector<16xf32>
    %75 = vector.multi_reduction <add>, %70, %cst_51 [1] : vector<16x32xf32> to vector<16xf32>
    %76 = vector.shape_cast %75 : vector<16xf32> to vector<16x1xf32>
    %cst_52 = arith.constant 3.200000e+01 : f32
    %77 = vector.broadcast %cst_52 : f32 to vector<16x1xf32>
    %78 = arith.divf %76, %77 : vector<16x1xf32>
    %79 = vector.broadcast %78 : vector<16x1xf32> to vector<16x32xf32>
    %80 = arith.subf %70, %79 : vector<16x32xf32>
    %81 = arith.mulf %80, %80 : vector<16x32xf32>
    %cst_53 = arith.constant dense<0.000000e+00> : vector<16xf32>
    %82 = vector.multi_reduction <add>, %81, %cst_53 [1] : vector<16x32xf32> to vector<16xf32>
    %83 = vector.shape_cast %82 : vector<16xf32> to vector<16x1xf32>
    %cst_54 = arith.constant 3.200000e+01 : f32
    %84 = vector.broadcast %cst_54 : f32 to vector<16x1xf32>
    %85 = arith.divf %83, %84 : vector<16x1xf32>
    %86 = vector.broadcast %78 : vector<16x1xf32> to vector<16x32xf32>
    %87 = arith.subf %70, %86 : vector<16x32xf32>
    %cst_55 = arith.constant 9.99999996E-13 : f32
    %88 = vector.broadcast %cst_55 : f32 to vector<16x1xf32>
    %89 = arith.addf %85, %88 : vector<16x1xf32>
    %90 = math.rsqrt %89 : vector<16x1xf32>
    %91 = vector.broadcast %90 : vector<16x1xf32> to vector<16x32xf32>
    %92 = arith.mulf %87, %91 : vector<16x32xf32>
    %93 = vector.broadcast %72 : vector<1x32xf32> to vector<16x32xf32>
    %94 = arith.mulf %92, %93 : vector<16x32xf32>
    %95 = vector.broadcast %74 : vector<1x32xf32> to vector<16x32xf32>
    %96 = arith.addf %94, %95 : vector<16x32xf32>
    %c0_56 = arith.constant 0 : index
    %c0_57 = arith.constant 0 : index
    %c0_58 = arith.constant 0 : index
    %97 = vector.load %arg15[%c0_56, %c0_57, %c0_58] : memref<2x32x128xf32, #tpu.memory_space<vmem>>, vector<1x32x128xf32>
    %98 = vector.shape_cast %97 : vector<1x32x128xf32> to vector<32x128xf32>
    %cst_59 = arith.constant dense<0.000000e+00> : vector<16x128xf32>
    %99 = tpu.matmul %96, %98, %cst_59 {dimension_numbers = #tpu.dot_dimension_numbers<[1], [0], [0], [1], [0, 0, 1, 1], [], []>} : vector<16x32xf32>, vector<32x128xf32>, vector<16x128xf32> -> vector<16x128xf32>
    %c0_60 = arith.constant 0 : index
    %c0_61 = arith.constant 0 : index
    %c0_62 = arith.constant 0 : index
    %100 = vector.load %arg16[%c0_60, %c0_61, %c0_62] : memref<2x1x128xf32, #tpu.memory_space<vmem>>, vector<1x1x128xf32>
    %101 = vector.shape_cast %100 : vector<1x1x128xf32> to vector<1x128xf32>
    %102 = vector.broadcast %101 : vector<1x128xf32> to vector<16x128xf32>
    %103 = arith.addf %99, %102 : vector<16x128xf32>
    %104 = arith.mulf %103, %103 : vector<16x128xf32>
    %105 = arith.mulf %103, %104 : vector<16x128xf32>
    %cst_63 = arith.constant 4.471500e-02 : f32
    %106 = vector.broadcast %cst_63 : f32 to vector<16x128xf32>
    %107 = arith.mulf %106, %105 : vector<16x128xf32>
    %108 = arith.addf %103, %107 : vector<16x128xf32>
    %cst_64 = arith.constant 0.797884583 : f32
    %109 = vector.broadcast %cst_64 : f32 to vector<16x128xf32>
    %110 = arith.mulf %109, %108 : vector<16x128xf32>
    %111 = math.tanh %110 : vector<16x128xf32>
    %cst_65 = arith.constant 1.000000e+00 : f32
    %112 = vector.broadcast %cst_65 : f32 to vector<16x128xf32>
    %113 = arith.addf %112, %111 : vector<16x128xf32>
    %cst_66 = arith.constant 5.000000e-01 : f32
    %114 = vector.broadcast %cst_66 : f32 to vector<16x128xf32>
    %115 = arith.mulf %114, %113 : vector<16x128xf32>
    %116 = arith.mulf %103, %115 : vector<16x128xf32>
    %c0_67 = arith.constant 0 : index
    %c0_68 = arith.constant 0 : index
    %c0_69 = arith.constant 0 : index
    %117 = vector.load %arg17[%c0_67, %c0_68, %c0_69] : memref<2x128x32xf32, #tpu.memory_space<vmem>>, vector<1x128x32xf32>
    %118 = vector.shape_cast %117 : vector<1x128x32xf32> to vector<128x32xf32>
    %cst_70 = arith.constant dense<0.000000e+00> : vector<16x32xf32>
    %119 = tpu.matmul %116, %118, %cst_70 {dimension_numbers = #tpu.dot_dimension_numbers<[1], [0], [0], [1], [0, 0, 1, 1], [], []>} : vector<16x128xf32>, vector<128x32xf32>, vector<16x32xf32> -> vector<16x32xf32>
    %c0_71 = arith.constant 0 : index
    %c0_72 = arith.constant 0 : index
    %c0_73 = arith.constant 0 : index
    %120 = vector.load %arg18[%c0_71, %c0_72, %c0_73] : memref<2x1x32xf32, #tpu.memory_space<vmem>>, vector<1x1x32xf32>
    %121 = vector.shape_cast %120 : vector<1x1x32xf32> to vector<1x32xf32>
    %122 = vector.broadcast %121 : vector<1x32xf32> to vector<16x32xf32>
    %123 = arith.addf %119, %122 : vector<16x32xf32>
    %124 = arith.addf %123, %96 : vector<16x32xf32>
    %c0_74 = arith.constant 0 : index
    %c0_75 = arith.constant 0 : index
    %c0_76 = arith.constant 0 : index
    %125 = vector.load %arg19[%c0_74, %c0_75, %c0_76] : memref<2x1x32xf32, #tpu.memory_space<vmem>>, vector<1x1x32xf32>
    %126 = vector.shape_cast %125 : vector<1x1x32xf32> to vector<1x32xf32>
    %c0_77 = arith.constant 0 : index
    %c0_78 = arith.constant 0 : index
    %c0_79 = arith.constant 0 : index
    %127 = vector.load %arg20[%c0_77, %c0_78, %c0_79] : memref<2x1x32xf32, #tpu.memory_space<vmem>>, vector<1x1x32xf32>
    %128 = vector.shape_cast %127 : vector<1x1x32xf32> to vector<1x32xf32>
    %cst_80 = arith.constant dense<0.000000e+00> : vector<16xf32>
    %129 = vector.multi_reduction <add>, %124, %cst_80 [1] : vector<16x32xf32> to vector<16xf32>
    %130 = vector.shape_cast %129 : vector<16xf32> to vector<16x1xf32>
    %cst_81 = arith.constant 3.200000e+01 : f32
    %131 = vector.broadcast %cst_81 : f32 to vector<16x1xf32>
    %132 = arith.divf %130, %131 : vector<16x1xf32>
    %133 = vector.broadcast %132 : vector<16x1xf32> to vector<16x32xf32>
    %134 = arith.subf %124, %133 : vector<16x32xf32>
    %135 = arith.mulf %134, %134 : vector<16x32xf32>
    %cst_82 = arith.constant dense<0.000000e+00> : vector<16xf32>
    %136 = vector.multi_reduction <add>, %135, %cst_82 [1] : vector<16x32xf32> to vector<16xf32>
    %137 = vector.shape_cast %136 : vector<16xf32> to vector<16x1xf32>
    %cst_83 = arith.constant 3.200000e+01 : f32
    %138 = vector.broadcast %cst_83 : f32 to vector<16x1xf32>
    %139 = arith.divf %137, %138 : vector<16x1xf32>
    %140 = vector.broadcast %132 : vector<16x1xf32> to vector<16x32xf32>
    %141 = arith.subf %124, %140 : vector<16x32xf32>
    %cst_84 = arith.constant 9.99999996E-13 : f32
    %142 = vector.broadcast %cst_84 : f32 to vector<16x1xf32>
    %143 = arith.addf %139, %142 : vector<16x1xf32>
    %144 = math.rsqrt %143 : vector<16x1xf32>
    %145 = vector.broadcast %144 : vector<16x1xf32> to vector<16x32xf32>
    %146 = arith.mulf %141, %145 : vector<16x32xf32>
    %147 = vector.broadcast %126 : vector<1x32xf32> to vector<16x32xf32>
    %148 = arith.mulf %146, %147 : vector<16x32xf32>
    %149 = vector.broadcast %128 : vector<1x32xf32> to vector<16x32xf32>
    %150 = arith.addf %148, %149 : vector<16x32xf32>
    %c1 = arith.constant 1 : index
    %c0_85 = arith.constant 0 : index
    %c0_86 = arith.constant 0 : index
    %151 = vector.load %arg9[%c1, %c0_85, %c0_86] : memref<2x32x128xf32, #tpu.memory_space<vmem>>, vector<1x32x128xf32>
    %152 = vector.shape_cast %151 : vector<1x32x128xf32> to vector<32x128xf32>
    %cst_87 = arith.constant dense<0.000000e+00> : vector<16x128xf32>
    %153 = tpu.matmul %150, %152, %cst_87 {dimension_numbers = #tpu.dot_dimension_numbers<[1], [0], [0], [1], [0, 0, 1, 1], [], []>} : vector<16x32xf32>, vector<32x128xf32>, vector<16x128xf32> -> vector<16x128xf32>
    %c1_88 = arith.constant 1 : index
    %c0_89 = arith.constant 0 : index
    %c0_90 = arith.constant 0 : index
    %154 = vector.load %arg10[%c1_88, %c0_89, %c0_90] : memref<2x1x128xf32, #tpu.memory_space<vmem>>, vector<1x1x128xf32>
    %155 = vector.shape_cast %154 : vector<1x1x128xf32> to vector<1x128xf32>
    %156 = vector.broadcast %155 : vector<1x128xf32> to vector<16x128xf32>
    %157 = arith.addf %153, %156 : vector<16x128xf32>
    %158 = vector.extract_strided_slice %157 {offsets = [0, 0], sizes = [16, 32], strides = [1, 1]} : vector<16x128xf32> to vector<16x32xf32>
    %159 = vector.extract_strided_slice %157 {offsets = [0, 32], sizes = [16, 32], strides = [1, 1]} : vector<16x128xf32> to vector<16x32xf32>
    %160 = vector.extract_strided_slice %157 {offsets = [0, 64], sizes = [16, 32], strides = [1, 1]} : vector<16x128xf32> to vector<16x32xf32>
    %c1_91 = arith.constant 1 : index
    %c0_92 = arith.constant 0 : index
    %c0_93 = arith.constant 0 : index
    %161 = vector.load %arg2[%c1_91, %c0_92, %c0_93] : memref<2x128x32xf32, #tpu.memory_space<vmem>>, vector<1x128x32xf32>
    %162 = vector.shape_cast %161 : vector<1x128x32xf32> to vector<128x32xf32>
    %cst_94 = arith.constant dense<0.000000e+00> : vector<128x32xf32>
    %163 = tpu.matmul %1, %159, %cst_94 {dimension_numbers = #tpu.dot_dimension_numbers<[1], [0], [0], [1], [0, 0, 1, 1], [], []>} : vector<128x16xf32>, vector<16x32xf32>, vector<128x32xf32> -> vector<128x32xf32>
    %164 = arith.mulf %2, %163 : vector<128x32xf32>
    %165 = arith.addf %162, %164 : vector<128x32xf32>
    %c1_95 = arith.constant 1 : index
    %c0_96 = arith.constant 0 : index
    %c0_97 = arith.constant 0 : index
    %166 = vector.load %arg3[%c1_95, %c0_96, %c0_97] : memref<2x128x32xf32, #tpu.memory_space<vmem>>, vector<1x128x32xf32>
    %167 = vector.shape_cast %166 : vector<1x128x32xf32> to vector<128x32xf32>
    %cst_98 = arith.constant dense<0.000000e+00> : vector<128x32xf32>
    %168 = tpu.matmul %1, %160, %cst_98 {dimension_numbers = #tpu.dot_dimension_numbers<[1], [0], [0], [1], [0, 0, 1, 1], [], []>} : vector<128x16xf32>, vector<16x32xf32>, vector<128x32xf32> -> vector<128x32xf32>
    %169 = arith.mulf %2, %168 : vector<128x32xf32>
    %170 = arith.addf %167, %169 : vector<128x32xf32>
    %cst_99 = arith.constant dense<0.000000e+00> : vector<16x128xf32>
    %171 = tpu.matmul %158, %165, %cst_99 {dimension_numbers = #tpu.dot_dimension_numbers<[1], [1], [0], [0], [0, 0, 1, 0], [], []>} : vector<16x32xf32>, vector<128x32xf32>, vector<16x128xf32> -> vector<16x128xf32>
    %cst_100 = arith.constant 0.353553385 : f32
    %172 = vector.broadcast %cst_100 : f32 to vector<16x128xf32>
    %173 = arith.mulf %171, %172 : vector<16x128xf32>
    %174 = arith.addf %173, %0 : vector<16x128xf32>
    %cst_101 = arith.constant dense<0xFF800000> : vector<16xf32>
    %175 = vector.multi_reduction <maximumf>, %174, %cst_101 [1] : vector<16x128xf32> to vector<16xf32>
    %176 = vector.shape_cast %175 : vector<16xf32> to vector<16x1xf32>
    %177 = vector.broadcast %176 : vector<16x1xf32> to vector<16x128xf32>
    %178 = arith.subf %174, %177 : vector<16x128xf32>
    %179 = math.exp %178 : vector<16x128xf32>
    %cst_102 = arith.constant dense<0.000000e+00> : vector<16x128xf32>
    %180 = tpu.matmul %179, %3, %cst_102 {dimension_numbers = #tpu.dot_dimension_numbers<[1], [0], [0], [1], [0, 0, 1, 1], [], []>} : vector<16x128xf32>, vector<128x128xf32>, vector<16x128xf32> -> vector<16x128xf32>
    %cst_103 = arith.constant 1.000000e-30 : f32
    %181 = vector.broadcast %cst_103 : f32 to vector<16x128xf32>
    %182 = arith.addf %180, %181 : vector<16x128xf32>
    %183 = arith.divf %179, %182 : vector<16x128xf32>
    %cst_104 = arith.constant dense<0.000000e+00> : vector<16x32xf32>
    %184 = tpu.matmul %183, %170, %cst_104 {dimension_numbers = #tpu.dot_dimension_numbers<[1], [0], [0], [1], [0, 0, 1, 1], [], []>} : vector<16x128xf32>, vector<128x32xf32>, vector<16x32xf32> -> vector<16x32xf32>
    %c1_105 = arith.constant 1 : index
    %c0_106 = arith.constant 0 : index
    %c0_107 = arith.constant 0 : index
    %185 = vector.load %arg11[%c1_105, %c0_106, %c0_107] : memref<2x32x32xf32, #tpu.memory_space<vmem>>, vector<1x32x32xf32>
    %186 = vector.shape_cast %185 : vector<1x32x32xf32> to vector<32x32xf32>
    %cst_108 = arith.constant dense<0.000000e+00> : vector<16x32xf32>
    %187 = tpu.matmul %184, %186, %cst_108 {dimension_numbers = #tpu.dot_dimension_numbers<[1], [0], [0], [1], [0, 0, 1, 1], [], []>} : vector<16x32xf32>, vector<32x32xf32>, vector<16x32xf32> -> vector<16x32xf32>
    %c1_109 = arith.constant 1 : index
    %c0_110 = arith.constant 0 : index
    %c0_111 = arith.constant 0 : index
    %188 = vector.load %arg12[%c1_109, %c0_110, %c0_111] : memref<2x1x32xf32, #tpu.memory_space<vmem>>, vector<1x1x32xf32>
    %189 = vector.shape_cast %188 : vector<1x1x32xf32> to vector<1x32xf32>
    %190 = vector.broadcast %189 : vector<1x32xf32> to vector<16x32xf32>
    %191 = arith.addf %187, %190 : vector<16x32xf32>
    %192 = arith.addf %191, %150 : vector<16x32xf32>
    %c1_112 = arith.constant 1 : index
    %c0_113 = arith.constant 0 : index
    %c0_114 = arith.constant 0 : index
    %193 = vector.load %arg13[%c1_112, %c0_113, %c0_114] : memref<2x1x32xf32, #tpu.memory_space<vmem>>, vector<1x1x32xf32>
    %194 = vector.shape_cast %193 : vector<1x1x32xf32> to vector<1x32xf32>
    %c1_115 = arith.constant 1 : index
    %c0_116 = arith.constant 0 : index
    %c0_117 = arith.constant 0 : index
    %195 = vector.load %arg14[%c1_115, %c0_116, %c0_117] : memref<2x1x32xf32, #tpu.memory_space<vmem>>, vector<1x1x32xf32>
    %196 = vector.shape_cast %195 : vector<1x1x32xf32> to vector<1x32xf32>
    %cst_118 = arith.constant dense<0.000000e+00> : vector<16xf32>
    %197 = vector.multi_reduction <add>, %192, %cst_118 [1] : vector<16x32xf32> to vector<16xf32>
    %198 = vector.shape_cast %197 : vector<16xf32> to vector<16x1xf32>
    %cst_119 = arith.constant 3.200000e+01 : f32
    %199 = vector.broadcast %cst_119 : f32 to vector<16x1xf32>
    %200 = arith.divf %198, %199 : vector<16x1xf32>
    %201 = vector.broadcast %200 : vector<16x1xf32> to vector<16x32xf32>
    %202 = arith.subf %192, %201 : vector<16x32xf32>
    %203 = arith.mulf %202, %202 : vector<16x32xf32>
    %cst_120 = arith.constant dense<0.000000e+00> : vector<16xf32>
    %204 = vector.multi_reduction <add>, %203, %cst_120 [1] : vector<16x32xf32> to vector<16xf32>
    %205 = vector.shape_cast %204 : vector<16xf32> to vector<16x1xf32>
    %cst_121 = arith.constant 3.200000e+01 : f32
    %206 = vector.broadcast %cst_121 : f32 to vector<16x1xf32>
    %207 = arith.divf %205, %206 : vector<16x1xf32>
    %208 = vector.broadcast %200 : vector<16x1xf32> to vector<16x32xf32>
    %209 = arith.subf %192, %208 : vector<16x32xf32>
    %cst_122 = arith.constant 9.99999996E-13 : f32
    %210 = vector.broadcast %cst_122 : f32 to vector<16x1xf32>
    %211 = arith.addf %207, %210 : vector<16x1xf32>
    %212 = math.rsqrt %211 : vector<16x1xf32>
    %213 = vector.broadcast %212 : vector<16x1xf32> to vector<16x32xf32>
    %214 = arith.mulf %209, %213 : vector<16x32xf32>
    %215 = vector.broadcast %194 : vector<1x32xf32> to vector<16x32xf32>
    %216 = arith.mulf %214, %215 : vector<16x32xf32>
    %217 = vector.broadcast %196 : vector<1x32xf32> to vector<16x32xf32>
    %218 = arith.addf %216, %217 : vector<16x32xf32>
    %c1_123 = arith.constant 1 : index
    %c0_124 = arith.constant 0 : index
    %c0_125 = arith.constant 0 : index
    %219 = vector.load %arg15[%c1_123, %c0_124, %c0_125] : memref<2x32x128xf32, #tpu.memory_space<vmem>>, vector<1x32x128xf32>
    %220 = vector.shape_cast %219 : vector<1x32x128xf32> to vector<32x128xf32>
    %cst_126 = arith.constant dense<0.000000e+00> : vector<16x128xf32>
    %221 = tpu.matmul %218, %220, %cst_126 {dimension_numbers = #tpu.dot_dimension_numbers<[1], [0], [0], [1], [0, 0, 1, 1], [], []>} : vector<16x32xf32>, vector<32x128xf32>, vector<16x128xf32> -> vector<16x128xf32>
    %c1_127 = arith.constant 1 : index
    %c0_128 = arith.constant 0 : index
    %c0_129 = arith.constant 0 : index
    %222 = vector.load %arg16[%c1_127, %c0_128, %c0_129] : memref<2x1x128xf32, #tpu.memory_space<vmem>>, vector<1x1x128xf32>
    %223 = vector.shape_cast %222 : vector<1x1x128xf32> to vector<1x128xf32>
    %224 = vector.broadcast %223 : vector<1x128xf32> to vector<16x128xf32>
    %225 = arith.addf %221, %224 : vector<16x128xf32>
    %226 = arith.mulf %225, %225 : vector<16x128xf32>
    %227 = arith.mulf %225, %226 : vector<16x128xf32>
    %cst_130 = arith.constant 4.471500e-02 : f32
    %228 = vector.broadcast %cst_130 : f32 to vector<16x128xf32>
    %229 = arith.mulf %228, %227 : vector<16x128xf32>
    %230 = arith.addf %225, %229 : vector<16x128xf32>
    %cst_131 = arith.constant 0.797884583 : f32
    %231 = vector.broadcast %cst_131 : f32 to vector<16x128xf32>
    %232 = arith.mulf %231, %230 : vector<16x128xf32>
    %233 = math.tanh %232 : vector<16x128xf32>
    %cst_132 = arith.constant 1.000000e+00 : f32
    %234 = vector.broadcast %cst_132 : f32 to vector<16x128xf32>
    %235 = arith.addf %234, %233 : vector<16x128xf32>
    %cst_133 = arith.constant 5.000000e-01 : f32
    %236 = vector.broadcast %cst_133 : f32 to vector<16x128xf32>
    %237 = arith.mulf %236, %235 : vector<16x128xf32>
    %238 = arith.mulf %225, %237 : vector<16x128xf32>
    %c1_134 = arith.constant 1 : index
    %c0_135 = arith.constant 0 : index
    %c0_136 = arith.constant 0 : index
    %239 = vector.load %arg17[%c1_134, %c0_135, %c0_136] : memref<2x128x32xf32, #tpu.memory_space<vmem>>, vector<1x128x32xf32>
    %240 = vector.shape_cast %239 : vector<1x128x32xf32> to vector<128x32xf32>
    %cst_137 = arith.constant dense<0.000000e+00> : vector<16x32xf32>
    %241 = tpu.matmul %238, %240, %cst_137 {dimension_numbers = #tpu.dot_dimension_numbers<[1], [0], [0], [1], [0, 0, 1, 1], [], []>} : vector<16x128xf32>, vector<128x32xf32>, vector<16x32xf32> -> vector<16x32xf32>
    %c1_138 = arith.constant 1 : index
    %c0_139 = arith.constant 0 : index
    %c0_140 = arith.constant 0 : index
    %242 = vector.load %arg18[%c1_138, %c0_139, %c0_140] : memref<2x1x32xf32, #tpu.memory_space<vmem>>, vector<1x1x32xf32>
    %243 = vector.shape_cast %242 : vector<1x1x32xf32> to vector<1x32xf32>
    %244 = vector.broadcast %243 : vector<1x32xf32> to vector<16x32xf32>
    %245 = arith.addf %241, %244 : vector<16x32xf32>
    %246 = arith.addf %245, %218 : vector<16x32xf32>
    %c1_141 = arith.constant 1 : index
    %c0_142 = arith.constant 0 : index
    %c0_143 = arith.constant 0 : index
    %247 = vector.load %arg19[%c1_141, %c0_142, %c0_143] : memref<2x1x32xf32, #tpu.memory_space<vmem>>, vector<1x1x32xf32>
    %248 = vector.shape_cast %247 : vector<1x1x32xf32> to vector<1x32xf32>
    %c1_144 = arith.constant 1 : index
    %c0_145 = arith.constant 0 : index
    %c0_146 = arith.constant 0 : index
    %249 = vector.load %arg20[%c1_144, %c0_145, %c0_146] : memref<2x1x32xf32, #tpu.memory_space<vmem>>, vector<1x1x32xf32>
    %250 = vector.shape_cast %249 : vector<1x1x32xf32> to vector<1x32xf32>
    %cst_147 = arith.constant dense<0.000000e+00> : vector<16xf32>
    %251 = vector.multi_reduction <add>, %246, %cst_147 [1] : vector<16x32xf32> to vector<16xf32>
    %252 = vector.shape_cast %251 : vector<16xf32> to vector<16x1xf32>
    %cst_148 = arith.constant 3.200000e+01 : f32
    %253 = vector.broadcast %cst_148 : f32 to vector<16x1xf32>
    %254 = arith.divf %252, %253 : vector<16x1xf32>
    %255 = vector.broadcast %254 : vector<16x1xf32> to vector<16x32xf32>
    %256 = arith.subf %246, %255 : vector<16x32xf32>
    %257 = arith.mulf %256, %256 : vector<16x32xf32>
    %cst_149 = arith.constant dense<0.000000e+00> : vector<16xf32>
    %258 = vector.multi_reduction <add>, %257, %cst_149 [1] : vector<16x32xf32> to vector<16xf32>
    %259 = vector.shape_cast %258 : vector<16xf32> to vector<16x1xf32>
    %cst_150 = arith.constant 3.200000e+01 : f32
    %260 = vector.broadcast %cst_150 : f32 to vector<16x1xf32>
    %261 = arith.divf %259, %260 : vector<16x1xf32>
    %262 = vector.broadcast %254 : vector<16x1xf32> to vector<16x32xf32>
    %263 = arith.subf %246, %262 : vector<16x32xf32>
    %cst_151 = arith.constant 9.99999996E-13 : f32
    %264 = vector.broadcast %cst_151 : f32 to vector<16x1xf32>
    %265 = arith.addf %261, %264 : vector<16x1xf32>
    %266 = math.rsqrt %265 : vector<16x1xf32>
    %267 = vector.broadcast %266 : vector<16x1xf32> to vector<16x32xf32>
    %268 = arith.mulf %263, %267 : vector<16x32xf32>
    %269 = vector.broadcast %248 : vector<1x32xf32> to vector<16x32xf32>
    %270 = arith.mulf %268, %269 : vector<16x32xf32>
    %271 = vector.broadcast %250 : vector<1x32xf32> to vector<16x32xf32>
    %272 = arith.addf %270, %271 : vector<16x32xf32>
    %273 = vector.extract_strided_slice %272 {offsets = [0, 0], sizes = [1, 32], strides = [1, 1]} : vector<16x32xf32> to vector<1x32xf32>
    %274 = vector.extract_strided_slice %272 {offsets = [8, 0], sizes = [1, 32], strides = [1, 1]} : vector<16x32xf32> to vector<1x32xf32>
    %275 = tpu.concatenate %273, %274 in 0 : vector<1x32xf32>, vector<1x32xf32> -> vector<2x32xf32>
    %c0_152 = arith.constant 0 : index
    %c0_153 = arith.constant 0 : index
    %276 = vector.load %arg21[%c0_152, %c0_153] : memref<32x32xf32, #tpu.memory_space<vmem>>, vector<32x32xf32>
    %cst_154 = arith.constant dense<0.000000e+00> : vector<2x32xf32>
    %277 = tpu.matmul %275, %276, %cst_154 {dimension_numbers = #tpu.dot_dimension_numbers<[1], [0], [0], [1], [0, 0, 1, 1], [], []>} : vector<2x32xf32>, vector<32x32xf32>, vector<2x32xf32> -> vector<2x32xf32>
    %c0_155 = arith.constant 0 : index
    %c0_156 = arith.constant 0 : index
    %278 = vector.load %arg22[%c0_155, %c0_156] : memref<1x32xf32, #tpu.memory_space<vmem>>, vector<1x32xf32>
    %279 = vector.broadcast %278 : vector<1x32xf32> to vector<2x32xf32>
    %280 = arith.addf %277, %279 : vector<2x32xf32>
    %281 = math.tanh %280 : vector<2x32xf32>
    %c0_157 = arith.constant 0 : index
    %c0_158 = arith.constant 0 : index
    %282 = vector.load %arg23[%c0_157, %c0_158] : memref<32x128xf32, #tpu.memory_space<vmem>>, vector<32x128xf32>
    %cst_159 = arith.constant dense<0.000000e+00> : vector<2x128xf32>
    %283 = tpu.matmul %281, %282, %cst_159 {dimension_numbers = #tpu.dot_dimension_numbers<[1], [0], [0], [1], [0, 0, 1, 1], [], []>} : vector<2x32xf32>, vector<32x128xf32>, vector<2x128xf32> -> vector<2x128xf32>
    %c0_160 = arith.constant 0 : index
    %c0_161 = arith.constant 0 : index
    %284 = vector.load %arg24[%c0_160, %c0_161] : memref<1x128xf32, #tpu.memory_space<vmem>>, vector<1x128xf32>
    %285 = vector.broadcast %284 : vector<1x128xf32> to vector<2x128xf32>
    %286 = arith.addf %283, %285 : vector<2x128xf32>
    %c0_162 = arith.constant 0 : index
    %c0_163 = arith.constant 0 : index
    %287 = vector.load %arg25[%c0_162, %c0_163] : memref<2x128xf32, #tpu.memory_space<vmem>>, vector<2x128xf32>
    tpu.vector_store %arg25[%c0_162, %c0_163], %286 {strides = array<i32>} : memref<2x128xf32, #tpu.memory_space<vmem>>, vector<2x128xf32>,
    return
  }
}

</mosaic_0001>

<llo_original>
// kernel: forward.1
$region0: #{forward.1}
  #allocation0 [shape = 'u32[]', space=smem, size = 0x4, offset = 0x4, fixed_abs, tag = 'smem constant byte address 0x4 - core index']
  #allocation1 [shape = 'u32[144,128]{1,0:T(1,128)}', space=vmem, size = 0x12000, scoped, tag = 'internal scratch']
  %s0 = inlined_call_operand.vmem [shape: f32[16,32], index: 0, kind: input, shape index: {}]
  %s1 = inlined_call_operand.vmem [shape: f32[16,128], index: 1, kind: input, shape index: {}]
  %s2 = inlined_call_operand.vmem [shape: f32[2,128,32], index: 2, kind: input, shape index: {}]
  %s3 = inlined_call_operand.vmem [shape: f32[2,128,32], index: 3, kind: input, shape index: {}]
  %s4 = inlined_call_operand.vmem [shape: f32[128,16], index: 4, kind: input, shape index: {}]
  %s5 = inlined_call_operand.vmem [shape: f32[128,32], index: 5, kind: input, shape index: {}]
  %s6 = inlined_call_operand.vmem [shape: f32[128,128], index: 6, kind: input, shape index: {}]
  %s7 = inlined_call_operand.vmem [shape: f32[1,32], index: 7, kind: input, shape index: {}]
  %s8 = inlined_call_operand.vmem [shape: f32[1,32], index: 8, kind: input, shape index: {}]
  %s9 = inlined_call_operand.vmem [shape: f32[2,32,128], index: 9, kind: input, shape index: {}]
  %s10 = inlined_call_operand.vmem [shape: f32[2,1,128], index: 10, kind: input, shape index: {}]
  %s11 = inlined_call_operand.vmem [shape: f32[2,32,32], index: 11, kind: input, shape index: {}]
  %s12 = inlined_call_operand.vmem [shape: f32[2,1,32], index: 12, kind: input, shape index: {}]
  %s13 = inlined_call_operand.vmem [shape: f32[2,1,32], index: 13, kind: input, shape index: {}]
  %s14 = inlined_call_operand.vmem [shape: f32[2,1,32], index: 14, kind: input, shape index: {}]
  %s15 = inlined_call_operand.vmem [shape: f32[2,32,128], index: 15, kind: input, shape index: {}]
  %s16 = inlined_call_operand.vmem [shape: f32[2,1,128], index: 16, kind: input, shape index: {}]
  %s17 = inlined_call_operand.vmem [shape: f32[2,128,32], index: 17, kind: input, shape index: {}]
  %s18 = inlined_call_operand.vmem [shape: f32[2,1,32], index: 18, kind: input, shape index: {}]
  %s19 = inlined_call_operand.vmem [shape: f32[2,1,32], index: 19, kind: input, shape index: {}]
  %s20 = inlined_call_operand.vmem [shape: f32[2,1,32], index: 20, kind: input, shape index: {}]
  %s21 = inlined_call_operand.vmem [shape: f32[32,32], index: 21, kind: input, shape index: {}]
  %s22 = inlined_call_operand.vmem [shape: f32[1,32], index: 22, kind: input, shape index: {}]
  %s23 = inlined_call_operand.vmem [shape: f32[32,128], index: 23, kind: input, shape index: {}]
  %s24 = inlined_call_operand.vmem [shape: f32[1,128], index: 24, kind: input, shape index: {}]
  %s25 = inlined_call_operand.hbm [shape: f32[2,128], index: 25, kind: output, shape index: {}]
  %s26 = sld [smem:[#allocation0]]
  $region110: #{forward.1} parent=0
    _
  %s28 = ssub.s32 1, %s26
  %s29 = scalar_select 0, %s28, %s26
  $region1: #{forward.1} parent=0
    #allocation2 [shape = 'u8[1024]{0}', space=vmem, size = 0x400, scoped, tag = 'output window, operand 0, single buffered']
    #allocation3 [shape = 's32[1]{0}', space=sflag, size = 0x4, scoped, tag = 'scoped memory for forward.1']
    %30 = vsyncpa [#allocation3], 0
    // Predicated region
    $region2: #{forward.1} parent=1 // pred_check
      _
    $region3: #{forward.1} parent=1 // pred_check_branch
      %32 = sbr.rel (0) target = $region5
    $region4: #{forward.1} parent=1 // pred_region
      _
    $region5: #{forward.1} parent=1 // pred_fallthru
      _
    // Predicated region
    $region6: #{forward.1} parent=1 // pred_check
      _
    $region7: #{forward.1} parent=1 // pred_check_branch
      %34 = sbr.rel (0) target = $region9
    $region8: #{forward.1} parent=1 // pred_region
      _
    $region9: #{forward.1} parent=1 // pred_fallthru
      _
    // Predicated region
    $region10: #{forward.1} parent=1 // pred_check
      _
    $region11: #{forward.1} parent=1 // pred_check_branch
      %36 = sbr.rel (0) target = $region13
    $region12: #{forward.1} parent=1 // pred_region
      _
    $region13: #{forward.1} parent=1 // pred_fallthru
      _
    // Predicated region
    $region14: #{forward.1} parent=1 // pred_check
      _
    $region15: #{forward.1} parent=1 // pred_check_branch
      %38 = sbr.rel (0) target = $region17
    $region16: #{forward.1} parent=1 // pred_region
      _
    $region17: #{forward.1} parent=1 // pred_fallthru
      _
    // Predicated region
    $region18: #{forward.1} parent=1 // pred_check
      _
    $region19: #{forward.1} parent=1 // pred_check_branch
      %40 = sbr.rel (0) target = $region21
    $region20: #{forward.1} parent=1 // pred_region
      _
    $region21: #{forward.1} parent=1 // pred_fallthru
      _
    // Predicated region
    $region22: #{forward.1} parent=1 // pred_check
      _
    $region23: #{forward.1} parent=1 // pred_check_branch
      %42 = sbr.rel (0) target = $region25
    $region24: #{forward.1} parent=1 // pred_region
      _
    $region25: #{forward.1} parent=1 // pred_fallthru
      _
    // Predicated region
    $region26: #{forward.1} parent=1 // pred_check
      _
    $region27: #{forward.1} parent=1 // pred_check_branch
      %44 = sbr.rel (0) target = $region29
    $region28: #{forward.1} parent=1 // pred_region
      _
    $region29: #{forward.1} parent=1 // pred_fallthru
      _
    // Predicated region
    $region30: #{forward.1} parent=1 // pred_check
      _
    $region31: #{forward.1} parent=1 // pred_check_branch
      %46 = sbr.rel (0) target = $region33
    $region32: #{forward.1} parent=1 // pred_region
      _
    $region33: #{forward.1} parent=1 // pred_fallthru
      _
    // Predicated region
    $region34: #{forward.1} parent=1 // pred_check
      _
    $region35: #{forward.1} parent=1 // pred_check_branch
      %48 = sbr.rel (0) target = $region37
    $region36: #{forward.1} parent=1 // pred_region
      _
    $region37: #{forward.1} parent=1 // pred_fallthru
      _
    // Predicated region
    $region38: #{forward.1} parent=1 // pred_check
      _
    $region39: #{forward.1} parent=1 // pred_check_branch
      %50 = sbr.rel (0) target = $region41
    $region40: #{forward.1} parent=1 // pred_region
      _
    $region41: #{forward.1} parent=1 // pred_fallthru
      _
    // Predicated region
    $region42: #{forward.1} parent=1 // pred_check
      _
    $region43: #{forward.1} parent=1 // pred_check_branch
      %52 = sbr.rel (0) target = $region45
    $region44: #{forward.1} parent=1 // pred_region
      _
    $region45: #{forward.1} parent=1 // pred_fallthru
      _
    // Predicated region
    $region46: #{forward.1} parent=1 // pred_check
      _
    $region47: #{forward.1} parent=1 // pred_check_branch
      %54 = sbr.rel (0) target = $region49
    $region48: #{forward.1} parent=1 // pred_region
      _
    $region49: #{forward.1} parent=1 // pred_fallthru
      _
    // Predicated region
    $region50: #{forward.1} parent=1 // pred_check
      _
    $region51: #{forward.1} parent=1 // pred_check_branch
      %56 = sbr.rel (0) target = $region53
    $region52: #{forward.1} parent=1 // pred_region
      _
    $region53: #{forward.1} parent=1 // pred_fallthru
      _
    // Predicated region
    $region54: #{forward.1} parent=1 // pred_check
      _
    $region55: #{forward.1} parent=1 // pred_check_branch
      %58 = sbr.rel (0) target = $region57
    $region56: #{forward.1} parent=1 // pred_region
      _
    $region57: #{forward.1} parent=1 // pred_fallthru
      _
    // Predicated region
    $region58: #{forward.1} parent=1 // pred_check
      _
    $region59: #{forward.1} parent=1 // pred_check_branch
      %60 = sbr.rel (0) target = $region61
    $region60: #{forward.1} parent=1 // pred_region
      _
    $region61: #{forward.1} parent=1 // pred_fallthru
      _
    // Predicated region
    $region62: #{forward.1} parent=1 // pred_check
      _
    $region63: #{forward.1} parent=1 // pred_check_branch
      %62 = sbr.rel (0) target = $region65
    $region64: #{forward.1} parent=1 // pred_region
      _
    $region65: #{forward.1} parent=1 // pred_fallthru
      _
    // Predicated region
    $region66: #{forward.1} parent=1 // pred_check
      _
    $region67: #{forward.1} parent=1 // pred_check_branch
      %64 = sbr.rel (0) target = $region69
    $region68: #{forward.1} parent=1 // pred_region
      _
    $region69: #{forward.1} parent=1 // pred_fallthru
      _
    // Predicated region
    $region70: #{forward.1} parent=1 // pred_check
      _
    $region71: #{forward.1} parent=1 // pred_check_branch
      %66 = sbr.rel (0) target = $region73
    $region72: #{forward.1} parent=1 // pred_region
      _
    $region73: #{forward.1} parent=1 // pred_fallthru
      _
    // Predicated region
    $region74: #{forward.1} parent=1 // pred_check
      _
    $region75: #{forward.1} parent=1 // pred_check_branch
      %68 = sbr.rel (0) target = $region77
    $region76: #{forward.1} parent=1 // pred_region
      _
    $region77: #{forward.1} parent=1 // pred_fallthru
      _
    // Predicated region
    $region78: #{forward.1} parent=1 // pred_check
      _
    $region79: #{forward.1} parent=1 // pred_check_branch
      %70 = sbr.rel (0) target = $region81
    $region80: #{forward.1} parent=1 // pred_region
      _
    $region81: #{forward.1} parent=1 // pred_fallthru
      _
    // Predicated region
    $region82: #{forward.1} parent=1 // pred_check
      _
    $region83: #{forward.1} parent=1 // pred_check_branch
      %72 = sbr.rel (0) target = $region85
    $region84: #{forward.1} parent=1 // pred_region
      _
    $region85: #{forward.1} parent=1 // pred_fallthru
      _
    // Predicated region
    $region86: #{forward.1} parent=1 // pred_check
      _
    $region87: #{forward.1} parent=1 // pred_check_branch
      %74 = sbr.rel (0) target = $region89
    $region88: #{forward.1} parent=1 // pred_region
      _
    $region89: #{forward.1} parent=1 // pred_fallthru
      _
    // Predicated region
    $region90: #{forward.1} parent=1 // pred_check
      _
    $region91: #{forward.1} parent=1 // pred_check_branch
      %76 = sbr.rel (0) target = $region93
    $region92: #{forward.1} parent=1 // pred_region
      _
    $region93: #{forward.1} parent=1 // pred_fallthru
      _
    // Predicated region
    $region94: #{forward.1} parent=1 // pred_check
      _
    $region95: #{forward.1} parent=1 // pred_check_branch
      %78 = sbr.rel (0) target = $region97
    $region96: #{forward.1} parent=1 // pred_region
      _
    $region97: #{forward.1} parent=1 // pred_fallthru
      _
    // Predicated region
    $region98: #{forward.1} parent=1 // pred_check
      _
    $region99: #{forward.1} parent=1 // pred_check_branch
      %80 = sbr.rel (0) target = $region101
    $region100: #{forward.1} parent=1 // pred_region
      _
    $region101: #{forward.1} parent=1 // pred_fallthru
      _
    %v81 = vld [vmem:[%s1] sm:$0xff]
    %v82 = vld [vmem:[%s1 + $0x8] sm:$0xff]
    %v83 = vld [vmem:[%s4] sm:$0xff]
    %v84 = vld [vmem:[%s4 + $0x8] sm:$0xff]
    %v85 = vld [vmem:[%s4 + $0x10] sm:$0xff]
    %v86 = vld [vmem:[%s4 + $0x18] sm:$0xff]
    %v87 = vld [vmem:[%s4 + $0x20] sm:$0xff]
    %v88 = vld [vmem:[%s4 + $0x28] sm:$0xff]
    %v89 = vld [vmem:[%s4 + $0x30] sm:$0xff]
    %v90 = vld [vmem:[%s4 + $0x38] sm:$0xff]
    %v91 = vld [vmem:[%s4 + $0x40] sm:$0xff]
    %v92 = vld [vmem:[%s4 + $0x48] sm:$0xff]
    %v93 = vld [vmem:[%s4 + $0x50] sm:$0xff]
    %v94 = vld [vmem:[%s4 + $0x58] sm:$0xff]
    %v95 = vld [vmem:[%s4 + $0x60] sm:$0xff]
    %v96 = vld [vmem:[%s4 + $0x68] sm:$0xff]
    %v97 = vld [vmem:[%s4 + $0x70] sm:$0xff]
    %v98 = vld [vmem:[%s4 + $0x78] sm:$0xff]
    %v99 = vld [vmem:[%s5] sm:$0xff]
    %v100 = vld [vmem:[%s5 + $0x8] sm:$0xff]
    %v101 = vld [vmem:[%s5 + $0x10] sm:$0xff]
    %v102 = vld [vmem:[%s5 + $0x18] sm:$0xff]
    %v103 = vld [vmem:[%s5 + $0x20] sm:$0xff]
    %v104 = vld [vmem:[%s5 + $0x28] sm:$0xff]
    %v105 = vld [vmem:[%s5 + $0x30] sm:$0xff]
    %v106 = vld [vmem:[%s5 + $0x38] sm:$0xff]
    %v107 = vld [vmem:[%s5 + $0x40] sm:$0xff]
    %v108 = vld [vmem:[%s5 + $0x48] sm:$0xff]
    %v109 = vld [vmem:[%s5 + $0x50] sm:$0xff]
    %v110 = vld [vmem:[%s5 + $0x58] sm:$0xff]
    %v111 = vld [vmem:[%s5 + $0x60] sm:$0xff]
    %v112 = vld [vmem:[%s5 + $0x68] sm:$0xff]
    %v113 = vld [vmem:[%s5 + $0x70] sm:$0xff]
    %v114 = vld [vmem:[%s5 + $0x78] sm:$0xff]
    %v115 = vld [vmem:[%s6] sm:$0xff]
    %v116 = vld [vmem:[%s6 + $0x8] sm:$0xff]
    %v117 = vld [vmem:[%s6 + $0x10] sm:$0xff]
    %v118 = vld [vmem:[%s6 + $0x18] sm:$0xff]
    %v119 = vld [vmem:[%s6 + $0x20] sm:$0xff]
    %v120 = vld [vmem:[%s6 + $0x28] sm:$0xff]
    %v121 = vld [vmem:[%s6 + $0x30] sm:$0xff]
    %v122 = vld [vmem:[%s6 + $0x38] sm:$0xff]
    %v123 = vld [vmem:[%s6 + $0x40] sm:$0xff]
    %v124 = vld [vmem:[%s6 + $0x48] sm:$0xff]
    %v125 = vld [vmem:[%s6 + $0x50] sm:$0xff]
    %v126 = vld [vmem:[%s6 + $0x58] sm:$0xff]
    %v127 = vld [vmem:[%s6 + $0x60] sm:$0xff]
    %v128 = vld [vmem:[%s6 + $0x68] sm:$0xff]
    %v129 = vld [vmem:[%s6 + $0x70] sm:$0xff]
    %v130 = vld [vmem:[%s6 + $0x78] sm:$0xff]
    %v131 = vld [vmem:[%s0] sm:$0xff]
    %v132 = vld [vmem:[%s0 + $0x8] sm:$0xff]
    %v133 = vld [vmem:[%s7] sm:$0x1]
    %v134 = vld [vmem:[%s8] sm:$0x1]
    %vm135 = vcmask 261120
    %v136 = vsel %vm135, %v131, 0.0
    %137 = vadd.xlane.f32.xlu0 %v136
    %v138 = vpop.xlane.xlu0 %137
    %v139 = vsel %vm135, %v132, 0.0
    %140 = vadd.xlane.f32.xlu0 %v139
    %v141 = vpop.xlane.xlu0 %140
    %v142 = vrcp.pop 32.0
    %v143 = vmul.f32 %v138, %v142
    %v144 = vmul.f32 %v141, %v142
    %v145 = vsub.f32 %v131, %v143
    %v146 = vsub.f32 %v132, %v144
    %v147 = vmul.f32 %v145, %v145
    %v148 = vmul.f32 %v146, %v146
    %v149 = vsel %vm135, %v147, 0.0
    %150 = vadd.xlane.f32.xlu0 %v149
    %v151 = vpop.xlane.xlu0 %150
    %v152 = vsel %vm135, %v148, 0.0
    %153 = vadd.xlane.f32.xlu0 %v152
    %v154 = vpop.xlane.xlu0 %153
    %v155 = vmul.f32 %v151, %v142
    %v156 = vmul.f32 %v154, %v142
    %v157 = vadd.f32 %v155, 1e-12
    %v158 = vadd.f32 %v156, 1e-12
    %v159 = vrsqrt.pop %v157
    %v160 = vrsqrt.pop %v158
    %v161 = vmul.f32 %v145, %v159
    %v162 = vmul.f32 %v146, %v160
    %v164 = vlaneseq
    %v165 = vshrl.u32 %v164, 7
    %v166 = vsub.s32 0, %v165
    %v167 = vrot.slane %v133, %v166
    %v169 = vmul.f32 %v161, %v167
    %v170 = vmul.f32 %v162, %v167
    %v172 = vlaneseq
    %v173 = vshrl.u32 %v172, 7
    %v174 = vsub.s32 0, %v173
    %v175 = vrot.slane %v134, %v174
    %v177 = vadd.f32 %v169, %v175
    %v178 = vadd.f32 %v170, %v175
    %v179 = vld [vmem:[%s9] sm:$0xff]
    %v180 = vld [vmem:[%s9 + $0x8] sm:$0xff]
    %v181 = vld [vmem:[%s9 + $0x10] sm:$0xff]
    %v182 = vld [vmem:[%s9 + $0x18] sm:$0xff]
    %v183 = vld [vmem:[%s10] sm:$0x1]
    %v185 = vlaneseq
    %v186 = vshrl.u32 %v185, 7
    %v187 = vsub.s32 0, %v186
    %v188 = vrot.slane %v183, %v187
    %v191 = vsel %vm135, %v177, 0
    %v194 = vsel %vm135, %v178, 0
    %196 = vmatprep.subr.mxu0 0.0
    %197 = vmatpush1.msra.mxu0 %v179
    %198 = vmatprep.subr.mxu0 0.0
    %199 = vmatpush1.msra.mxu0 %v180
    %200 = vmatprep.subr.mxu0 0.0
    %201 = vmatpush1.msra.mxu0 %v181
    %202 = vmatprep.subr.mxu0 0.0
    %203 = vmatpush1.msra.mxu0 %v182
    %204 = vmatprep.subr.mxu0 0.0
    %205 = vmatpush1.msra.mxu0 0.0
    %206 = vmatprep.subr.mxu0 0.0
    %207 = vmatpush1.msra.mxu0 0.0
    %208 = vmatprep.subr.mxu0 0.0
    %209 = vmatpush1.msra.mxu0 0.0
    %210 = vmatprep.subr.mxu0 0.0
    %211 = vmatpush1.msra.mxu0 0.0
    %212 = vmatprep.subr.mxu0 0.0
    %213 = vmatpush1.msra.mxu0 0.0
    %214 = vmatprep.subr.mxu0 0.0
    %215 = vmatpush1.msra.mxu0 0.0
    %216 = vmatprep.subr.mxu0 0.0
    %217 = vmatpush1.msra.mxu0 0.0
    %218 = vmatprep.subr.mxu0 0.0
    %219 = vmatpush1.msra.mxu0 0.0
    %220 = vmatprep.subr.mxu0 0.0
    %221 = vmatpush1.msra.mxu0 0.0
    %222 = vmatprep.subr.mxu0 0.0
    %223 = vmatpush1.msra.mxu0 0.0
    %224 = vmatprep.subr.mxu0 0.0
    %225 = vmatpush1.msra.mxu0 0.0
    %226 = vmatprep.subr.mxu0 0.0
    %227 = vmatpush1.msra.mxu0 0.0
    %228 = vmatprep.subr.mxu0 0.0
    %229 = vmatpush1.msra.mxu0 0.0
    %230 = vmatprep.subr.mxu0 0.0
    %231 = vmatpush1.msra.mxu0 0.0
    %232 = vmatprep.subr.mxu0 0.0
    %233 = vmatpush1.msra.mxu0 0.0
    %234 = vmatprep.subr.mxu0 0.0
    %235 = vmatpush1.msra.mxu0 0.0
    %236 = vmatprep.subr.mxu0 0.0
    %237 = vmatpush1.msra.mxu0 0.0
    %238 = vmatprep.subr.mxu0 0.0
    %239 = vmatpush1.msra.mxu0 0.0
    %240 = vmatprep.subr.mxu0 0.0
    %241 = vmatpush1.msra.mxu0 0.0
    %242 = vmatprep.subr.mxu0 0.0
    %243 = vmatpush1.msra.mxu0 0.0
    %244 = vmatprep.subr.mxu0 0.0
    %245 = vmatpush1.msra.mxu0 0.0
    %246 = vmatprep.subr.mxu0 0.0
    %247 = vmatpush1.msra.mxu0 0.0
    %248 = vmatprep.subr.mxu0 0.0
    %249 = vmatpush1.msra.mxu0 0.0
    %250 = vmatprep.subr.mxu0 0.0
    %251 = vmatpush1.msra.mxu0 0.0
    %252 = vmatprep.subr.mxu0 0.0
    %253 = vmatpush1.msra.mxu0 0.0
    %254 = vmatprep.subr.mxu0 0.0
    %255 = vmatpush1.msra.mxu0 0.0
    %256 = vmatprep.subr.mxu0 0.0
    %257 = vmatpush1.msra.mxu0 0.0
    %258 = vmatprep.subr.mxu0 0.0
    %259 = vmatpush1.msra.mxu0 0.0
    %260 = vmatprep.mubr.f32.mxu0 0.0
    %261 = vmatmul.mubr.f32.gmra.mrb[0].mxu0 %v191
    %v262 = vpop.f32.mrb[0].mxu0
    %v263 = vadd.f32 %v188, %v262
    %v264 = vpop.f32.mrb[0].mxu0
    %265 = vmatprep.mubr.f32.mxu0 0.0
    %266 = vmatmul.mubr.f32.gmra.mrb[0].mxu0 %v194
    %v267 = vpop.f32.mrb[0].mxu0
    %v268 = vadd.f32 %v188, %v267
    %v269 = vpop.f32.mrb[0].mxu0
    %270 = vdwg.mxu0
    %v271 = vld [vmem:[%s2] sm:$0xff]
    %v272 = vld [vmem:[%s2 + $0x8] sm:$0xff]
    %v273 = vld [vmem:[%s2 + $0x10] sm:$0xff]
    %v274 = vld [vmem:[%s2 + $0x18] sm:$0xff]
    %v275 = vld [vmem:[%s2 + $0x20] sm:$0xff]
    %v276 = vld [vmem:[%s2 + $0x28] sm:$0xff]
    %v277 = vld [vmem:[%s2 + $0x30] sm:$0xff]
    %v278 = vld [vmem:[%s2 + $0x38] sm:$0xff]
    %v279 = vld [vmem:[%s2 + $0x40] sm:$0xff]
    %v280 = vld [vmem:[%s2 + $0x48] sm:$0xff]
    %v281 = vld [vmem:[%s2 + $0x50] sm:$0xff]
    %v282 = vld [vmem:[%s2 + $0x58] sm:$0xff]
    %v283 = vld [vmem:[%s2 + $0x60] sm:$0xff]
    %v284 = vld [vmem:[%s2 + $0x68] sm:$0xff]
    %v285 = vld [vmem:[%s2 + $0x70] sm:$0xff]
    %v286 = vld [vmem:[%s2 + $0x78] sm:$0xff]
    %289 = vrot.lane.b32.xlu0 %v263, 96
    %v290 = vpop.permute.xlu0 %289
    %291 = vrot.lane.b32.xlu0 %v268, 96
    %v292 = vpop.permute.xlu0 %291
    %vm295 = vcmask 130048
    %v297 = vsel %vm295, %v83, 0
    %v300 = vsel %vm295, %v84, 0
    %v303 = vsel %vm295, %v85, 0
    %v306 = vsel %vm295, %v86, 0
    %v309 = vsel %vm295, %v87, 0
    %v312 = vsel %vm295, %v88, 0
    %v315 = vsel %vm295, %v89, 0
    %v318 = vsel %vm295, %v90, 0
    %v321 = vsel %vm295, %v91, 0
    %v324 = vsel %vm295, %v92, 0
    %v327 = vsel %vm295, %v93, 0
    %v330 = vsel %vm295, %v94, 0
    %v333 = vsel %vm295, %v95, 0
    %v336 = vsel %vm295, %v96, 0
    %v339 = vsel %vm295, %v97, 0
    %v342 = vsel %vm295, %v98, 0
    %344 = vmatprep.subr.mxu0 0.0
    %345 = vmatpush1.msra.mxu0 %v290
    %346 = vmatprep.subr.mxu0 0.0
    %347 = vmatpush1.msra.mxu0 %v292
    %348 = vmatprep.subr.mxu0 0.0
    %349 = vmatpush1.msra.mxu0 0.0
    %350 = vmatprep.subr.mxu0 0.0
    %351 = vmatpush1.msra.mxu0 0.0
    %352 = vmatprep.subr.mxu0 0.0
    %353 = vmatpush1.msra.mxu0 0.0
    %354 = vmatprep.subr.mxu0 0.0
    %355 = vmatpush1.msra.mxu0 0.0
    %356 = vmatprep.subr.mxu0 0.0
    %357 = vmatpush1.msra.mxu0 0.0
    %358 = vmatprep.subr.mxu0 0.0
    %359 = vmatpush1.msra.mxu0 0.0
    %360 = vmatprep.subr.mxu0 0.0
    %361 = vmatpush1.msra.mxu0 0.0
    %362 = vmatprep.subr.mxu0 0.0
    %363 = vmatpush1.msra.mxu0 0.0
    %364 = vmatprep.subr.mxu0 0.0
    %365 = vmatpush1.msra.mxu0 0.0
    %366 = vmatprep.subr.mxu0 0.0
    %367 = vmatpush1.msra.mxu0 0.0
    %368 = vmatprep.subr.mxu0 0.0
    %369 = vmatpush1.msra.mxu0 0.0
    %370 = vmatprep.subr.mxu0 0.0
    %371 = vmatpush1.msra.mxu0 0.0
    %372 = vmatprep.subr.mxu0 0.0
    %373 = vmatpush1.msra.mxu0 0.0
    %374 = vmatprep.subr.mxu0 0.0
    %375 = vmatpush1.msra.mxu0 0.0
    %376 = vmatprep.subr.mxu0 0.0
    %377 = vmatpush1.msra.mxu0 0.0
    %378 = vmatprep.subr.mxu0 0.0
    %379 = vmatpush1.msra.mxu0 0.0
    %380 = vmatprep.subr.mxu0 0.0
    %381 = vmatpush1.msra.mxu0 0.0
    %382 = vmatprep.subr.mxu0 0.0
    %383 = vmatpush1.msra.mxu0 0.0
    %384 = vmatprep.subr.mxu0 0.0
    %385 = vmatpush1.msra.mxu0 0.0
    %386 = vmatprep.subr.mxu0 0.0
    %387 = vmatpush1.msra.mxu0 0.0
    %388 = vmatprep.subr.mxu0 0.0
    %389 = vmatpush1.msra.mxu0 0.0
    %390 = vmatprep.subr.mxu0 0.0
    %391 = vmatpush1.msra.mxu0 0.0
    %392 = vmatprep.subr.mxu0 0.0
    %393 = vmatpush1.msra.mxu0 0.0
    %394 = vmatprep.subr.mxu0 0.0
    %395 = vmatpush1.msra.mxu0 0.0
    %396 = vmatprep.subr.mxu0 0.0
    %397 = vmatpush1.msra.mxu0 0.0
    %398 = vmatprep.subr.mxu0 0.0
    %399 = vmatpush1.msra.mxu0 0.0
    %400 = vmatprep.subr.mxu0 0.0
    %401 = vmatpush1.msra.mxu0 0.0
    %402 = vmatprep.subr.mxu0 0.0
    %403 = vmatpush1.msra.mxu0 0.0
    %404 = vmatprep.subr.mxu0 0.0
    %405 = vmatpush1.msra.mxu0 0.0
    %406 = vmatprep.subr.mxu0 0.0
    %407 = vmatpush1.msra.mxu0 0.0
    %408 = vmatprep.mubr.f32.mxu0 0.0
    %409 = vmatmul.mubr.f32.gmra.mrb[0].mxu0 %v297
    %v410 = vpop.f32.mrb[0].mxu0
    %v411 = vadd.f32 0.0, %v410
    %v412 = vpop.f32.mrb[0].mxu0
    %413 = vmatprep.mubr.f32.mxu0 0.0
    %414 = vmatmul.mubr.f32.gmra.mrb[0].mxu0 %v300
    %v415 = vpop.f32.mrb[0].mxu0
    %v416 = vadd.f32 0.0, %v415
    %v417 = vpop.f32.mrb[0].mxu0
    %418 = vmatprep.mubr.f32.mxu0 0.0
    %419 = vmatmul.mubr.f32.gmra.mrb[0].mxu0 %v303
    %v420 = vpop.f32.mrb[0].mxu0
    %v421 = vadd.f32 0.0, %v420
    %v422 = vpop.f32.mrb[0].mxu0
    %423 = vmatprep.mubr.f32.mxu0 0.0
    %424 = vmatmul.mubr.f32.gmra.mrb[0].mxu0 %v306
    %v425 = vpop.f32.mrb[0].mxu0
    %v426 = vadd.f32 0.0, %v425
    %v427 = vpop.f32.mrb[0].mxu0
    %428 = vmatprep.mubr.f32.mxu0 0.0
    %429 = vmatmul.mubr.f32.gmra.mrb[0].mxu0 %v309
    %v430 = vpop.f32.mrb[0].mxu0
    %v431 = vadd.f32 0.0, %v430
    %v432 = vpop.f32.mrb[0].mxu0
    %433 = vmatprep.mubr.f32.mxu0 0.0
    %434 = vmatmul.mubr.f32.gmra.mrb[0].mxu0 %v312
    %v435 = vpop.f32.mrb[0].mxu0
    %v436 = vadd.f32 0.0, %v435
    %v437 = vpop.f32.mrb[0].mxu0
    %438 = vmatprep.mubr.f32.mxu0 0.0
    %439 = vmatmul.mubr.f32.gmra.mrb[0].mxu0 %v315
    %v440 = vpop.f32.mrb[0].mxu0
    %v441 = vadd.f32 0.0, %v440
    %v442 = vpop.f32.mrb[0].mxu0
    %443 = vmatprep.mubr.f32.mxu0 0.0
    %444 = vmatmul.mubr.f32.gmra.mrb[0].mxu0 %v318
    %v445 = vpop.f32.mrb[0].mxu0
    %v446 = vadd.f32 0.0, %v445
    %v447 = vpop.f32.mrb[0].mxu0
    %448 = vmatprep.mubr.f32.mxu0 0.0
    %449 = vmatmul.mubr.f32.gmra.mrb[0].mxu0 %v321
    %v450 = vpop.f32.mrb[0].mxu0
    %v451 = vadd.f32 0.0, %v450
    %v452 = vpop.f32.mrb[0].mxu0
    %453 = vmatprep.mubr.f32.mxu0 0.0
    %454 = vmatmul.mubr.f32.gmra.mrb[0].mxu0 %v324
    %v455 = vpop.f32.mrb[0].mxu0
    %v456 = vadd.f32 0.0, %v455
    %v457 = vpop.f32.mrb[0].mxu0
    %458 = vmatprep.mubr.f32.mxu0 0.0
    %459 = vmatmul.mubr.f32.gmra.mrb[0].mxu0 %v327
    %v460 = vpop.f32.mrb[0].mxu0
    %v461 = vadd.f32 0.0, %v460
    %v462 = vpop.f32.mrb[0].mxu0
    %463 = vmatprep.mubr.f32.mxu0 0.0
    %464 = vmatmul.mubr.f32.gmra.mrb[0].mxu0 %v330
    %v465 = vpop.f32.mrb[0].mxu0
    %v466 = vadd.f32 0.0, %v465
    %v467 = vpop.f32.mrb[0].mxu0
    %468 = vmatprep.mubr.f32.mxu0 0.0
    %469 = vmatmul.mubr.f32.gmra.mrb[0].mxu0 %v333
    %v470 = vpop.f32.mrb[0].mxu0
    %v471 = vadd.f32 0.0, %v470
    %v472 = vpop.f32.mrb[0].mxu0
    %473 = vmatprep.mubr.f32.mxu0 0.0
    %474 = vmatmul.mubr.f32.gmra.mrb[0].mxu0 %v336
    %v475 = vpop.f32.mrb[0].mxu0
    %v476 = vadd.f32 0.0, %v475
    %v477 = vpop.f32.mrb[0].mxu0
    %478 = vmatprep.mubr.f32.mxu0 0.0
    %479 = vmatmul.mubr.f32.gmra.mrb[0].mxu0 %v339
    %v480 = vpop.f32.mrb[0].mxu0
    %v481 = vadd.f32 0.0, %v480
    %v482 = vpop.f32.mrb[0].mxu0
    %483 = vmatprep.mubr.f32.mxu0 0.0
    %484 = vmatmul.mubr.f32.gmra.mrb[0].mxu0 %v342
    %v485 = vpop.f32.mrb[0].mxu0
    %v486 = vadd.f32 0.0, %v485
    %v487 = vpop.f32.mrb[0].mxu0
    %488 = vdwg.mxu0
    %v489 = vmul.f32 %v99, %v411
    %v490 = vmul.f32 %v100, %v416
    %v491 = vmul.f32 %v101, %v421
    %v492 = vmul.f32 %v102, %v426
    %v493 = vmul.f32 %v103, %v431
    %v494 = vmul.f32 %v104, %v436
    %v495 = vmul.f32 %v105, %v441
    %v496 = vmul.f32 %v106, %v446
    %v497 = vmul.f32 %v107, %v451
    %v498 = vmul.f32 %v108, %v456
    %v499 = vmul.f32 %v109, %v461
    %v500 = vmul.f32 %v110, %v466
    %v501 = vmul.f32 %v111, %v471
    %v502 = vmul.f32 %v112, %v476
    %v503 = vmul.f32 %v113, %v481
    %v504 = vmul.f32 %v114, %v486
    %v505 = vadd.f32 %v271, %v489
    %v506 = vadd.f32 %v272, %v490
    %v507 = vadd.f32 %v273, %v491
    %v508 = vadd.f32 %v274, %v492
    %v509 = vadd.f32 %v275, %v493
    %v510 = vadd.f32 %v276, %v494
    %v511 = vadd.f32 %v277, %v495
    %v512 = vadd.f32 %v278, %v496
    %v513 = vadd.f32 %v279, %v497
    %v514 = vadd.f32 %v280, %v498
    %v515 = vadd.f32 %v281, %v499
    %v516 = vadd.f32 %v282, %v500
    %v517 = vadd.f32 %v283, %v501
    %v518 = vadd.f32 %v284, %v502
    %v519 = vadd.f32 %v285, %v503
    %v520 = vadd.f32 %v286, %v504
    %v521 = vld [vmem:[%s3] sm:$0xff]
    %v522 = vld [vmem:[%s3 + $0x8] sm:$0xff]
    %v523 = vld [vmem:[%s3 + $0x10] sm:$0xff]
    %v524 = vld [vmem:[%s3 + $0x18] sm:$0xff]
    %v525 = vld [vmem:[%s3 + $0x20] sm:$0xff]
    %v526 = vld [vmem:[%s3 + $0x28] sm:$0xff]
    %v527 = vld [vmem:[%s3 + $0x30] sm:$0xff]
    %v528 = vld [vmem:[%s3 + $0x38] sm:$0xff]
    %v529 = vld [vmem:[%s3 + $0x40] sm:$0xff]
    %v530 = vld [vmem:[%s3 + $0x48] sm:$0xff]
    %v531 = vld [vmem:[%s3 + $0x50] sm:$0xff]
    %v532 = vld [vmem:[%s3 + $0x58] sm:$0xff]
    %v533 = vld [vmem:[%s3 + $0x60] sm:$0xff]
    %v534 = vld [vmem:[%s3 + $0x68] sm:$0xff]
    %v535 = vld [vmem:[%s3 + $0x70] sm:$0xff]
    %v536 = vld [vmem:[%s3 + $0x78] sm:$0xff]
    %537 = vrot.lane.b32.xlu0 %v263, 64
    %v538 = vpop.permute.xlu0 %537
    %539 = vrot.lane.b32.xlu0 %v268, 64
    %v540 = vpop.permute.xlu0 %539
    %543 = vmatprep.subr.mxu0 0.0
    %544 = vmatpush1.msra.mxu0 %v538
    %545 = vmatprep.subr.mxu0 0.0
    %546 = vmatpush1.msra.mxu0 %v540
    %547 = vmatprep.subr.mxu0 0.0
    %548 = vmatpush1.msra.mxu0 0.0
    %549 = vmatprep.subr.mxu0 0.0
    %550 = vmatpush1.msra.mxu0 0.0
    %551 = vmatprep.subr.mxu0 0.0
    %552 = vmatpush1.msra.mxu0 0.0
    %553 = vmatprep.subr.mxu0 0.0
    %554 = vmatpush1.msra.mxu0 0.0
    %555 = vmatprep.subr.mxu0 0.0
    %556 = vmatpush1.msra.mxu0 0.0
    %557 = vmatprep.subr.mxu0 0.0
    %558 = vmatpush1.msra.mxu0 0.0
    %559 = vmatprep.subr.mxu0 0.0
    %560 = vmatpush1.msra.mxu0 0.0
    %561 = vmatprep.subr.mxu0 0.0
    %562 = vmatpush1.msra.mxu0 0.0
    %563 = vmatprep.subr.mxu0 0.0
    %564 = vmatpush1.msra.mxu0 0.0
    %565 = vmatprep.subr.mxu0 0.0
    %566 = vmatpush1.msra.mxu0 0.0
    %567 = vmatprep.subr.mxu0 0.0
    %568 = vmatpush1.msra.mxu0 0.0
    %569 = vmatprep.subr.mxu0 0.0
    %570 = vmatpush1.msra.mxu0 0.0
    %571 = vmatprep.subr.mxu0 0.0
    %572 = vmatpush1.msra.mxu0 0.0
    %573 = vmatprep.subr.mxu0 0.0
    %574 = vmatpush1.msra.mxu0 0.0
    %575 = vmatprep.subr.mxu0 0.0
    %576 = vmatpush1.msra.mxu0 0.0
    %577 = vmatprep.subr.mxu0 0.0
    %578 = vmatpush1.msra.mxu0 0.0
    %579 = vmatprep.subr.mxu0 0.0
    %580 = vmatpush1.msra.mxu0 0.0
    %581 = vmatprep.subr.mxu0 0.0
    %582 = vmatpush1.msra.mxu0 0.0
    %583 = vmatprep.subr.mxu0 0.0
    %584 = vmatpush1.msra.mxu0 0.0
    %585 = vmatprep.subr.mxu0 0.0
    %586 = vmatpush1.msra.mxu0 0.0
    %587 = vmatprep.subr.mxu0 0.0
    %588 = vmatpush1.msra.mxu0 0.0
    %589 = vmatprep.subr.mxu0 0.0
    %590 = vmatpush1.msra.mxu0 0.0
    %591 = vmatprep.subr.mxu0 0.0
    %592 = vmatpush1.msra.mxu0 0.0
    %593 = vmatprep.subr.mxu0 0.0
    %594 = vmatpush1.msra.mxu0 0.0
    %595 = vmatprep.subr.mxu0 0.0
    %596 = vmatpush1.msra.mxu0 0.0
    %597 = vmatprep.subr.mxu0 0.0
    %598 = vmatpush1.msra.mxu0 0.0
    %599 = vmatprep.subr.mxu0 0.0
    %600 = vmatpush1.msra.mxu0 0.0
    %601 = vmatprep.subr.mxu0 0.0
    %602 = vmatpush1.msra.mxu0 0.0
    %603 = vmatprep.subr.mxu0 0.0
    %604 = vmatpush1.msra.mxu0 0.0
    %605 = vmatprep.subr.mxu0 0.0
    %606 = vmatpush1.msra.mxu0 0.0
    %607 = vmatprep.mubr.f32.mxu0 0.0
    %608 = vmatmul.mubr.f32.gmra.mrb[0].mxu0 %v297
    %v609 = vpop.f32.mrb[0].mxu0
    %v610 = vadd.f32 0.0, %v609
    %v611 = vpop.f32.mrb[0].mxu0
    %612 = vmatprep.mubr.f32.mxu0 0.0
    %613 = vmatmul.mubr.f32.gmra.mrb[0].mxu0 %v300
    %v614 = vpop.f32.mrb[0].mxu0
    %v615 = vadd.f32 0.0, %v614
    %v616 = vpop.f32.mrb[0].mxu0
    %617 = vmatprep.mubr.f32.mxu0 0.0
    %618 = vmatmul.mubr.f32.gmra.mrb[0].mxu0 %v303
    %v619 = vpop.f32.mrb[0].mxu0
    %v620 = vadd.f32 0.0, %v619
    %v621 = vpop.f32.mrb[0].mxu0
    %622 = vmatprep.mubr.f32.mxu0 0.0
    %623 = vmatmul.mubr.f32.gmra.mrb[0].mxu0 %v306
    %v624 = vpop.f32.mrb[0].mxu0
    %v625 = vadd.f32 0.0, %v624
    %v626 = vpop.f32.mrb[0].mxu0
    %627 = vmatprep.mubr.f32.mxu0 0.0
    %628 = vmatmul.mubr.f32.gmra.mrb[0].mxu0 %v309
    %v629 = vpop.f32.mrb[0].mxu0
    %v630 = vadd.f32 0.0, %v629
    %v631 = vpop.f32.mrb[0].mxu0
    %632 = vmatprep.mubr.f32.mxu0 0.0
    %633 = vmatmul.mubr.f32.gmra.mrb[0].mxu0 %v312
    %v634 = vpop.f32.mrb[0].mxu0
    %v635 = vadd.f32 0.0, %v634
    %v636 = vpop.f32.mrb[0].mxu0
    %637 = vmatprep.mubr.f32.mxu0 0.0
    %638 = vmatmul.mubr.f32.gmra.mrb[0].mxu0 %v315
    %v639 = vpop.f32.mrb[0].mxu0
    %v640 = vadd.f32 0.0, %v639
    %v641 = vpop.f32.mrb[0].mxu0
    %642 = vmatprep.mubr.f32.mxu0 0.0
    %643 = vmatmul.mubr.f32.gmra.mrb[0].mxu0 %v318
    %v644 = vpop.f32.mrb[0].mxu0
    %v645 = vadd.f32 0.0, %v644
    %v646 = vpop.f32.mrb[0].mxu0
    %647 = vmatprep.mubr.f32.mxu0 0.0
    %648 = vmatmul.mubr.f32.gmra.mrb[0].mxu0 %v321
    %v649 = vpop.f32.mrb[0].mxu0
    %v650 = vadd.f32 0.0, %v649
    %v651 = vpop.f32.mrb[0].mxu0
    %652 = vmatprep.mubr.f32.mxu0 0.0
    %653 = vmatmul.mubr.f32.gmra.mrb[0].mxu0 %v324
    %v654 = vpop.f32.mrb[0].mxu0
    %v655 = vadd.f32 0.0, %v654
    %v656 = vpop.f32.mrb[0].mxu0
    %657 = vmatprep.mubr.f32.mxu0 0.0
    %658 = vmatmul.mubr.f32.gmra.mrb[0].mxu0 %v327
    %v659 = vpop.f32.mrb[0].mxu0
    %v660 = vadd.f32 0.0, %v659
    %v661 = vpop.f32.mrb[0].mxu0
    %662 = vmatprep.mubr.f32.mxu0 0.0
    %663 = vmatmul.mubr.f32.gmra.mrb[0].mxu0 %v330
    %v664 = vpop.f32.mrb[0].mxu0
    %v665 = vadd.f32 0.0, %v664
    %v666 = vpop.f32.mrb[0].mxu0
    %667 = vmatprep.mubr.f32.mxu0 0.0
    %668 = vmatmul.mubr.f32.gmra.mrb[0].mxu0 %v333
    %v669 = vpop.f32.mrb[0].mxu0
    %v670 = vadd.f32 0.0, %v669
    %v671 = vpop.f32.mrb[0].mxu0
    %672 = vmatprep.mubr.f32.mxu0 0.0
    %673 = vmatmul.mubr.f32.gmra.mrb[0].mxu0 %v336
    %v674 = vpop.f32.mrb[0].mxu0
    %v675 = vadd.f32 0.0, %v674
    %v676 = vpop.f32.mrb[0].mxu0
    %677 = vmatprep.mubr.f32.mxu0 0.0
    %678 = vmatmul.mubr.f32.gmra.mrb[0].mxu0 %v339
    %v679 = vpop.f32.mrb[0].mxu0
    %v680 = vadd.f32 0.0, %v679
    %v681 = vpop.f32.mrb[0].mxu0
    %682 = vmatprep.mubr.f32.mxu0 0.0
    %683 = vmatmul.mubr.f32.gmra.mrb[0].mxu0 %v342
    %v684 = vpop.f32.mrb[0].mxu0
    %v685 = vadd.f32 0.0, %v684
    %v686 = vpop.f32.mrb[0].mxu0
    %687 = vdwg.mxu0
    %v688 = vmul.f32 %v99, %v610
    %v689 = vmul.f32 %v100, %v615
    %v690 = vmul.f32 %v101, %v620
    %v691 = vmul.f32 %v102, %v625
    %v692 = vmul.f32 %v103, %v630
    %v693 = vmul.f32 %v104, %v635
    %v694 = vmul.f32 %v105, %v640
    %v695 = vmul.f32 %v106, %v645
    %v696 = vmul.f32 %v107, %v650
    %v697 = vmul.f32 %v108, %v655
    %v698 = vmul.f32 %v109, %v660
    %v699 = vmul.f32 %v110, %v665
    %v700 = vmul.f32 %v111, %v670
    %v701 = vmul.f32 %v112, %v675
    %v702 = vmul.f32 %v113, %v680
    %v703 = vmul.f32 %v114, %v685
    %v704 = vadd.f32 %v521, %v688
    %v705 = vadd.f32 %v522, %v689
    %v706 = vadd.f32 %v523, %v690
    %v707 = vadd.f32 %v524, %v691
    %v708 = vadd.f32 %v525, %v692
    %v709 = vadd.f32 %v526, %v693
    %v710 = vadd.f32 %v527, %v694
    %v711 = vadd.f32 %v528, %v695
    %v712 = vadd.f32 %v529, %v696
    %v713 = vadd.f32 %v530, %v697
    %v714 = vadd.f32 %v531, %v698
    %v715 = vadd.f32 %v532, %v699
    %v716 = vadd.f32 %v533, %v700
    %v717 = vadd.f32 %v534, %v701
    %v718 = vadd.f32 %v535, %v702
    %v719 = vadd.f32 %v536, %v703
    %v720 = vsel %vm135, %v263, 0
    %v722 = vsel %vm135, %v268, 0
    %v725 = vsel %vm135, %v505, 0
    %v728 = vsel %vm135, %v506, 0
    %v731 = vsel %vm135, %v507, 0
    %v734 = vsel %vm135, %v508, 0
    %v737 = vsel %vm135, %v509, 0
    %v740 = vsel %vm135, %v510, 0
    %v743 = vsel %vm135, %v511, 0
    %v746 = vsel %vm135, %v512, 0
    %v749 = vsel %vm135, %v513, 0
    %v752 = vsel %vm135, %v514, 0
    %v755 = vsel %vm135, %v515, 0
    %v758 = vsel %vm135, %v516, 0
    %v761 = vsel %vm135, %v517, 0
    %v764 = vsel %vm135, %v518, 0
    %v767 = vsel %vm135, %v519, 0
    %v770 = vsel %vm135, %v520, 0
    %772 = vmatprep.subr.mxu0 0.0
    %773 = vmatpush1.xpose.msra.mxu0 %v725
    %774 = vmatprep.subr.mxu0 0.0
    %775 = vmatpush1.xpose.msra.mxu0 %v728
    %776 = vmatprep.subr.mxu0 0.0
    %777 = vmatpush1.xpose.msra.mxu0 %v731
    %778 = vmatprep.subr.mxu0 0.0
    %779 = vmatpush1.xpose.msra.mxu0 %v734
    %780 = vmatprep.subr.mxu0 0.0
    %781 = vmatpush1.xpose.msra.mxu0 %v737
    %782 = vmatprep.subr.mxu0 0.0
    %783 = vmatpush1.xpose.msra.mxu0 %v740
    %784 = vmatprep.subr.mxu0 0.0
    %785 = vmatpush1.xpose.msra.mxu0 %v743
    %786 = vmatprep.subr.mxu0 0.0
    %787 = vmatpush1.xpose.msra.mxu0 %v746
    %788 = vmatprep.subr.mxu0 0.0
    %789 = vmatpush1.xpose.msra.mxu0 %v749
    %790 = vmatprep.subr.mxu0 0.0
    %791 = vmatpush1.xpose.msra.mxu0 %v752
    %792 = vmatprep.subr.mxu0 0.0
    %793 = vmatpush1.xpose.msra.mxu0 %v755
    %794 = vmatprep.subr.mxu0 0.0
    %795 = vmatpush1.xpose.msra.mxu0 %v758
    %796 = vmatprep.subr.mxu0 0.0
    %797 = vmatpush1.xpose.msra.mxu0 %v761
    %798 = vmatprep.subr.mxu0 0.0
    %799 = vmatpush1.xpose.msra.mxu0 %v764
    %800 = vmatprep.subr.mxu0 0.0
    %801 = vmatpush1.xpose.msra.mxu0 %v767
    %802 = vmatprep.subr.mxu0 0.0
    %803 = vmatpush1.xpose.msra.mxu0 %v770
    %804 = vmatprep.subr.mxu0 0.0
    %805 = vmatpush1.xpose.msra.mxu0 0.0
    %806 = vmatprep.subr.mxu0 0.0
    %807 = vmatpush1.xpose.msra.mxu0 0.0
    %808 = vmatprep.subr.mxu0 0.0
    %809 = vmatpush1.xpose.msra.mxu0 0.0
    %810 = vmatprep.subr.mxu0 0.0
    %811 = vmatpush1.xpose.msra.mxu0 0.0
    %812 = vmatprep.subr.mxu0 0.0
    %813 = vmatpush1.xpose.msra.mxu0 0.0
    %814 = vmatprep.subr.mxu0 0.0
    %815 = vmatpush1.xpose.msra.mxu0 0.0
    %816 = vmatprep.subr.mxu0 0.0
    %817 = vmatpush1.xpose.msra.mxu0 0.0
    %818 = vmatprep.subr.mxu0 0.0
    %819 = vmatpush1.xpose.msra.mxu0 0.0
    %820 = vmatprep.subr.mxu0 0.0
    %821 = vmatpush1.xpose.msra.mxu0 0.0
    %822 = vmatprep.subr.mxu0 0.0
    %823 = vmatpush1.xpose.msra.mxu0 0.0
    %824 = vmatprep.subr.mxu0 0.0
    %825 = vmatpush1.xpose.msra.mxu0 0.0
    %826 = vmatprep.subr.mxu0 0.0
    %827 = vmatpush1.xpose.msra.mxu0 0.0
    %828 = vmatprep.subr.mxu0 0.0
    %829 = vmatpush1.xpose.msra.mxu0 0.0
    %830 = vmatprep.subr.mxu0 0.0
    %831 = vmatpush1.xpose.msra.mxu0 0.0
    %832 = vmatprep.subr.mxu0 0.0
    %833 = vmatpush1.xpose.msra.mxu0 0.0
    %834 = vmatprep.subr.mxu0 0.0
    %835 = vmatpush1.xpose.msra.mxu0 0.0
    %836 = vmatprep.mubr.f32.mxu0 0.0
    %837 = vmatmul.mubr.f32.gmra.mrb[0].mxu0 %v720
    %v838 = vpop.f32.mrb[0].mxu0
    %v839 = vadd.f32 0.0, %v838
    %v840 = vpop.f32.mrb[0].mxu0
    %841 = vmatprep.mubr.f32.mxu0 0.0
    %842 = vmatmul.mubr.f32.gmra.mrb[0].mxu0 %v722
    %v843 = vpop.f32.mrb[0].mxu0
    %v844 = vadd.f32 0.0, %v843
    %v845 = vpop.f32.mrb[0].mxu0
    %846 = vdwg.mxu0
    %v847 = vmul.f32 %v839, 0.35355338
    %v848 = vmul.f32 %v844, 0.35355338
    %v849 = vadd.f32 %v847, %v81
    %v850 = vadd.f32 %v848, %v82
    %851 = vmax.xlane.f32.xlu0 %v849
    %v852 = vpop.xlane.xlu0 %851
    %853 = vmax.xlane.f32.xlu0 %v850
    %v854 = vpop.xlane.xlu0 %853
    %v855 = vsub.f32 %v849, %v852
    %v856 = vsub.f32 %v850, %v854
    %v857 = vmul.f32 %v855, 1.442695
    %v858 = vpow.pop %v857
    %v859 = vmul.f32 %v856, 1.442695
    %v860 = vpow.pop %v859
    %861 = vmatprep.subr.mxu0 0.0
    %862 = vmatpush1.msra.mxu0 %v115
    %863 = vmatprep.subr.mxu0 0.0
    %864 = vmatpush1.msra.mxu0 %v116
    %865 = vmatprep.subr.mxu0 0.0
    %866 = vmatpush1.msra.mxu0 %v117
    %867 = vmatprep.subr.mxu0 0.0
    %868 = vmatpush1.msra.mxu0 %v118
    %869 = vmatprep.subr.mxu0 0.0
    %870 = vmatpush1.msra.mxu0 %v119
    %871 = vmatprep.subr.mxu0 0.0
    %872 = vmatpush1.msra.mxu0 %v120
    %873 = vmatprep.subr.mxu0 0.0
    %874 = vmatpush1.msra.mxu0 %v121
    %875 = vmatprep.subr.mxu0 0.0
    %876 = vmatpush1.msra.mxu0 %v122
    %877 = vmatprep.subr.mxu0 0.0
    %878 = vmatpush1.msra.mxu0 %v123
    %879 = vmatprep.subr.mxu0 0.0
    %880 = vmatpush1.msra.mxu0 %v124
    %881 = vmatprep.subr.mxu0 0.0
    %882 = vmatpush1.msra.mxu0 %v125
    %883 = vmatprep.subr.mxu0 0.0
    %884 = vmatpush1.msra.mxu0 %v126
    %885 = vmatprep.subr.mxu0 0.0
    %886 = vmatpush1.msra.mxu0 %v127
    %887 = vmatprep.subr.mxu0 0.0
    %888 = vmatpush1.msra.mxu0 %v128
    %889 = vmatprep.subr.mxu0 0.0
    %890 = vmatpush1.msra.mxu0 %v129
    %891 = vmatprep.subr.mxu0 0.0
    %892 = vmatpush1.msra.mxu0 %v130
    %893 = vmatprep.subr.mxu0 0.0
    %894 = vmatpush1.msra.mxu0 0.0
    %895 = vmatprep.subr.mxu0 0.0
    %896 = vmatpush1.msra.mxu0 0.0
    %897 = vmatprep.subr.mxu0 0.0
    %898 = vmatpush1.msra.mxu0 0.0
    %899 = vmatprep.subr.mxu0 0.0
    %900 = vmatpush1.msra.mxu0 0.0
    %901 = vmatprep.subr.mxu0 0.0
    %902 = vmatpush1.msra.mxu0 0.0
    %903 = vmatprep.subr.mxu0 0.0
    %904 = vmatpush1.msra.mxu0 0.0
    %905 = vmatprep.subr.mxu0 0.0
    %906 = vmatpush1.msra.mxu0 0.0
    %907 = vmatprep.subr.mxu0 0.0
    %908 = vmatpush1.msra.mxu0 0.0
    %909 = vmatprep.subr.mxu0 0.0
    %910 = vmatpush1.msra.mxu0 0.0
    %911 = vmatprep.subr.mxu0 0.0
    %912 = vmatpush1.msra.mxu0 0.0
    %913 = vmatprep.subr.mxu0 0.0
    %914 = vmatpush1.msra.mxu0 0.0
    %915 = vmatprep.subr.mxu0 0.0
    %916 = vmatpush1.msra.mxu0 0.0
    %917 = vmatprep.subr.mxu0 0.0
    %918 = vmatpush1.msra.mxu0 0.0
    %919 = vmatprep.subr.mxu0 0.0
    %920 = vmatpush1.msra.mxu0 0.0
    %921 = vmatprep.subr.mxu0 0.0
    %922 = vmatpush1.msra.mxu0 0.0
    %923 = vmatprep.subr.mxu0 0.0
    %924 = vmatpush1.msra.mxu0 0.0
    %925 = vmatprep.mubr.f32.mxu0 0.0
    %926 = vmatmul.mubr.f32.gmra.mrb[0].mxu0 %v858
    %v927 = vpop.f32.mrb[0].mxu0
    %v928 = vadd.f32 1e-30, %v927
    %v929 = vpop.f32.mrb[0].mxu0
    %930 = vmatprep.mubr.f32.mxu0 0.0
    %931 = vmatmul.mubr.f32.gmra.mrb[0].mxu0 %v860
    %v932 = vpop.f32.mrb[0].mxu0
    %v933 = vadd.f32 1e-30, %v932
    %v934 = vpop.f32.mrb[0].mxu0
    %935 = vdwg.mxu0
    %v936 = vrcp.pop %v928
    %v937 = vmul.f32 %v858, %v936
    %v938 = vrcp.pop %v933
    %v939 = vmul.f32 %v860, %v938
    %940 = vmatprep.subr.mxu0 0.0
    %941 = vmatpush1.msra.mxu0 %v704
    %942 = vmatprep.subr.mxu0 0.0
    %943 = vmatpush1.msra.mxu0 %v705
    %944 = vmatprep.subr.mxu0 0.0
    %945 = vmatpush1.msra.mxu0 %v706
    %946 = vmatprep.subr.mxu0 0.0
    %947 = vmatpush1.msra.mxu0 %v707
    %948 = vmatprep.subr.mxu0 0.0
    %949 = vmatpush1.msra.mxu0 %v708
    %950 = vmatprep.subr.mxu0 0.0
    %951 = vmatpush1.msra.mxu0 %v709
    %952 = vmatprep.subr.mxu0 0.0
    %953 = vmatpush1.msra.mxu0 %v710
    %954 = vmatprep.subr.mxu0 0.0
    %955 = vmatpush1.msra.mxu0 %v711
    %956 = vmatprep.subr.mxu0 0.0
    %957 = vmatpush1.msra.mxu0 %v712
    %958 = vmatprep.subr.mxu0 0.0
    %959 = vmatpush1.msra.mxu0 %v713
    %960 = vmatprep.subr.mxu0 0.0
    %961 = vmatpush1.msra.mxu0 %v714
    %962 = vmatprep.subr.mxu0 0.0
    %963 = vmatpush1.msra.mxu0 %v715
    %964 = vmatprep.subr.mxu0 0.0
    %965 = vmatpush1.msra.mxu0 %v716
    %966 = vmatprep.subr.mxu0 0.0
    %967 = vmatpush1.msra.mxu0 %v717
    %968 = vmatprep.subr.mxu0 0.0
    %969 = vmatpush1.msra.mxu0 %v718
    %970 = vmatprep.subr.mxu0 0.0
    %971 = vmatpush1.msra.mxu0 %v719
    %972 = vmatprep.subr.mxu0 0.0
    %973 = vmatpush1.msra.mxu0 0.0
    %974 = vmatprep.subr.mxu0 0.0
    %975 = vmatpush1.msra.mxu0 0.0
    %976 = vmatprep.subr.mxu0 0.0
    %977 = vmatpush1.msra.mxu0 0.0
    %978 = vmatprep.subr.mxu0 0.0
    %979 = vmatpush1.msra.mxu0 0.0
    %980 = vmatprep.subr.mxu0 0.0
    %981 = vmatpush1.msra.mxu0 0.0
    %982 = vmatprep.subr.mxu0 0.0
    %983 = vmatpush1.msra.mxu0 0.0
    %984 = vmatprep.subr.mxu0 0.0
    %985 = vmatpush1.msra.mxu0 0.0
    %986 = vmatprep.subr.mxu0 0.0
    %987 = vmatpush1.msra.mxu0 0.0
    %988 = vmatprep.subr.mxu0 0.0
    %989 = vmatpush1.msra.mxu0 0.0
    %990 = vmatprep.subr.mxu0 0.0
    %991 = vmatpush1.msra.mxu0 0.0
    %992 = vmatprep.subr.mxu0 0.0
    %993 = vmatpush1.msra.mxu0 0.0
    %994 = vmatprep.subr.mxu0 0.0
    %995 = vmatpush1.msra.mxu0 0.0
    %996 = vmatprep.subr.mxu0 0.0
    %997 = vmatpush1.msra.mxu0 0.0
    %998 = vmatprep.subr.mxu0 0.0
    %999 = vmatpush1.msra.mxu0 0.0
    %1000 = vmatprep.subr.mxu0 0.0
    %1001 = vmatpush1.msra.mxu0 0.0
    %1002 = vmatprep.subr.mxu0 0.0
    %1003 = vmatpush1.msra.mxu0 0.0
    %1004 = vmatprep.mubr.f32.mxu0 0.0
    %1005 = vmatmul.mubr.f32.gmra.mrb[0].mxu0 %v937
    %v1006 = vpop.f32.mrb[0].mxu0
    %v1007 = vadd.f32 0.0, %v1006
    %v1008 = vpop.f32.mrb[0].mxu0
    %1009 = vmatprep.mubr.f32.mxu0 0.0
    %1010 = vmatmul.mubr.f32.gmra.mrb[0].mxu0 %v939
    %v1011 = vpop.f32.mrb[0].mxu0
    %v1012 = vadd.f32 0.0, %v1011
    %v1013 = vpop.f32.mrb[0].mxu0
    %1014 = vdwg.mxu0
    %v1015 = vld [vmem:[%s11] sm:$0xff]
    %v1016 = vld [vmem:[%s11 + $0x8] sm:$0xff]
    %v1017 = vld [vmem:[%s11 + $0x10] sm:$0xff]
    %v1018 = vld [vmem:[%s11 + $0x18] sm:$0xff]
    %v1019 = vld [vmem:[%s12] sm:$0x1]
    %v1021 = vlaneseq
    %v1022 = vshrl.u32 %v1021, 7
    %v1023 = vsub.s32 0, %v1022
    %v1024 = vrot.slane %v1019, %v1023
    %v1027 = vsel %vm135, %v1007, 0
    %v1030 = vsel %vm135, %v1012, 0
    %1032 = vmatprep.subr.mxu0 0.0
    %1033 = vmatpush1.msra.mxu0 %v1015
    %1034 = vmatprep.subr.mxu0 0.0
    %1035 = vmatpush1.msra.mxu0 %v1016
    %1036 = vmatprep.subr.mxu0 0.0
    %1037 = vmatpush1.msra.mxu0 %v1017
    %1038 = vmatprep.subr.mxu0 0.0
    %1039 = vmatpush1.msra.mxu0 %v1018
    %1040 = vmatprep.subr.mxu0 0.0
    %1041 = vmatpush1.msra.mxu0 0.0
    %1042 = vmatprep.subr.mxu0 0.0
    %1043 = vmatpush1.msra.mxu0 0.0
    %1044 = vmatprep.subr.mxu0 0.0
    %1045 = vmatpush1.msra.mxu0 0.0
    %1046 = vmatprep.subr.mxu0 0.0
    %1047 = vmatpush1.msra.mxu0 0.0
    %1048 = vmatprep.subr.mxu0 0.0
    %1049 = vmatpush1.msra.mxu0 0.0
    %1050 = vmatprep.subr.mxu0 0.0
    %1051 = vmatpush1.msra.mxu0 0.0
    %1052 = vmatprep.subr.mxu0 0.0
    %1053 = vmatpush1.msra.mxu0 0.0
    %1054 = vmatprep.subr.mxu0 0.0
    %1055 = vmatpush1.msra.mxu0 0.0
    %1056 = vmatprep.subr.mxu0 0.0
    %1057 = vmatpush1.msra.mxu0 0.0
    %1058 = vmatprep.subr.mxu0 0.0
    %1059 = vmatpush1.msra.mxu0 0.0
    %1060 = vmatprep.subr.mxu0 0.0
    %1061 = vmatpush1.msra.mxu0 0.0
    %1062 = vmatprep.subr.mxu0 0.0
    %1063 = vmatpush1.msra.mxu0 0.0
    %1064 = vmatprep.subr.mxu0 0.0
    %1065 = vmatpush1.msra.mxu0 0.0
    %1066 = vmatprep.subr.mxu0 0.0
    %1067 = vmatpush1.msra.mxu0 0.0
    %1068 = vmatprep.subr.mxu0 0.0
    %1069 = vmatpush1.msra.mxu0 0.0
    %1070 = vmatprep.subr.mxu0 0.0
    %1071 = vmatpush1.msra.mxu0 0.0
    %1072 = vmatprep.subr.mxu0 0.0
    %1073 = vmatpush1.msra.mxu0 0.0
    %1074 = vmatprep.subr.mxu0 0.0
    %1075 = vmatpush1.msra.mxu0 0.0
    %1076 = vmatprep.subr.mxu0 0.0
    %1077 = vmatpush1.msra.mxu0 0.0
    %1078 = vmatprep.subr.mxu0 0.0
    %1079 = vmatpush1.msra.mxu0 0.0
    %1080 = vmatprep.subr.mxu0 0.0
    %1081 = vmatpush1.msra.mxu0 0.0
    %1082 = vmatprep.subr.mxu0 0.0
    %1083 = vmatpush1.msra.mxu0 0.0
    %1084 = vmatprep.subr.mxu0 0.0
    %1085 = vmatpush1.msra.mxu0 0.0
    %1086 = vmatprep.subr.mxu0 0.0
    %1087 = vmatpush1.msra.mxu0 0.0
    %1088 = vmatprep.subr.mxu0 0.0
    %1089 = vmatpush1.msra.mxu0 0.0
    %1090 = vmatprep.subr.mxu0 0.0
    %1091 = vmatpush1.msra.mxu0 0.0
    %1092 = vmatprep.subr.mxu0 0.0
    %1093 = vmatpush1.msra.mxu0 0.0
    %1094 = vmatprep.subr.mxu0 0.0
    %1095 = vmatpush1.msra.mxu0 0.0
    %1096 = vmatprep.mubr.f32.mxu0 0.0
    %1097 = vmatmul.mubr.f32.gmra.mrb[0].mxu0 %v1027
    %v1098 = vpop.f32.mrb[0].mxu0
    %v1099 = vadd.f32 %v1024, %v1098
    %v1100 = vpop.f32.mrb[0].mxu0
    %1101 = vmatprep.mubr.f32.mxu0 0.0
    %1102 = vmatmul.mubr.f32.gmra.mrb[0].mxu0 %v1030
    %v1103 = vpop.f32.mrb[0].mxu0
    %v1104 = vadd.f32 %v1024, %v1103
    %v1105 = vpop.f32.mrb[0].mxu0
    %1106 = vdwg.mxu0
    %v1107 = vadd.f32 %v1099, %v177
    %v1108 = vadd.f32 %v1104, %v178
    %v1109 = vld [vmem:[%s13] sm:$0x1]
    %v1110 = vld [vmem:[%s14] sm:$0x1]
    %v1111 = vsel %vm135, %v1107, 0.0
    %1112 = vadd.xlane.f32.xlu0 %v1111
    %v1113 = vpop.xlane.xlu0 %1112
    %v1114 = vsel %vm135, %v1108, 0.0
    %1115 = vadd.xlane.f32.xlu0 %v1114
    %v1116 = vpop.xlane.xlu0 %1115
    %v1117 = vmul.f32 %v1113, %v142
    %v1118 = vmul.f32 %v1116, %v142
    %v1119 = vsub.f32 %v1107, %v1117
    %v1120 = vsub.f32 %v1108, %v1118
    %v1121 = vmul.f32 %v1119, %v1119
    %v1122 = vmul.f32 %v1120, %v1120
    %v1123 = vsel %vm135, %v1121, 0.0
    %1124 = vadd.xlane.f32.xlu0 %v1123
    %v1125 = vpop.xlane.xlu0 %1124
    %v1126 = vsel %vm135, %v1122, 0.0
    %1127 = vadd.xlane.f32.xlu0 %v1126
    %v1128 = vpop.xlane.xlu0 %1127
    %v1129 = vmul.f32 %v1125, %v142
    %v1130 = vmul.f32 %v1128, %v142
    %v1131 = vadd.f32 %v1129, 1e-12
    %v1132 = vadd.f32 %v1130, 1e-12
    %v1133 = vrsqrt.pop %v1131
    %v1134 = vrsqrt.pop %v1132
    %v1135 = vmul.f32 %v1119, %v1133
    %v1136 = vmul.f32 %v1120, %v1134
    %v1138 = vlaneseq
    %v1139 = vshrl.u32 %v1138, 7
    %v1140 = vsub.s32 0, %v1139
    %v1141 = vrot.slane %v1109, %v1140
    %v1143 = vmul.f32 %v1135, %v1141
    %v1144 = vmul.f32 %v1136, %v1141
    %v1146 = vlaneseq
    %v1147 = vshrl.u32 %v1146, 7
    %v1148 = vsub.s32 0, %v1147
    %v1149 = vrot.slane %v1110, %v1148
    %v1151 = vadd.f32 %v1143, %v1149
    %v1152 = vadd.f32 %v1144, %v1149
    %v1153 = vld [vmem:[%s15] sm:$0xff]
    %v1154 = vld [vmem:[%s15 + $0x8] sm:$0xff]
    %v1155 = vld [vmem:[%s15 + $0x10] sm:$0xff]
    %v1156 = vld [vmem:[%s15 + $0x18] sm:$0xff]
    %v1157 = vld [vmem:[%s16] sm:$0x1]
    %v1159 = vlaneseq
    %v1160 = vshrl.u32 %v1159, 7
    %v1161 = vsub.s32 0, %v1160
    %v1162 = vrot.slane %v1157, %v1161
    %v1165 = vsel %vm135, %v1151, 0
    %v1168 = vsel %vm135, %v1152, 0
    %1170 = vmatprep.subr.mxu0 0.0
    %1171 = vmatpush1.msra.mxu0 %v1153
    %1172 = vmatprep.subr.mxu0 0.0
    %1173 = vmatpush1.msra.mxu0 %v1154
    %1174 = vmatprep.subr.mxu0 0.0
    %1175 = vmatpush1.msra.mxu0 %v1155
    %1176 = vmatprep.subr.mxu0 0.0
    %1177 = vmatpush1.msra.mxu0 %v1156
    %1178 = vmatprep.subr.mxu0 0.0
    %1179 = vmatpush1.msra.mxu0 0.0
    %1180 = vmatprep.subr.mxu0 0.0
    %1181 = vmatpush1.msra.mxu0 0.0
    %1182 = vmatprep.subr.mxu0 0.0
    %1183 = vmatpush1.msra.mxu0 0.0
    %1184 = vmatprep.subr.mxu0 0.0
    %1185 = vmatpush1.msra.mxu0 0.0
    %1186 = vmatprep.subr.mxu0 0.0
    %1187 = vmatpush1.msra.mxu0 0.0
    %1188 = vmatprep.subr.mxu0 0.0
    %1189 = vmatpush1.msra.mxu0 0.0
    %1190 = vmatprep.subr.mxu0 0.0
    %1191 = vmatpush1.msra.mxu0 0.0
    %1192 = vmatprep.subr.mxu0 0.0
    %1193 = vmatpush1.msra.mxu0 0.0
    %1194 = vmatprep.subr.mxu0 0.0
    %1195 = vmatpush1.msra.mxu0 0.0
    %1196 = vmatprep.subr.mxu0 0.0
    %1197 = vmatpush1.msra.mxu0 0.0
    %1198 = vmatprep.subr.mxu0 0.0
    %1199 = vmatpush1.msra.mxu0 0.0
    %1200 = vmatprep.subr.mxu0 0.0
    %1201 = vmatpush1.msra.mxu0 0.0
    %1202 = vmatprep.subr.mxu0 0.0
    %1203 = vmatpush1.msra.mxu0 0.0
    %1204 = vmatprep.subr.mxu0 0.0
    %1205 = vmatpush1.msra.mxu0 0.0
    %1206 = vmatprep.subr.mxu0 0.0
    %1207 = vmatpush1.msra.mxu0 0.0
    %1208 = vmatprep.subr.mxu0 0.0
    %1209 = vmatpush1.msra.mxu0 0.0
    %1210 = vmatprep.subr.mxu0 0.0
    %1211 = vmatpush1.msra.mxu0 0.0
    %1212 = vmatprep.subr.mxu0 0.0
    %1213 = vmatpush1.msra.mxu0 0.0
    %1214 = vmatprep.subr.mxu0 0.0
    %1215 = vmatpush1.msra.mxu0 0.0
    %1216 = vmatprep.subr.mxu0 0.0
    %1217 = vmatpush1.msra.mxu0 0.0
    %1218 = vmatprep.subr.mxu0 0.0
    %1219 = vmatpush1.msra.mxu0 0.0
    %1220 = vmatprep.subr.mxu0 0.0
    %1221 = vmatpush1.msra.mxu0 0.0
    %1222 = vmatprep.subr.mxu0 0.0
    %1223 = vmatpush1.msra.mxu0 0.0
    %1224 = vmatprep.subr.mxu0 0.0
    %1225 = vmatpush1.msra.mxu0 0.0
    %1226 = vmatprep.subr.mxu0 0.0
    %1227 = vmatpush1.msra.mxu0 0.0
    %1228 = vmatprep.subr.mxu0 0.0
    %1229 = vmatpush1.msra.mxu0 0.0
    %1230 = vmatprep.subr.mxu0 0.0
    %1231 = vmatpush1.msra.mxu0 0.0
    %1232 = vmatprep.subr.mxu0 0.0
    %1233 = vmatpush1.msra.mxu0 0.0
    %1234 = vmatprep.mubr.f32.mxu0 0.0
    %1235 = vmatmul.mubr.f32.gmra.mrb[0].mxu0 %v1165
    %v1236 = vpop.f32.mrb[0].mxu0
    %v1237 = vadd.f32 %v1162, %v1236
    %v1238 = vpop.f32.mrb[0].mxu0
    %1239 = vmatprep.mubr.f32.mxu0 0.0
    %1240 = vmatmul.mubr.f32.gmra.mrb[0].mxu0 %v1168
    %v1241 = vpop.f32.mrb[0].mxu0
    %v1242 = vadd.f32 %v1162, %v1241
    %v1243 = vpop.f32.mrb[0].mxu0
    %1244 = vdwg.mxu0
    %v1245 = vmul.f32 %v1237, %v1237
    %v1246 = vmul.f32 %v1242, %v1242
    %v1247 = vmul.f32 %v1237, %v1245
    %v1248 = vmul.f32 %v1242, %v1246
    %v1249 = vmul.f32 %v1247, 0.044715
    %v1250 = vmul.f32 %v1248, 0.044715
    %v1251 = vadd.f32 %v1237, %v1249
    %v1252 = vadd.f32 %v1242, %v1250
    %v1253 = vmul.f32 %v1251, 0.7978846
    %v1254 = vmul.f32 %v1252, 0.7978846
    %v1255 = vtanh.pop %v1253
    %v1256 = vtanh.pop %v1254
    %v1257 = vadd.f32 %v1255, 1.0
    %v1258 = vadd.f32 %v1256, 1.0
    %v1259 = vmul.f32 %v1257, 0.5
    %v1260 = vmul.f32 %v1258, 0.5
    %v1261 = vmul.f32 %v1237, %v1259
    %v1262 = vmul.f32 %v1242, %v1260
    %v1263 = vld [vmem:[%s17] sm:$0xff]
    %v1264 = vld [vmem:[%s17 + $0x8] sm:$0xff]
    %v1265 = vld [vmem:[%s17 + $0x10] sm:$0xff]
    %v1266 = vld [vmem:[%s17 + $0x18] sm:$0xff]
    %v1267 = vld [vmem:[%s17 + $0x20] sm:$0xff]
    %v1268 = vld [vmem:[%s17 + $0x28] sm:$0xff]
    %v1269 = vld [vmem:[%s17 + $0x30] sm:$0xff]
    %v1270 = vld [vmem:[%s17 + $0x38] sm:$0xff]
    %v1271 = vld [vmem:[%s17 + $0x40] sm:$0xff]
    %v1272 = vld [vmem:[%s17 + $0x48] sm:$0xff]
    %v1273 = vld [vmem:[%s17 + $0x50] sm:$0xff]
    %v1274 = vld [vmem:[%s17 + $0x58] sm:$0xff]
    %v1275 = vld [vmem:[%s17 + $0x60] sm:$0xff]
    %v1276 = vld [vmem:[%s17 + $0x68] sm:$0xff]
    %v1277 = vld [vmem:[%s17 + $0x70] sm:$0xff]
    %v1278 = vld [vmem:[%s17 + $0x78] sm:$0xff]
    %v1279 = vld [vmem:[%s18] sm:$0x1]
    %v1281 = vlaneseq
    %v1282 = vshrl.u32 %v1281, 7
    %v1283 = vsub.s32 0, %v1282
    %v1284 = vrot.slane %v1279, %v1283
    %1286 = vmatprep.subr.mxu0 0.0
    %1287 = vmatpush1.msra.mxu0 %v1263
    %1288 = vmatprep.subr.mxu0 0.0
    %1289 = vmatpush1.msra.mxu0 %v1264
    %1290 = vmatprep.subr.mxu0 0.0
    %1291 = vmatpush1.msra.mxu0 %v1265
    %1292 = vmatprep.subr.mxu0 0.0
    %1293 = vmatpush1.msra.mxu0 %v1266
    %1294 = vmatprep.subr.mxu0 0.0
    %1295 = vmatpush1.msra.mxu0 %v1267
    %1296 = vmatprep.subr.mxu0 0.0
    %1297 = vmatpush1.msra.mxu0 %v1268
    %1298 = vmatprep.subr.mxu0 0.0
    %1299 = vmatpush1.msra.mxu0 %v1269
    %1300 = vmatprep.subr.mxu0 0.0
    %1301 = vmatpush1.msra.mxu0 %v1270
    %1302 = vmatprep.subr.mxu0 0.0
    %1303 = vmatpush1.msra.mxu0 %v1271
    %1304 = vmatprep.subr.mxu0 0.0
    %1305 = vmatpush1.msra.mxu0 %v1272
    %1306 = vmatprep.subr.mxu0 0.0
    %1307 = vmatpush1.msra.mxu0 %v1273
    %1308 = vmatprep.subr.mxu0 0.0
    %1309 = vmatpush1.msra.mxu0 %v1274
    %1310 = vmatprep.subr.mxu0 0.0
    %1311 = vmatpush1.msra.mxu0 %v1275
    %1312 = vmatprep.subr.mxu0 0.0
    %1313 = vmatpush1.msra.mxu0 %v1276
    %1314 = vmatprep.subr.mxu0 0.0
    %1315 = vmatpush1.msra.mxu0 %v1277
    %1316 = vmatprep.subr.mxu0 0.0
    %1317 = vmatpush1.msra.mxu0 %v1278
    %1318 = vmatprep.subr.mxu0 0.0
    %1319 = vmatpush1.msra.mxu0 0.0
    %1320 = vmatprep.subr.mxu0 0.0
    %1321 = vmatpush1.msra.mxu0 0.0
    %1322 = vmatprep.subr.mxu0 0.0
    %1323 = vmatpush1.msra.mxu0 0.0
    %1324 = vmatprep.subr.mxu0 0.0
    %1325 = vmatpush1.msra.mxu0 0.0
    %1326 = vmatprep.subr.mxu0 0.0
    %1327 = vmatpush1.msra.mxu0 0.0
    %1328 = vmatprep.subr.mxu0 0.0
    %1329 = vmatpush1.msra.mxu0 0.0
    %1330 = vmatprep.subr.mxu0 0.0
    %1331 = vmatpush1.msra.mxu0 0.0
    %1332 = vmatprep.subr.mxu0 0.0
    %1333 = vmatpush1.msra.mxu0 0.0
    %1334 = vmatprep.subr.mxu0 0.0
    %1335 = vmatpush1.msra.mxu0 0.0
    %1336 = vmatprep.subr.mxu0 0.0
    %1337 = vmatpush1.msra.mxu0 0.0
    %1338 = vmatprep.subr.mxu0 0.0
    %1339 = vmatpush1.msra.mxu0 0.0
    %1340 = vmatprep.subr.mxu0 0.0
    %1341 = vmatpush1.msra.mxu0 0.0
    %1342 = vmatprep.subr.mxu0 0.0
    %1343 = vmatpush1.msra.mxu0 0.0
    %1344 = vmatprep.subr.mxu0 0.0
    %1345 = vmatpush1.msra.mxu0 0.0
    %1346 = vmatprep.subr.mxu0 0.0
    %1347 = vmatpush1.msra.mxu0 0.0
    %1348 = vmatprep.subr.mxu0 0.0
    %1349 = vmatpush1.msra.mxu0 0.0
    %1350 = vmatprep.mubr.f32.mxu0 0.0
    %1351 = vmatmul.mubr.f32.gmra.mrb[0].mxu0 %v1261
    %v1352 = vpop.f32.mrb[0].mxu0
    %v1353 = vadd.f32 %v1284, %v1352
    %v1354 = vpop.f32.mrb[0].mxu0
    %1355 = vmatprep.mubr.f32.mxu0 0.0
    %1356 = vmatmul.mubr.f32.gmra.mrb[0].mxu0 %v1262
    %v1357 = vpop.f32.mrb[0].mxu0
    %v1358 = vadd.f32 %v1284, %v1357
    %v1359 = vpop.f32.mrb[0].mxu0
    %1360 = vdwg.mxu0
    %v1361 = vadd.f32 %v1353, %v1151
    %v1362 = vadd.f32 %v1358, %v1152
    %v1363 = vld [vmem:[%s19] sm:$0x1]
    %v1364 = vld [vmem:[%s20] sm:$0x1]
    %v1365 = vsel %vm135, %v1361, 0.0
    %1366 = vadd.xlane.f32.xlu0 %v1365
    %v1367 = vpop.xlane.xlu0 %1366
    %v1368 = vsel %vm135, %v1362, 0.0
    %1369 = vadd.xlane.f32.xlu0 %v1368
    %v1370 = vpop.xlane.xlu0 %1369
    %v1371 = vmul.f32 %v1367, %v142
    %v1372 = vmul.f32 %v1370, %v142
    %v1373 = vsub.f32 %v1361, %v1371
    %v1374 = vsub.f32 %v1362, %v1372
    %v1375 = vmul.f32 %v1373, %v1373
    %v1376 = vmul.f32 %v1374, %v1374
    %v1377 = vsel %vm135, %v1375, 0.0
    %1378 = vadd.xlane.f32.xlu0 %v1377
    %v1379 = vpop.xlane.xlu0 %1378
    %v1380 = vsel %vm135, %v1376, 0.0
    %1381 = vadd.xlane.f32.xlu0 %v1380
    %v1382 = vpop.xlane.xlu0 %1381
    %v1383 = vmul.f32 %v1379, %v142
    %v1384 = vmul.f32 %v1382, %v142
    %v1385 = vadd.f32 %v1383, 1e-12
    %v1386 = vadd.f32 %v1384, 1e-12
    %v1387 = vrsqrt.pop %v1385
    %v1388 = vrsqrt.pop %v1386
    %v1389 = vmul.f32 %v1373, %v1387
    %v1390 = vmul.f32 %v1374, %v1388
    %v1392 = vlaneseq
    %v1393 = vshrl.u32 %v1392, 7
    %v1394 = vsub.s32 0, %v1393
    %v1395 = vrot.slane %v1363, %v1394
    %v1397 = vmul.f32 %v1389, %v1395
    %v1398 = vmul.f32 %v1390, %v1395
    %v1400 = vlaneseq
    %v1401 = vshrl.u32 %v1400, 7
    %v1402 = vsub.s32 0, %v1401
    %v1403 = vrot.slane %v1364, %v1402
    %v1405 = vadd.f32 %v1397, %v1403
    %v1406 = vadd.f32 %v1398, %v1403
    %s1407 = scalar_lea.vmem %s9, 32
    %v1408 = vld [vmem:[%s1407] sm:$0xff]
    %v1409 = vld [vmem:[%s1407 + $0x8] sm:$0xff]
    %v1410 = vld [vmem:[%s1407 + $0x10] sm:$0xff]
    %v1411 = vld [vmem:[%s1407 + $0x18] sm:$0xff]
    %s1412 = scalar_lea.vmem %s10, 1
    %v1413 = vld [vmem:[%s1412] sm:$0x1]
    %v1415 = vlaneseq
    %v1416 = vshrl.u32 %v1415, 7
    %v1417 = vsub.s32 0, %v1416
    %v1418 = vrot.slane %v1413, %v1417
    %v1421 = vsel %vm135, %v1405, 0
    %v1424 = vsel %vm135, %v1406, 0
    %1426 = vmatprep.subr.mxu0 0.0
    %1427 = vmatpush1.msra.mxu0 %v1408
    %1428 = vmatprep.subr.mxu0 0.0
    %1429 = vmatpush1.msra.mxu0 %v1409
    %1430 = vmatprep.subr.mxu0 0.0
    %1431 = vmatpush1.msra.mxu0 %v1410
    %1432 = vmatprep.subr.mxu0 0.0
    %1433 = vmatpush1.msra.mxu0 %v1411
    %1434 = vmatprep.subr.mxu0 0.0
    %1435 = vmatpush1.msra.mxu0 0.0
    %1436 = vmatprep.subr.mxu0 0.0
    %1437 = vmatpush1.msra.mxu0 0.0
    %1438 = vmatprep.subr.mxu0 0.0
    %1439 = vmatpush1.msra.mxu0 0.0
    %1440 = vmatprep.subr.mxu0 0.0
    %1441 = vmatpush1.msra.mxu0 0.0
    %1442 = vmatprep.subr.mxu0 0.0
    %1443 = vmatpush1.msra.mxu0 0.0
    %1444 = vmatprep.subr.mxu0 0.0
    %1445 = vmatpush1.msra.mxu0 0.0
    %1446 = vmatprep.subr.mxu0 0.0
    %1447 = vmatpush1.msra.mxu0 0.0
    %1448 = vmatprep.subr.mxu0 0.0
    %1449 = vmatpush1.msra.mxu0 0.0
    %1450 = vmatprep.subr.mxu0 0.0
    %1451 = vmatpush1.msra.mxu0 0.0
    %1452 = vmatprep.subr.mxu0 0.0
    %1453 = vmatpush1.msra.mxu0 0.0
    %1454 = vmatprep.subr.mxu0 0.0
    %1455 = vmatpush1.msra.mxu0 0.0
    %1456 = vmatprep.subr.mxu0 0.0
    %1457 = vmatpush1.msra.mxu0 0.0
    %1458 = vmatprep.subr.mxu0 0.0
    %1459 = vmatpush1.msra.mxu0 0.0
    %1460 = vmatprep.subr.mxu0 0.0
    %1461 = vmatpush1.msra.mxu0 0.0
    %1462 = vmatprep.subr.mxu0 0.0
    %1463 = vmatpush1.msra.mxu0 0.0
    %1464 = vmatprep.subr.mxu0 0.0
    %1465 = vmatpush1.msra.mxu0 0.0
    %1466 = vmatprep.subr.mxu0 0.0
    %1467 = vmatpush1.msra.mxu0 0.0
    %1468 = vmatprep.subr.mxu0 0.0
    %1469 = vmatpush1.msra.mxu0 0.0
    %1470 = vmatprep.subr.mxu0 0.0
    %1471 = vmatpush1.msra.mxu0 0.0
    %1472 = vmatprep.subr.mxu0 0.0
    %1473 = vmatpush1.msra.mxu0 0.0
    %1474 = vmatprep.subr.mxu0 0.0
    %1475 = vmatpush1.msra.mxu0 0.0
    %1476 = vmatprep.subr.mxu0 0.0
    %1477 = vmatpush1.msra.mxu0 0.0
    %1478 = vmatprep.subr.mxu0 0.0
    %1479 = vmatpush1.msra.mxu0 0.0
    %1480 = vmatprep.subr.mxu0 0.0
    %1481 = vmatpush1.msra.mxu0 0.0
    %1482 = vmatprep.subr.mxu0 0.0
    %1483 = vmatpush1.msra.mxu0 0.0
    %1484 = vmatprep.subr.mxu0 0.0
    %1485 = vmatpush1.msra.mxu0 0.0
    %1486 = vmatprep.subr.mxu0 0.0
    %1487 = vmatpush1.msra.mxu0 0.0
    %1488 = vmatprep.subr.mxu0 0.0
    %1489 = vmatpush1.msra.mxu0 0.0
    %1490 = vmatprep.mubr.f32.mxu0 0.0
    %1491 = vmatmul.mubr.f32.gmra.mrb[0].mxu0 %v1421
    %v1492 = vpop.f32.mrb[0].mxu0
    %v1493 = vadd.f32 %v1418, %v1492
    %v1494 = vpop.f32.mrb[0].mxu0
    %1495 = vmatprep.mubr.f32.mxu0 0.0
    %1496 = vmatmul.mubr.f32.gmra.mrb[0].mxu0 %v1424
    %v1497 = vpop.f32.mrb[0].mxu0
    %v1498 = vadd.f32 %v1418, %v1497
    %v1499 = vpop.f32.mrb[0].mxu0
    %1500 = vdwg.mxu0
    %s1501 = scalar_lea.vmem %s2, 128
    %v1502 = vld [vmem:[%s1501] sm:$0xff]
    %v1503 = vld [vmem:[%s1501 + $0x8] sm:$0xff]
    %v1504 = vld [vmem:[%s1501 + $0x10] sm:$0xff]
    %v1505 = vld [vmem:[%s1501 + $0x18] sm:$0xff]
    %v1506 = vld [vmem:[%s1501 + $0x20] sm:$0xff]
    %v1507 = vld [vmem:[%s1501 + $0x28] sm:$0xff]
    %v1508 = vld [vmem:[%s1501 + $0x30] sm:$0xff]
    %v1509 = vld [vmem:[%s1501 + $0x38] sm:$0xff]
    %v1510 = vld [vmem:[%s1501 + $0x40] sm:$0xff]
    %v1511 = vld [vmem:[%s1501 + $0x48] sm:$0xff]
    %v1512 = vld [vmem:[%s1501 + $0x50] sm:$0xff]
    %v1513 = vld [vmem:[%s1501 + $0x58] sm:$0xff]
    %v1514 = vld [vmem:[%s1501 + $0x60] sm:$0xff]
    %v1515 = vld [vmem:[%s1501 + $0x68] sm:$0xff]
    %v1516 = vld [vmem:[%s1501 + $0x70] sm:$0xff]
    %v1517 = vld [vmem:[%s1501 + $0x78] sm:$0xff]
    %1520 = vrot.lane.b32.xlu0 %v1493, 96
    %v1521 = vpop.permute.xlu0 %1520
    %1522 = vrot.lane.b32.xlu0 %v1498, 96
    %v1523 = vpop.permute.xlu0 %1522
    %1526 = vmatprep.subr.mxu0 0.0
    %1527 = vmatpush1.msra.mxu0 %v1521
    %1528 = vmatprep.subr.mxu0 0.0
    %1529 = vmatpush1.msra.mxu0 %v1523
    %1530 = vmatprep.subr.mxu0 0.0
    %1531 = vmatpush1.msra.mxu0 0.0
    %1532 = vmatprep.subr.mxu0 0.0
    %1533 = vmatpush1.msra.mxu0 0.0
    %1534 = vmatprep.subr.mxu0 0.0
    %1535 = vmatpush1.msra.mxu0 0.0
    %1536 = vmatprep.subr.mxu0 0.0
    %1537 = vmatpush1.msra.mxu0 0.0
    %1538 = vmatprep.subr.mxu0 0.0
    %1539 = vmatpush1.msra.mxu0 0.0
    %1540 = vmatprep.subr.mxu0 0.0
    %1541 = vmatpush1.msra.mxu0 0.0
    %1542 = vmatprep.subr.mxu0 0.0
    %1543 = vmatpush1.msra.mxu0 0.0
    %1544 = vmatprep.subr.mxu0 0.0
    %1545 = vmatpush1.msra.mxu0 0.0
    %1546 = vmatprep.subr.mxu0 0.0
    %1547 = vmatpush1.msra.mxu0 0.0
    %1548 = vmatprep.subr.mxu0 0.0
    %1549 = vmatpush1.msra.mxu0 0.0
    %1550 = vmatprep.subr.mxu0 0.0
    %1551 = vmatpush1.msra.mxu0 0.0
    %1552 = vmatprep.subr.mxu0 0.0
    %1553 = vmatpush1.msra.mxu0 0.0
    %1554 = vmatprep.subr.mxu0 0.0
    %1555 = vmatpush1.msra.mxu0 0.0
    %1556 = vmatprep.subr.mxu0 0.0
    %1557 = vmatpush1.msra.mxu0 0.0
    %1558 = vmatprep.subr.mxu0 0.0
    %1559 = vmatpush1.msra.mxu0 0.0
    %1560 = vmatprep.subr.mxu0 0.0
    %1561 = vmatpush1.msra.mxu0 0.0
    %1562 = vmatprep.subr.mxu0 0.0
    %1563 = vmatpush1.msra.mxu0 0.0
    %1564 = vmatprep.subr.mxu0 0.0
    %1565 = vmatpush1.msra.mxu0 0.0
    %1566 = vmatprep.subr.mxu0 0.0
    %1567 = vmatpush1.msra.mxu0 0.0
    %1568 = vmatprep.subr.mxu0 0.0
    %1569 = vmatpush1.msra.mxu0 0.0
    %1570 = vmatprep.subr.mxu0 0.0
    %1571 = vmatpush1.msra.mxu0 0.0
    %1572 = vmatprep.subr.mxu0 0.0
    %1573 = vmatpush1.msra.mxu0 0.0
    %1574 = vmatprep.subr.mxu0 0.0
    %1575 = vmatpush1.msra.mxu0 0.0
    %1576 = vmatprep.subr.mxu0 0.0
    %1577 = vmatpush1.msra.mxu0 0.0
    %1578 = vmatprep.subr.mxu0 0.0
    %1579 = vmatpush1.msra.mxu0 0.0
    %1580 = vmatprep.subr.mxu0 0.0
    %1581 = vmatpush1.msra.mxu0 0.0
    %1582 = vmatprep.subr.mxu0 0.0
    %1583 = vmatpush1.msra.mxu0 0.0
    %1584 = vmatprep.subr.mxu0 0.0
    %1585 = vmatpush1.msra.mxu0 0.0
    %1586 = vmatprep.subr.mxu0 0.0
    %1587 = vmatpush1.msra.mxu0 0.0
    %1588 = vmatprep.subr.mxu0 0.0
    %1589 = vmatpush1.msra.mxu0 0.0
    %1590 = vmatprep.mubr.f32.mxu0 0.0
    %1591 = vmatmul.mubr.f32.gmra.mrb[0].mxu0 %v297
    %v1592 = vpop.f32.mrb[0].mxu0
    %v1593 = vadd.f32 0.0, %v1592
    %v1594 = vpop.f32.mrb[0].mxu0
    %1595 = vmatprep.mubr.f32.mxu0 0.0
    %1596 = vmatmul.mubr.f32.gmra.mrb[0].mxu0 %v300
    %v1597 = vpop.f32.mrb[0].mxu0
    %v1598 = vadd.f32 0.0, %v1597
    %v1599 = vpop.f32.mrb[0].mxu0
    %1600 = vmatprep.mubr.f32.mxu0 0.0
    %1601 = vmatmul.mubr.f32.gmra.mrb[0].mxu0 %v303
    %v1602 = vpop.f32.mrb[0].mxu0
    %v1603 = vadd.f32 0.0, %v1602
    %v1604 = vpop.f32.mrb[0].mxu0
    %1605 = vmatprep.mubr.f32.mxu0 0.0
    %1606 = vmatmul.mubr.f32.gmra.mrb[0].mxu0 %v306
    %v1607 = vpop.f32.mrb[0].mxu0
    %v1608 = vadd.f32 0.0, %v1607
    %v1609 = vpop.f32.mrb[0].mxu0
    %1610 = vmatprep.mubr.f32.mxu0 0.0
    %1611 = vmatmul.mubr.f32.gmra.mrb[0].mxu0 %v309
    %v1612 = vpop.f32.mrb[0].mxu0
    %v1613 = vadd.f32 0.0, %v1612
    %v1614 = vpop.f32.mrb[0].mxu0
    %1615 = vmatprep.mubr.f32.mxu0 0.0
    %1616 = vmatmul.mubr.f32.gmra.mrb[0].mxu0 %v312
    %v1617 = vpop.f32.mrb[0].mxu0
    %v1618 = vadd.f32 0.0, %v1617
    %v1619 = vpop.f32.mrb[0].mxu0
    %1620 = vmatprep.mubr.f32.mxu0 0.0
    %1621 = vmatmul.mubr.f32.gmra.mrb[0].mxu0 %v315
    %v1622 = vpop.f32.mrb[0].mxu0
    %v1623 = vadd.f32 0.0, %v1622
    %v1624 = vpop.f32.mrb[0].mxu0
    %1625 = vmatprep.mubr.f32.mxu0 0.0
    %1626 = vmatmul.mubr.f32.gmra.mrb[0].mxu0 %v318
    %v1627 = vpop.f32.mrb[0].mxu0
    %v1628 = vadd.f32 0.0, %v1627
    %v1629 = vpop.f32.mrb[0].mxu0
    %1630 = vmatprep.mubr.f32.mxu0 0.0
    %1631 = vmatmul.mubr.f32.gmra.mrb[0].mxu0 %v321
    %v1632 = vpop.f32.mrb[0].mxu0
    %v1633 = vadd.f32 0.0, %v1632
    %v1634 = vpop.f32.mrb[0].mxu0
    %1635 = vmatprep.mubr.f32.mxu0 0.0
    %1636 = vmatmul.mubr.f32.gmra.mrb[0].mxu0 %v324
    %v1637 = vpop.f32.mrb[0].mxu0
    %v1638 = vadd.f32 0.0, %v1637
    %v1639 = vpop.f32.mrb[0].mxu0
    %1640 = vmatprep.mubr.f32.mxu0 0.0
    %1641 = vmatmul.mubr.f32.gmra.mrb[0].mxu0 %v327
    %v1642 = vpop.f32.mrb[0].mxu0
    %v1643 = vadd.f32 0.0, %v1642
    %v1644 = vpop.f32.mrb[0].mxu0
    %1645 = vmatprep.mubr.f32.mxu0 0.0
    %1646 = vmatmul.mubr.f32.gmra.mrb[0].mxu0 %v330
    %v1647 = vpop.f32.mrb[0].mxu0
    %v1648 = vadd.f32 0.0, %v1647
    %v1649 = vpop.f32.mrb[0].mxu0
    %1650 = vmatprep.mubr.f32.mxu0 0.0
    %1651 = vmatmul.mubr.f32.gmra.mrb[0].mxu0 %v333
    %v1652 = vpop.f32.mrb[0].mxu0
    %v1653 = vadd.f32 0.0, %v1652
    %v1654 = vpop.f32.mrb[0].mxu0
    %1655 = vmatprep.mubr.f32.mxu0 0.0
    %1656 = vmatmul.mubr.f32.gmra.mrb[0].mxu0 %v336
    %v1657 = vpop.f32.mrb[0].mxu0
    %v1658 = vadd.f32 0.0, %v1657
    %v1659 = vpop.f32.mrb[0].mxu0
    %1660 = vmatprep.mubr.f32.mxu0 0.0
    %1661 = vmatmul.mubr.f32.gmra.mrb[0].mxu0 %v339
    %v1662 = vpop.f32.mrb[0].mxu0
    %v1663 = vadd.f32 0.0, %v1662
    %v1664 = vpop.f32.mrb[0].mxu0
    %1665 = vmatprep.mubr.f32.mxu0 0.0
    %1666 = vmatmul.mubr.f32.gmra.mrb[0].mxu0 %v342
    %v1667 = vpop.f32.mrb[0].mxu0
    %v1668 = vadd.f32 0.0, %v1667
    %v1669 = vpop.f32.mrb[0].mxu0
    %1670 = vdwg.mxu0
    %v1671 = vmul.f32 %v99, %v1593
    %v1672 = vmul.f32 %v100, %v1598
    %v1673 = vmul.f32 %v101, %v1603
    %v1674 = vmul.f32 %v102, %v1608
    %v1675 = vmul.f32 %v103, %v1613
    %v1676 = vmul.f32 %v104, %v1618
    %v1677 = vmul.f32 %v105, %v1623
    %v1678 = vmul.f32 %v106, %v1628
    %v1679 = vmul.f32 %v107, %v1633
    %v1680 = vmul.f32 %v108, %v1638
    %v1681 = vmul.f32 %v109, %v1643
    %v1682 = vmul.f32 %v110, %v1648
    %v1683 = vmul.f32 %v111, %v1653
    %v1684 = vmul.f32 %v112, %v1658
    %v1685 = vmul.f32 %v113, %v1663
    %v1686 = vmul.f32 %v114, %v1668
    %v1687 = vadd.f32 %v1502, %v1671
    %v1688 = vadd.f32 %v1503, %v1672
    %v1689 = vadd.f32 %v1504, %v1673
    %v1690 = vadd.f32 %v1505, %v1674
    %v1691 = vadd.f32 %v1506, %v1675
    %v1692 = vadd.f32 %v1507, %v1676
    %v1693 = vadd.f32 %v1508, %v1677
    %v1694 = vadd.f32 %v1509, %v1678
    %v1695 = vadd.f32 %v1510, %v1679
    %v1696 = vadd.f32 %v1511, %v1680
    %v1697 = vadd.f32 %v1512, %v1681
    %v1698 = vadd.f32 %v1513, %v1682
    %v1699 = vadd.f32 %v1514, %v1683
    %v1700 = vadd.f32 %v1515, %v1684
    %v1701 = vadd.f32 %v1516, %v1685
    %v1702 = vadd.f32 %v1517, %v1686
    %s1703 = scalar_lea.vmem %s3, 128
    %v1704 = vld [vmem:[%s1703] sm:$0xff]
    %v1705 = vld [vmem:[%s1703 + $0x8] sm:$0xff]
    %v1706 = vld [vmem:[%s1703 + $0x10] sm:$0xff]
    %v1707 = vld [vmem:[%s1703 + $0x18] sm:$0xff]
    %v1708 = vld [vmem:[%s1703 + $0x20] sm:$0xff]
    %v1709 = vld [vmem:[%s1703 + $0x28] sm:$0xff]
    %v1710 = vld [vmem:[%s1703 + $0x30] sm:$0xff]
    %v1711 = vld [vmem:[%s1703 + $0x38] sm:$0xff]
    %v1712 = vld [vmem:[%s1703 + $0x40] sm:$0xff]
    %v1713 = vld [vmem:[%s1703 + $0x48] sm:$0xff]
    %v1714 = vld [vmem:[%s1703 + $0x50] sm:$0xff]
    %v1715 = vld [vmem:[%s1703 + $0x58] sm:$0xff]
    %v1716 = vld [vmem:[%s1703 + $0x60] sm:$0xff]
    %v1717 = vld [vmem:[%s1703 + $0x68] sm:$0xff]
    %v1718 = vld [vmem:[%s1703 + $0x70] sm:$0xff]
    %v1719 = vld [vmem:[%s1703 + $0x78] sm:$0xff]
    %1720 = vrot.lane.b32.xlu0 %v1493, 64
    %v1721 = vpop.permute.xlu0 %1720
    %1722 = vrot.lane.b32.xlu0 %v1498, 64
    %v1723 = vpop.permute.xlu0 %1722
    %1726 = vmatprep.subr.mxu0 0.0
    %1727 = vmatpush1.msra.mxu0 %v1721
    %1728 = vmatprep.subr.mxu0 0.0
    %1729 = vmatpush1.msra.mxu0 %v1723
    %1730 = vmatprep.subr.mxu0 0.0
    %1731 = vmatpush1.msra.mxu0 0.0
    %1732 = vmatprep.subr.mxu0 0.0
    %1733 = vmatpush1.msra.mxu0 0.0
    %1734 = vmatprep.subr.mxu0 0.0
    %1735 = vmatpush1.msra.mxu0 0.0
    %1736 = vmatprep.subr.mxu0 0.0
    %1737 = vmatpush1.msra.mxu0 0.0
    %1738 = vmatprep.subr.mxu0 0.0
    %1739 = vmatpush1.msra.mxu0 0.0
    %1740 = vmatprep.subr.mxu0 0.0
    %1741 = vmatpush1.msra.mxu0 0.0
    %1742 = vmatprep.subr.mxu0 0.0
    %1743 = vmatpush1.msra.mxu0 0.0
    %1744 = vmatprep.subr.mxu0 0.0
    %1745 = vmatpush1.msra.mxu0 0.0
    %1746 = vmatprep.subr.mxu0 0.0
    %1747 = vmatpush1.msra.mxu0 0.0
    %1748 = vmatprep.subr.mxu0 0.0
    %1749 = vmatpush1.msra.mxu0 0.0
    %1750 = vmatprep.subr.mxu0 0.0
    %1751 = vmatpush1.msra.mxu0 0.0
    %1752 = vmatprep.subr.mxu0 0.0
    %1753 = vmatpush1.msra.mxu0 0.0
    %1754 = vmatprep.subr.mxu0 0.0
    %1755 = vmatpush1.msra.mxu0 0.0
    %1756 = vmatprep.subr.mxu0 0.0
    %1757 = vmatpush1.msra.mxu0 0.0
    %1758 = vmatprep.subr.mxu0 0.0
    %1759 = vmatpush1.msra.mxu0 0.0
    %1760 = vmatprep.subr.mxu0 0.0
    %1761 = vmatpush1.msra.mxu0 0.0
    %1762 = vmatprep.subr.mxu0 0.0
    %1763 = vmatpush1.msra.mxu0 0.0
    %1764 = vmatprep.subr.mxu0 0.0
    %1765 = vmatpush1.msra.mxu0 0.0
    %1766 = vmatprep.subr.mxu0 0.0
    %1767 = vmatpush1.msra.mxu0 0.0
    %1768 = vmatprep.subr.mxu0 0.0
    %1769 = vmatpush1.msra.mxu0 0.0
    %1770 = vmatprep.subr.mxu0 0.0
    %1771 = vmatpush1.msra.mxu0 0.0
    %1772 = vmatprep.subr.mxu0 0.0
    %1773 = vmatpush1.msra.mxu0 0.0
    %1774 = vmatprep.subr.mxu0 0.0
    %1775 = vmatpush1.msra.mxu0 0.0
    %1776 = vmatprep.subr.mxu0 0.0
    %1777 = vmatpush1.msra.mxu0 0.0
    %1778 = vmatprep.subr.mxu0 0.0
    %1779 = vmatpush1.msra.mxu0 0.0
    %1780 = vmatprep.subr.mxu0 0.0
    %1781 = vmatpush1.msra.mxu0 0.0
    %1782 = vmatprep.subr.mxu0 0.0
    %1783 = vmatpush1.msra.mxu0 0.0
    %1784 = vmatprep.subr.mxu0 0.0
    %1785 = vmatpush1.msra.mxu0 0.0
    %1786 = vmatprep.subr.mxu0 0.0
    %1787 = vmatpush1.msra.mxu0 0.0
    %1788 = vmatprep.subr.mxu0 0.0
    %1789 = vmatpush1.msra.mxu0 0.0
    %1790 = vmatprep.mubr.f32.mxu0 0.0
    %1791 = vmatmul.mubr.f32.gmra.mrb[0].mxu0 %v297
    %v1792 = vpop.f32.mrb[0].mxu0
    %v1793 = vadd.f32 0.0, %v1792
    %v1794 = vpop.f32.mrb[0].mxu0
    %1795 = vmatprep.mubr.f32.mxu0 0.0
    %1796 = vmatmul.mubr.f32.gmra.mrb[0].mxu0 %v300
    %v1797 = vpop.f32.mrb[0].mxu0
    %v1798 = vadd.f32 0.0, %v1797
    %v1799 = vpop.f32.mrb[0].mxu0
    %1800 = vmatprep.mubr.f32.mxu0 0.0
    %1801 = vmatmul.mubr.f32.gmra.mrb[0].mxu0 %v303
    %v1802 = vpop.f32.mrb[0].mxu0
    %v1803 = vadd.f32 0.0, %v1802
    %v1804 = vpop.f32.mrb[0].mxu0
    %1805 = vmatprep.mubr.f32.mxu0 0.0
    %1806 = vmatmul.mubr.f32.gmra.mrb[0].mxu0 %v306
    %v1807 = vpop.f32.mrb[0].mxu0
    %v1808 = vadd.f32 0.0, %v1807
    %v1809 = vpop.f32.mrb[0].mxu0
    %1810 = vmatprep.mubr.f32.mxu0 0.0
    %1811 = vmatmul.mubr.f32.gmra.mrb[0].mxu0 %v309
    %v1812 = vpop.f32.mrb[0].mxu0
    %v1813 = vadd.f32 0.0, %v1812
    %v1814 = vpop.f32.mrb[0].mxu0
    %1815 = vmatprep.mubr.f32.mxu0 0.0
    %1816 = vmatmul.mubr.f32.gmra.mrb[0].mxu0 %v312
    %v1817 = vpop.f32.mrb[0].mxu0
    %v1818 = vadd.f32 0.0, %v1817
    %v1819 = vpop.f32.mrb[0].mxu0
    %1820 = vmatprep.mubr.f32.mxu0 0.0
    %1821 = vmatmul.mubr.f32.gmra.mrb[0].mxu0 %v315
    %v1822 = vpop.f32.mrb[0].mxu0
    %v1823 = vadd.f32 0.0, %v1822
    %v1824 = vpop.f32.mrb[0].mxu0
    %1825 = vmatprep.mubr.f32.mxu0 0.0
    %1826 = vmatmul.mubr.f32.gmra.mrb[0].mxu0 %v318
    %v1827 = vpop.f32.mrb[0].mxu0
    %v1828 = vadd.f32 0.0, %v1827
    %v1829 = vpop.f32.mrb[0].mxu0
    %1830 = vmatprep.mubr.f32.mxu0 0.0
    %1831 = vmatmul.mubr.f32.gmra.mrb[0].mxu0 %v321
    %v1832 = vpop.f32.mrb[0].mxu0
    %v1833 = vadd.f32 0.0, %v1832
    %v1834 = vpop.f32.mrb[0].mxu0
    %1835 = vmatprep.mubr.f32.mxu0 0.0
    %1836 = vmatmul.mubr.f32.gmra.mrb[0].mxu0 %v324
    %v1837 = vpop.f32.mrb[0].mxu0
    %v1838 = vadd.f32 0.0, %v1837
    %v1839 = vpop.f32.mrb[0].mxu0
    %1840 = vmatprep.mubr.f32.mxu0 0.0
    %1841 = vmatmul.mubr.f32.gmra.mrb[0].mxu0 %v327
    %v1842 = vpop.f32.mrb[0].mxu0
    %v1843 = vadd.f32 0.0, %v1842
    %v1844 = vpop.f32.mrb[0].mxu0
    %1845 = vmatprep.mubr.f32.mxu0 0.0
    %1846 = vmatmul.mubr.f32.gmra.mrb[0].mxu0 %v330
    %v1847 = vpop.f32.mrb[0].mxu0
    %v1848 = vadd.f32 0.0, %v1847
    %v1849 = vpop.f32.mrb[0].mxu0
    %1850 = vmatprep.mubr.f32.mxu0 0.0
    %1851 = vmatmul.mubr.f32.gmra.mrb[0].mxu0 %v333
    %v1852 = vpop.f32.mrb[0].mxu0
    %v1853 = vadd.f32 0.0, %v1852
    %v1854 = vpop.f32.mrb[0].mxu0
    %1855 = vmatprep.mubr.f32.mxu0 0.0
    %1856 = vmatmul.mubr.f32.gmra.mrb[0].mxu0 %v336
    %v1857 = vpop.f32.mrb[0].mxu0
    %v1858 = vadd.f32 0.0, %v1857
    %v1859 = vpop.f32.mrb[0].mxu0
    %1860 = vmatprep.mubr.f32.mxu0 0.0
    %1861 = vmatmul.mubr.f32.gmra.mrb[0].mxu0 %v339
    %v1862 = vpop.f32.mrb[0].mxu0
    %v1863 = vadd.f32 0.0, %v1862
    %v1864 = vpop.f32.mrb[0].mxu0
    %1865 = vmatprep.mubr.f32.mxu0 0.0
    %1866 = vmatmul.mubr.f32.gmra.mrb[0].mxu0 %v342
    %v1867 = vpop.f32.mrb[0].mxu0
    %v1868 = vadd.f32 0.0, %v1867
    %v1869 = vpop.f32.mrb[0].mxu0
    %1870 = vdwg.mxu0
    %v1871 = vmul.f32 %v99, %v1793
    %v1872 = vmul.f32 %v100, %v1798
    %v1873 = vmul.f32 %v101, %v1803
    %v1874 = vmul.f32 %v102, %v1808
    %v1875 = vmul.f32 %v103, %v1813
    %v1876 = vmul.f32 %v104, %v1818
    %v1877 = vmul.f32 %v105, %v1823
    %v1878 = vmul.f32 %v106, %v1828
    %v1879 = vmul.f32 %v107, %v1833
    %v1880 = vmul.f32 %v108, %v1838
    %v1881 = vmul.f32 %v109, %v1843
    %v1882 = vmul.f32 %v110, %v1848
    %v1883 = vmul.f32 %v111, %v1853
    %v1884 = vmul.f32 %v112, %v1858
    %v1885 = vmul.f32 %v113, %v1863
    %v1886 = vmul.f32 %v114, %v1868
    %v1887 = vadd.f32 %v1704, %v1871
    %v1888 = vadd.f32 %v1705, %v1872
    %v1889 = vadd.f32 %v1706, %v1873
    %v1890 = vadd.f32 %v1707, %v1874
    %v1891 = vadd.f32 %v1708, %v1875
    %v1892 = vadd.f32 %v1709, %v1876
    %v1893 = vadd.f32 %v1710, %v1877
    %v1894 = vadd.f32 %v1711, %v1878
    %v1895 = vadd.f32 %v1712, %v1879
    %v1896 = vadd.f32 %v1713, %v1880
    %v1897 = vadd.f32 %v1714, %v1881
    %v1898 = vadd.f32 %v1715, %v1882
    %v1899 = vadd.f32 %v1716, %v1883
    %v1900 = vadd.f32 %v1717, %v1884
    %v1901 = vadd.f32 %v1718, %v1885
    %v1902 = vadd.f32 %v1719, %v1886
    %v1903 = vsel %vm135, %v1493, 0
    %v1905 = vsel %vm135, %v1498, 0
    %v1908 = vsel %vm135, %v1687, 0
    %v1911 = vsel %vm135, %v1688, 0
    %v1914 = vsel %vm135, %v1689, 0
    %v1917 = vsel %vm135, %v1690, 0
    %v1920 = vsel %vm135, %v1691, 0
    %v1923 = vsel %vm135, %v1692, 0
    %v1926 = vsel %vm135, %v1693, 0
    %v1929 = vsel %vm135, %v1694, 0
    %v1932 = vsel %vm135, %v1695, 0
    %v1935 = vsel %vm135, %v1696, 0
    %v1938 = vsel %vm135, %v1697, 0
    %v1941 = vsel %vm135, %v1698, 0
    %v1944 = vsel %vm135, %v1699, 0
    %v1947 = vsel %vm135, %v1700, 0
    %v1950 = vsel %vm135, %v1701, 0
    %v1953 = vsel %vm135, %v1702, 0
    %1955 = vmatprep.subr.mxu0 0.0
    %1956 = vmatpush1.xpose.msra.mxu0 %v1908
    %1957 = vmatprep.subr.mxu0 0.0
    %1958 = vmatpush1.xpose.msra.mxu0 %v1911
    %1959 = vmatprep.subr.mxu0 0.0
    %1960 = vmatpush1.xpose.msra.mxu0 %v1914
    %1961 = vmatprep.subr.mxu0 0.0
    %1962 = vmatpush1.xpose.msra.mxu0 %v1917
    %1963 = vmatprep.subr.mxu0 0.0
    %1964 = vmatpush1.xpose.msra.mxu0 %v1920
    %1965 = vmatprep.subr.mxu0 0.0
    %1966 = vmatpush1.xpose.msra.mxu0 %v1923
    %1967 = vmatprep.subr.mxu0 0.0
    %1968 = vmatpush1.xpose.msra.mxu0 %v1926
    %1969 = vmatprep.subr.mxu0 0.0
    %1970 = vmatpush1.xpose.msra.mxu0 %v1929
    %1971 = vmatprep.subr.mxu0 0.0
    %1972 = vmatpush1.xpose.msra.mxu0 %v1932
    %1973 = vmatprep.subr.mxu0 0.0
    %1974 = vmatpush1.xpose.msra.mxu0 %v1935
    %1975 = vmatprep.subr.mxu0 0.0
    %1976 = vmatpush1.xpose.msra.mxu0 %v1938
    %1977 = vmatprep.subr.mxu0 0.0
    %1978 = vmatpush1.xpose.msra.mxu0 %v1941
    %1979 = vmatprep.subr.mxu0 0.0
    %1980 = vmatpush1.xpose.msra.mxu0 %v1944
    %1981 = vmatprep.subr.mxu0 0.0
    %1982 = vmatpush1.xpose.msra.mxu0 %v1947
    %1983 = vmatprep.subr.mxu0 0.0
    %1984 = vmatpush1.xpose.msra.mxu0 %v1950
    %1985 = vmatprep.subr.mxu0 0.0
    %1986 = vmatpush1.xpose.msra.mxu0 %v1953
    %1987 = vmatprep.subr.mxu0 0.0
    %1988 = vmatpush1.xpose.msra.mxu0 0.0
    %1989 = vmatprep.subr.mxu0 0.0
    %1990 = vmatpush1.xpose.msra.mxu0 0.0
    %1991 = vmatprep.subr.mxu0 0.0
    %1992 = vmatpush1.xpose.msra.mxu0 0.0
    %1993 = vmatprep.subr.mxu0 0.0
    %1994 = vmatpush1.xpose.msra.mxu0 0.0
    %1995 = vmatprep.subr.mxu0 0.0
    %1996 = vmatpush1.xpose.msra.mxu0 0.0
    %1997 = vmatprep.subr.mxu0 0.0
    %1998 = vmatpush1.xpose.msra.mxu0 0.0
    %1999 = vmatprep.subr.mxu0 0.0
    %2000 = vmatpush1.xpose.msra.mxu0 0.0
    %2001 = vmatprep.subr.mxu0 0.0
    %2002 = vmatpush1.xpose.msra.mxu0 0.0
    %2003 = vmatprep.subr.mxu0 0.0
    %2004 = vmatpush1.xpose.msra.mxu0 0.0
    %2005 = vmatprep.subr.mxu0 0.0
    %2006 = vmatpush1.xpose.msra.mxu0 0.0
    %2007 = vmatprep.subr.mxu0 0.0
    %2008 = vmatpush1.xpose.msra.mxu0 0.0
    %2009 = vmatprep.subr.mxu0 0.0
    %2010 = vmatpush1.xpose.msra.mxu0 0.0
    %2011 = vmatprep.subr.mxu0 0.0
    %2012 = vmatpush1.xpose.msra.mxu0 0.0
    %2013 = vmatprep.subr.mxu0 0.0
    %2014 = vmatpush1.xpose.msra.mxu0 0.0
    %2015 = vmatprep.subr.mxu0 0.0
    %2016 = vmatpush1.xpose.msra.mxu0 0.0
    %2017 = vmatprep.subr.mxu0 0.0
    %2018 = vmatpush1.xpose.msra.mxu0 0.0
    %2019 = vmatprep.mubr.f32.mxu0 0.0
    %2020 = vmatmul.mubr.f32.gmra.mrb[0].mxu0 %v1903
    %v2021 = vpop.f32.mrb[0].mxu0
    %v2022 = vadd.f32 0.0, %v2021
    %v2023 = vpop.f32.mrb[0].mxu0
    %2024 = vmatprep.mubr.f32.mxu0 0.0
    %2025 = vmatmul.mubr.f32.gmra.mrb[0].mxu0 %v1905
    %v2026 = vpop.f32.mrb[0].mxu0
    %v2027 = vadd.f32 0.0, %v2026
    %v2028 = vpop.f32.mrb[0].mxu0
    %2029 = vdwg.mxu0
    %v2030 = vmul.f32 %v2022, 0.35355338
    %v2031 = vmul.f32 %v2027, 0.35355338
    %v2032 = vadd.f32 %v2030, %v81
    %v2033 = vadd.f32 %v2031, %v82
    %2034 = vmax.xlane.f32.xlu0 %v2032
    %v2035 = vpop.xlane.xlu0 %2034
    %2036 = vmax.xlane.f32.xlu0 %v2033
    %v2037 = vpop.xlane.xlu0 %2036
    %v2038 = vsub.f32 %v2032, %v2035
    %v2039 = vsub.f32 %v2033, %v2037
    %v2040 = vmul.f32 %v2038, 1.442695
    %v2041 = vpow.pop %v2040
    %v2042 = vmul.f32 %v2039, 1.442695
    %v2043 = vpow.pop %v2042
    %2044 = vmatprep.subr.mxu0 0.0
    %2045 = vmatpush1.msra.mxu0 %v115
    %2046 = vmatprep.subr.mxu0 0.0
    %2047 = vmatpush1.msra.mxu0 %v116
    %2048 = vmatprep.subr.mxu0 0.0
    %2049 = vmatpush1.msra.mxu0 %v117
    %2050 = vmatprep.subr.mxu0 0.0
    %2051 = vmatpush1.msra.mxu0 %v118
    %2052 = vmatprep.subr.mxu0 0.0
    %2053 = vmatpush1.msra.mxu0 %v119
    %2054 = vmatprep.subr.mxu0 0.0
    %2055 = vmatpush1.msra.mxu0 %v120
    %2056 = vmatprep.subr.mxu0 0.0
    %2057 = vmatpush1.msra.mxu0 %v121
    %2058 = vmatprep.subr.mxu0 0.0
    %2059 = vmatpush1.msra.mxu0 %v122
    %2060 = vmatprep.subr.mxu0 0.0
    %2061 = vmatpush1.msra.mxu0 %v123
    %2062 = vmatprep.subr.mxu0 0.0
    %2063 = vmatpush1.msra.mxu0 %v124
    %2064 = vmatprep.subr.mxu0 0.0
    %2065 = vmatpush1.msra.mxu0 %v125
    %2066 = vmatprep.subr.mxu0 0.0
    %2067 = vmatpush1.msra.mxu0 %v126
    %2068 = vmatprep.subr.mxu0 0.0
    %2069 = vmatpush1.msra.mxu0 %v127
    %2070 = vmatprep.subr.mxu0 0.0
    %2071 = vmatpush1.msra.mxu0 %v128
    %2072 = vmatprep.subr.mxu0 0.0
    %2073 = vmatpush1.msra.mxu0 %v129
    %2074 = vmatprep.subr.mxu0 0.0
    %2075 = vmatpush1.msra.mxu0 %v130
    %2076 = vmatprep.subr.mxu0 0.0
    %2077 = vmatpush1.msra.mxu0 0.0
    %2078 = vmatprep.subr.mxu0 0.0
    %2079 = vmatpush1.msra.mxu0 0.0
    %2080 = vmatprep.subr.mxu0 0.0
    %2081 = vmatpush1.msra.mxu0 0.0
    %2082 = vmatprep.subr.mxu0 0.0
    %2083 = vmatpush1.msra.mxu0 0.0
    %2084 = vmatprep.subr.mxu0 0.0
    %2085 = vmatpush1.msra.mxu0 0.0
    %2086 = vmatprep.subr.mxu0 0.0
    %2087 = vmatpush1.msra.mxu0 0.0
    %2088 = vmatprep.subr.mxu0 0.0
    %2089 = vmatpush1.msra.mxu0 0.0
    %2090 = vmatprep.subr.mxu0 0.0
    %2091 = vmatpush1.msra.mxu0 0.0
    %2092 = vmatprep.subr.mxu0 0.0
    %2093 = vmatpush1.msra.mxu0 0.0
    %2094 = vmatprep.subr.mxu0 0.0
    %2095 = vmatpush1.msra.mxu0 0.0
    %2096 = vmatprep.subr.mxu0 0.0
    %2097 = vmatpush1.msra.mxu0 0.0
    %2098 = vmatprep.subr.mxu0 0.0
    %2099 = vmatpush1.msra.mxu0 0.0
    %2100 = vmatprep.subr.mxu0 0.0
    %2101 = vmatpush1.msra.mxu0 0.0
    %2102 = vmatprep.subr.mxu0 0.0
    %2103 = vmatpush1.msra.mxu0 0.0
    %2104 = vmatprep.subr.mxu0 0.0
    %2105 = vmatpush1.msra.mxu0 0.0
    %2106 = vmatprep.subr.mxu0 0.0
    %2107 = vmatpush1.msra.mxu0 0.0
    %2108 = vmatprep.mubr.f32.mxu0 0.0
    %2109 = vmatmul.mubr.f32.gmra.mrb[0].mxu0 %v2041
    %v2110 = vpop.f32.mrb[0].mxu0
    %v2111 = vadd.f32 1e-30, %v2110
    %v2112 = vpop.f32.mrb[0].mxu0
    %2113 = vmatprep.mubr.f32.mxu0 0.0
    %2114 = vmatmul.mubr.f32.gmra.mrb[0].mxu0 %v2043
    %v2115 = vpop.f32.mrb[0].mxu0
    %v2116 = vadd.f32 1e-30, %v2115
    %v2117 = vpop.f32.mrb[0].mxu0
    %2118 = vdwg.mxu0
    %v2119 = vrcp.pop %v2111
    %v2120 = vmul.f32 %v2041, %v2119
    %v2121 = vrcp.pop %v2116
    %v2122 = vmul.f32 %v2043, %v2121
    %2123 = vmatprep.subr.mxu0 0.0
    %2124 = vmatpush1.msra.mxu0 %v1887
    %2125 = vmatprep.subr.mxu0 0.0
    %2126 = vmatpush1.msra.mxu0 %v1888
    %2127 = vmatprep.subr.mxu0 0.0
    %2128 = vmatpush1.msra.mxu0 %v1889
    %2129 = vmatprep.subr.mxu0 0.0
    %2130 = vmatpush1.msra.mxu0 %v1890
    %2131 = vmatprep.subr.mxu0 0.0
    %2132 = vmatpush1.msra.mxu0 %v1891
    %2133 = vmatprep.subr.mxu0 0.0
    %2134 = vmatpush1.msra.mxu0 %v1892
    %2135 = vmatprep.subr.mxu0 0.0
    %2136 = vmatpush1.msra.mxu0 %v1893
    %2137 = vmatprep.subr.mxu0 0.0
    %2138 = vmatpush1.msra.mxu0 %v1894
    %2139 = vmatprep.subr.mxu0 0.0
    %2140 = vmatpush1.msra.mxu0 %v1895
    %2141 = vmatprep.subr.mxu0 0.0
    %2142 = vmatpush1.msra.mxu0 %v1896
    %2143 = vmatprep.subr.mxu0 0.0
    %2144 = vmatpush1.msra.mxu0 %v1897
    %2145 = vmatprep.subr.mxu0 0.0
    %2146 = vmatpush1.msra.mxu0 %v1898
    %2147 = vmatprep.subr.mxu0 0.0
    %2148 = vmatpush1.msra.mxu0 %v1899
    %2149 = vmatprep.subr.mxu0 0.0
    %2150 = vmatpush1.msra.mxu0 %v1900
    %2151 = vmatprep.subr.mxu0 0.0
    %2152 = vmatpush1.msra.mxu0 %v1901
    %2153 = vmatprep.subr.mxu0 0.0
    %2154 = vmatpush1.msra.mxu0 %v1902
    %2155 = vmatprep.subr.mxu0 0.0
    %2156 = vmatpush1.msra.mxu0 0.0
    %2157 = vmatprep.subr.mxu0 0.0
    %2158 = vmatpush1.msra.mxu0 0.0
    %2159 = vmatprep.subr.mxu0 0.0
    %2160 = vmatpush1.msra.mxu0 0.0
    %2161 = vmatprep.subr.mxu0 0.0
    %2162 = vmatpush1.msra.mxu0 0.0
    %2163 = vmatprep.subr.mxu0 0.0
    %2164 = vmatpush1.msra.mxu0 0.0
    %2165 = vmatprep.subr.mxu0 0.0
    %2166 = vmatpush1.msra.mxu0 0.0
    %2167 = vmatprep.subr.mxu0 0.0
    %2168 = vmatpush1.msra.mxu0 0.0
    %2169 = vmatprep.subr.mxu0 0.0
    %2170 = vmatpush1.msra.mxu0 0.0
    %2171 = vmatprep.subr.mxu0 0.0
    %2172 = vmatpush1.msra.mxu0 0.0
    %2173 = vmatprep.subr.mxu0 0.0
    %2174 = vmatpush1.msra.mxu0 0.0
    %2175 = vmatprep.subr.mxu0 0.0
    %2176 = vmatpush1.msra.mxu0 0.0
    %2177 = vmatprep.subr.mxu0 0.0
    %2178 = vmatpush1.msra.mxu0 0.0
    %2179 = vmatprep.subr.mxu0 0.0
    %2180 = vmatpush1.msra.mxu0 0.0
    %2181 = vmatprep.subr.mxu0 0.0
    %2182 = vmatpush1.msra.mxu0 0.0
    %2183 = vmatprep.subr.mxu0 0.0
    %2184 = vmatpush1.msra.mxu0 0.0
    %2185 = vmatprep.subr.mxu0 0.0
    %2186 = vmatpush1.msra.mxu0 0.0
    %2187 = vmatprep.mubr.f32.mxu0 0.0
    %2188 = vmatmul.mubr.f32.gmra.mrb[0].mxu0 %v2120
    %v2189 = vpop.f32.mrb[0].mxu0
    %v2190 = vadd.f32 0.0, %v2189
    %v2191 = vpop.f32.mrb[0].mxu0
    %2192 = vmatprep.mubr.f32.mxu0 0.0
    %2193 = vmatmul.mubr.f32.gmra.mrb[0].mxu0 %v2122
    %v2194 = vpop.f32.mrb[0].mxu0
    %v2195 = vadd.f32 0.0, %v2194
    %v2196 = vpop.f32.mrb[0].mxu0
    %2197 = vdwg.mxu0
    %s2198 = scalar_lea.vmem %s11, 32
    %v2199 = vld [vmem:[%s2198] sm:$0xff]
    %v2200 = vld [vmem:[%s2198 + $0x8] sm:$0xff]
    %v2201 = vld [vmem:[%s2198 + $0x10] sm:$0xff]
    %v2202 = vld [vmem:[%s2198 + $0x18] sm:$0xff]
    %s2203 = scalar_lea.vmem %s12, 1
    %v2204 = vld [vmem:[%s2203] sm:$0x1]
    %v2206 = vlaneseq
    %v2207 = vshrl.u32 %v2206, 7
    %v2208 = vsub.s32 0, %v2207
    %v2209 = vrot.slane %v2204, %v2208
    %v2212 = vsel %vm135, %v2190, 0
    %v2215 = vsel %vm135, %v2195, 0
    %2217 = vmatprep.subr.mxu0 0.0
    %2218 = vmatpush1.msra.mxu0 %v2199
    %2219 = vmatprep.subr.mxu0 0.0
    %2220 = vmatpush1.msra.mxu0 %v2200
    %2221 = vmatprep.subr.mxu0 0.0
    %2222 = vmatpush1.msra.mxu0 %v2201
    %2223 = vmatprep.subr.mxu0 0.0
    %2224 = vmatpush1.msra.mxu0 %v2202
    %2225 = vmatprep.subr.mxu0 0.0
    %2226 = vmatpush1.msra.mxu0 0.0
    %2227 = vmatprep.subr.mxu0 0.0
    %2228 = vmatpush1.msra.mxu0 0.0
    %2229 = vmatprep.subr.mxu0 0.0
    %2230 = vmatpush1.msra.mxu0 0.0
    %2231 = vmatprep.subr.mxu0 0.0
    %2232 = vmatpush1.msra.mxu0 0.0
    %2233 = vmatprep.subr.mxu0 0.0
    %2234 = vmatpush1.msra.mxu0 0.0
    %2235 = vmatprep.subr.mxu0 0.0
    %2236 = vmatpush1.msra.mxu0 0.0
    %2237 = vmatprep.subr.mxu0 0.0
    %2238 = vmatpush1.msra.mxu0 0.0
    %2239 = vmatprep.subr.mxu0 0.0
    %2240 = vmatpush1.msra.mxu0 0.0
    %2241 = vmatprep.subr.mxu0 0.0
    %2242 = vmatpush1.msra.mxu0 0.0
    %2243 = vmatprep.subr.mxu0 0.0
    %2244 = vmatpush1.msra.mxu0 0.0
    %2245 = vmatprep.subr.mxu0 0.0
    %2246 = vmatpush1.msra.mxu0 0.0
    %2247 = vmatprep.subr.mxu0 0.0
    %2248 = vmatpush1.msra.mxu0 0.0
    %2249 = vmatprep.subr.mxu0 0.0
    %2250 = vmatpush1.msra.mxu0 0.0
    %2251 = vmatprep.subr.mxu0 0.0
    %2252 = vmatpush1.msra.mxu0 0.0
    %2253 = vmatprep.subr.mxu0 0.0
    %2254 = vmatpush1.msra.mxu0 0.0
    %2255 = vmatprep.subr.mxu0 0.0
    %2256 = vmatpush1.msra.mxu0 0.0
    %2257 = vmatprep.subr.mxu0 0.0
    %2258 = vmatpush1.msra.mxu0 0.0
    %2259 = vmatprep.subr.mxu0 0.0
    %2260 = vmatpush1.msra.mxu0 0.0
    %2261 = vmatprep.subr.mxu0 0.0
    %2262 = vmatpush1.msra.mxu0 0.0
    %2263 = vmatprep.subr.mxu0 0.0
    %2264 = vmatpush1.msra.mxu0 0.0
    %2265 = vmatprep.subr.mxu0 0.0
    %2266 = vmatpush1.msra.mxu0 0.0
    %2267 = vmatprep.subr.mxu0 0.0
    %2268 = vmatpush1.msra.mxu0 0.0
    %2269 = vmatprep.subr.mxu0 0.0
    %2270 = vmatpush1.msra.mxu0 0.0
    %2271 = vmatprep.subr.mxu0 0.0
    %2272 = vmatpush1.msra.mxu0 0.0
    %2273 = vmatprep.subr.mxu0 0.0
    %2274 = vmatpush1.msra.mxu0 0.0
    %2275 = vmatprep.subr.mxu0 0.0
    %2276 = vmatpush1.msra.mxu0 0.0
    %2277 = vmatprep.subr.mxu0 0.0
    %2278 = vmatpush1.msra.mxu0 0.0
    %2279 = vmatprep.subr.mxu0 0.0
    %2280 = vmatpush1.msra.mxu0 0.0
    %2281 = vmatprep.mubr.f32.mxu0 0.0
    %2282 = vmatmul.mubr.f32.gmra.mrb[0].mxu0 %v2212
    %v2283 = vpop.f32.mrb[0].mxu0
    %v2284 = vadd.f32 %v2209, %v2283
    %v2285 = vpop.f32.mrb[0].mxu0
    %2286 = vmatprep.mubr.f32.mxu0 0.0
    %2287 = vmatmul.mubr.f32.gmra.mrb[0].mxu0 %v2215
    %v2288 = vpop.f32.mrb[0].mxu0
    %v2289 = vadd.f32 %v2209, %v2288
    %v2290 = vpop.f32.mrb[0].mxu0
    %2291 = vdwg.mxu0
    %v2292 = vadd.f32 %v2284, %v1405
    %v2293 = vadd.f32 %v2289, %v1406
    %s2294 = scalar_lea.vmem %s13, 1
    %v2295 = vld [vmem:[%s2294] sm:$0x1]
    %s2296 = scalar_lea.vmem %s14, 1
    %v2297 = vld [vmem:[%s2296] sm:$0x1]
    %v2298 = vsel %vm135, %v2292, 0.0
    %2299 = vadd.xlane.f32.xlu0 %v2298
    %v2300 = vpop.xlane.xlu0 %2299
    %v2301 = vsel %vm135, %v2293, 0.0
    %2302 = vadd.xlane.f32.xlu0 %v2301
    %v2303 = vpop.xlane.xlu0 %2302
    %v2304 = vmul.f32 %v2300, %v142
    %v2305 = vmul.f32 %v2303, %v142
    %v2306 = vsub.f32 %v2292, %v2304
    %v2307 = vsub.f32 %v2293, %v2305
    %v2308 = vmul.f32 %v2306, %v2306
    %v2309 = vmul.f32 %v2307, %v2307
    %v2310 = vsel %vm135, %v2308, 0.0
    %2311 = vadd.xlane.f32.xlu0 %v2310
    %v2312 = vpop.xlane.xlu0 %2311
    %v2313 = vsel %vm135, %v2309, 0.0
    %2314 = vadd.xlane.f32.xlu0 %v2313
    %v2315 = vpop.xlane.xlu0 %2314
    %v2316 = vmul.f32 %v2312, %v142
    %v2317 = vmul.f32 %v2315, %v142
    %v2318 = vadd.f32 %v2316, 1e-12
    %v2319 = vadd.f32 %v2317, 1e-12
    %v2320 = vrsqrt.pop %v2318
    %v2321 = vrsqrt.pop %v2319
    %v2322 = vmul.f32 %v2306, %v2320
    %v2323 = vmul.f32 %v2307, %v2321
    %v2325 = vlaneseq
    %v2326 = vshrl.u32 %v2325, 7
    %v2327 = vsub.s32 0, %v2326
    %v2328 = vrot.slane %v2295, %v2327
    %v2330 = vmul.f32 %v2322, %v2328
    %v2331 = vmul.f32 %v2323, %v2328
    %v2333 = vlaneseq
    %v2334 = vshrl.u32 %v2333, 7
    %v2335 = vsub.s32 0, %v2334
    %v2336 = vrot.slane %v2297, %v2335
    %v2338 = vadd.f32 %v2330, %v2336
    %v2339 = vadd.f32 %v2331, %v2336
    %s2340 = scalar_lea.vmem %s15, 32
    %v2341 = vld [vmem:[%s2340] sm:$0xff]
    %v2342 = vld [vmem:[%s2340 + $0x8] sm:$0xff]
    %v2343 = vld [vmem:[%s2340 + $0x10] sm:$0xff]
    %v2344 = vld [vmem:[%s2340 + $0x18] sm:$0xff]
    %s2345 = scalar_lea.vmem %s16, 1
    %v2346 = vld [vmem:[%s2345] sm:$0x1]
    %v2348 = vlaneseq
    %v2349 = vshrl.u32 %v2348, 7
    %v2350 = vsub.s32 0, %v2349
    %v2351 = vrot.slane %v2346, %v2350
    %v2354 = vsel %vm135, %v2338, 0
    %v2357 = vsel %vm135, %v2339, 0
    %2359 = vmatprep.subr.mxu0 0.0
    %2360 = vmatpush1.msra.mxu0 %v2341
    %2361 = vmatprep.subr.mxu0 0.0
    %2362 = vmatpush1.msra.mxu0 %v2342
    %2363 = vmatprep.subr.mxu0 0.0
    %2364 = vmatpush1.msra.mxu0 %v2343
    %2365 = vmatprep.subr.mxu0 0.0
    %2366 = vmatpush1.msra.mxu0 %v2344
    %2367 = vmatprep.subr.mxu0 0.0
    %2368 = vmatpush1.msra.mxu0 0.0
    %2369 = vmatprep.subr.mxu0 0.0
    %2370 = vmatpush1.msra.mxu0 0.0
    %2371 = vmatprep.subr.mxu0 0.0
    %2372 = vmatpush1.msra.mxu0 0.0
    %2373 = vmatprep.subr.mxu0 0.0
    %2374 = vmatpush1.msra.mxu0 0.0
    %2375 = vmatprep.subr.mxu0 0.0
    %2376 = vmatpush1.msra.mxu0 0.0
    %2377 = vmatprep.subr.mxu0 0.0
    %2378 = vmatpush1.msra.mxu0 0.0
    %2379 = vmatprep.subr.mxu0 0.0
    %2380 = vmatpush1.msra.mxu0 0.0
    %2381 = vmatprep.subr.mxu0 0.0
    %2382 = vmatpush1.msra.mxu0 0.0
    %2383 = vmatprep.subr.mxu0 0.0
    %2384 = vmatpush1.msra.mxu0 0.0
    %2385 = vmatprep.subr.mxu0 0.0
    %2386 = vmatpush1.msra.mxu0 0.0
    %2387 = vmatprep.subr.mxu0 0.0
    %2388 = vmatpush1.msra.mxu0 0.0
    %2389 = vmatprep.subr.mxu0 0.0
    %2390 = vmatpush1.msra.mxu0 0.0
    %2391 = vmatprep.subr.mxu0 0.0
    %2392 = vmatpush1.msra.mxu0 0.0
    %2393 = vmatprep.subr.mxu0 0.0
    %2394 = vmatpush1.msra.mxu0 0.0
    %2395 = vmatprep.subr.mxu0 0.0
    %2396 = vmatpush1.msra.mxu0 0.0
    %2397 = vmatprep.subr.mxu0 0.0
    %2398 = vmatpush1.msra.mxu0 0.0
    %2399 = vmatprep.subr.mxu0 0.0
    %2400 = vmatpush1.msra.mxu0 0.0
    %2401 = vmatprep.subr.mxu0 0.0
    %2402 = vmatpush1.msra.mxu0 0.0
    %2403 = vmatprep.subr.mxu0 0.0
    %2404 = vmatpush1.msra.mxu0 0.0
    %2405 = vmatprep.subr.mxu0 0.0
    %2406 = vmatpush1.msra.mxu0 0.0
    %2407 = vmatprep.subr.mxu0 0.0
    %2408 = vmatpush1.msra.mxu0 0.0
    %2409 = vmatprep.subr.mxu0 0.0
    %2410 = vmatpush1.msra.mxu0 0.0
    %2411 = vmatprep.subr.mxu0 0.0
    %2412 = vmatpush1.msra.mxu0 0.0
    %2413 = vmatprep.subr.mxu0 0.0
    %2414 = vmatpush1.msra.mxu0 0.0
    %2415 = vmatprep.subr.mxu0 0.0
    %2416 = vmatpush1.msra.mxu0 0.0
    %2417 = vmatprep.subr.mxu0 0.0
    %2418 = vmatpush1.msra.mxu0 0.0
    %2419 = vmatprep.subr.mxu0 0.0
    %2420 = vmatpush1.msra.mxu0 0.0
    %2421 = vmatprep.subr.mxu0 0.0
    %2422 = vmatpush1.msra.mxu0 0.0
    %2423 = vmatprep.mubr.f32.mxu0 0.0
    %2424 = vmatmul.mubr.f32.gmra.mrb[0].mxu0 %v2354
    %v2425 = vpop.f32.mrb[0].mxu0
    %v2426 = vadd.f32 %v2351, %v2425
    %v2427 = vpop.f32.mrb[0].mxu0
    %2428 = vmatprep.mubr.f32.mxu0 0.0
    %2429 = vmatmul.mubr.f32.gmra.mrb[0].mxu0 %v2357
    %v2430 = vpop.f32.mrb[0].mxu0
    %v2431 = vadd.f32 %v2351, %v2430
    %v2432 = vpop.f32.mrb[0].mxu0
    %2433 = vdwg.mxu0
    %v2434 = vmul.f32 %v2426, %v2426
    %v2435 = vmul.f32 %v2431, %v2431
    %v2436 = vmul.f32 %v2426, %v2434
    %v2437 = vmul.f32 %v2431, %v2435
    %v2438 = vmul.f32 %v2436, 0.044715
    %v2439 = vmul.f32 %v2437, 0.044715
    %v2440 = vadd.f32 %v2426, %v2438
    %v2441 = vadd.f32 %v2431, %v2439
    %v2442 = vmul.f32 %v2440, 0.7978846
    %v2443 = vmul.f32 %v2441, 0.7978846
    %v2444 = vtanh.pop %v2442
    %v2445 = vtanh.pop %v2443
    %v2446 = vadd.f32 %v2444, 1.0
    %v2447 = vadd.f32 %v2445, 1.0
    %v2448 = vmul.f32 %v2446, 0.5
    %v2449 = vmul.f32 %v2447, 0.5
    %v2450 = vmul.f32 %v2426, %v2448
    %v2451 = vmul.f32 %v2431, %v2449
    %s2452 = scalar_lea.vmem %s17, 128
    %v2453 = vld [vmem:[%s2452] sm:$0xff]
    %v2454 = vld [vmem:[%s2452 + $0x8] sm:$0xff]
    %v2455 = vld [vmem:[%s2452 + $0x10] sm:$0xff]
    %v2456 = vld [vmem:[%s2452 + $0x18] sm:$0xff]
    %v2457 = vld [vmem:[%s2452 + $0x20] sm:$0xff]
    %v2458 = vld [vmem:[%s2452 + $0x28] sm:$0xff]
    %v2459 = vld [vmem:[%s2452 + $0x30] sm:$0xff]
    %v2460 = vld [vmem:[%s2452 + $0x38] sm:$0xff]
    %v2461 = vld [vmem:[%s2452 + $0x40] sm:$0xff]
    %v2462 = vld [vmem:[%s2452 + $0x48] sm:$0xff]
    %v2463 = vld [vmem:[%s2452 + $0x50] sm:$0xff]
    %v2464 = vld [vmem:[%s2452 + $0x58] sm:$0xff]
    %v2465 = vld [vmem:[%s2452 + $0x60] sm:$0xff]
    %v2466 = vld [vmem:[%s2452 + $0x68] sm:$0xff]
    %v2467 = vld [vmem:[%s2452 + $0x70] sm:$0xff]
    %v2468 = vld [vmem:[%s2452 + $0x78] sm:$0xff]
    %s2469 = scalar_lea.vmem %s18, 1
    %v2470 = vld [vmem:[%s2469] sm:$0x1]
    %v2472 = vlaneseq
    %v2473 = vshrl.u32 %v2472, 7
    %v2474 = vsub.s32 0, %v2473
    %v2475 = vrot.slane %v2470, %v2474
    %2477 = vmatprep.subr.mxu0 0.0
    %2478 = vmatpush1.msra.mxu0 %v2453
    %2479 = vmatprep.subr.mxu0 0.0
    %2480 = vmatpush1.msra.mxu0 %v2454
    %2481 = vmatprep.subr.mxu0 0.0
    %2482 = vmatpush1.msra.mxu0 %v2455
    %2483 = vmatprep.subr.mxu0 0.0
    %2484 = vmatpush1.msra.mxu0 %v2456
    %2485 = vmatprep.subr.mxu0 0.0
    %2486 = vmatpush1.msra.mxu0 %v2457
    %2487 = vmatprep.subr.mxu0 0.0
    %2488 = vmatpush1.msra.mxu0 %v2458
    %2489 = vmatprep.subr.mxu0 0.0
    %2490 = vmatpush1.msra.mxu0 %v2459
    %2491 = vmatprep.subr.mxu0 0.0
    %2492 = vmatpush1.msra.mxu0 %v2460
    %2493 = vmatprep.subr.mxu0 0.0
    %2494 = vmatpush1.msra.mxu0 %v2461
    %2495 = vmatprep.subr.mxu0 0.0
    %2496 = vmatpush1.msra.mxu0 %v2462
    %2497 = vmatprep.subr.mxu0 0.0
    %2498 = vmatpush1.msra.mxu0 %v2463
    %2499 = vmatprep.subr.mxu0 0.0
    %2500 = vmatpush1.msra.mxu0 %v2464
    %2501 = vmatprep.subr.mxu0 0.0
    %2502 = vmatpush1.msra.mxu0 %v2465
    %2503 = vmatprep.subr.mxu0 0.0
    %2504 = vmatpush1.msra.mxu0 %v2466
    %2505 = vmatprep.subr.mxu0 0.0
    %2506 = vmatpush1.msra.mxu0 %v2467
    %2507 = vmatprep.subr.mxu0 0.0
    %2508 = vmatpush1.msra.mxu0 %v2468
    %2509 = vmatprep.subr.mxu0 0.0
    %2510 = vmatpush1.msra.mxu0 0.0
    %2511 = vmatprep.subr.mxu0 0.0
    %2512 = vmatpush1.msra.mxu0 0.0
    %2513 = vmatprep.subr.mxu0 0.0
    %2514 = vmatpush1.msra.mxu0 0.0
    %2515 = vmatprep.subr.mxu0 0.0
    %2516 = vmatpush1.msra.mxu0 0.0
    %2517 = vmatprep.subr.mxu0 0.0
    %2518 = vmatpush1.msra.mxu0 0.0
    %2519 = vmatprep.subr.mxu0 0.0
    %2520 = vmatpush1.msra.mxu0 0.0
    %2521 = vmatprep.subr.mxu0 0.0
    %2522 = vmatpush1.msra.mxu0 0.0
    %2523 = vmatprep.subr.mxu0 0.0
    %2524 = vmatpush1.msra.mxu0 0.0
    %2525 = vmatprep.subr.mxu0 0.0
    %2526 = vmatpush1.msra.mxu0 0.0
    %2527 = vmatprep.subr.mxu0 0.0
    %2528 = vmatpush1.msra.mxu0 0.0
    %2529 = vmatprep.subr.mxu0 0.0
    %2530 = vmatpush1.msra.mxu0 0.0
    %2531 = vmatprep.subr.mxu0 0.0
    %2532 = vmatpush1.msra.mxu0 0.0
    %2533 = vmatprep.subr.mxu0 0.0
    %2534 = vmatpush1.msra.mxu0 0.0
    %2535 = vmatprep.subr.mxu0 0.0
    %2536 = vmatpush1.msra.mxu0 0.0
    %2537 = vmatprep.subr.mxu0 0.0
    %2538 = vmatpush1.msra.mxu0 0.0
    %2539 = vmatprep.subr.mxu0 0.0
    %2540 = vmatpush1.msra.mxu0 0.0
    %2541 = vmatprep.mubr.f32.mxu0 0.0
    %2542 = vmatmul.mubr.f32.gmra.mrb[0].mxu0 %v2450
    %v2543 = vpop.f32.mrb[0].mxu0
    %v2544 = vadd.f32 %v2475, %v2543
    %v2545 = vpop.f32.mrb[0].mxu0
    %2546 = vmatprep.mubr.f32.mxu0 0.0
    %2547 = vmatmul.mubr.f32.gmra.mrb[0].mxu0 %v2451
    %v2548 = vpop.f32.mrb[0].mxu0
    %v2549 = vadd.f32 %v2475, %v2548
    %v2550 = vpop.f32.mrb[0].mxu0
    %2551 = vdwg.mxu0
    %v2552 = vadd.f32 %v2544, %v2338
    %v2553 = vadd.f32 %v2549, %v2339
    %s2554 = scalar_lea.vmem %s19, 1
    %v2555 = vld [vmem:[%s2554] sm:$0x1]
    %s2556 = scalar_lea.vmem %s20, 1
    %v2557 = vld [vmem:[%s2556] sm:$0x1]
    %v2558 = vsel %vm135, %v2552, 0.0
    %2559 = vadd.xlane.f32.xlu0 %v2558
    %v2560 = vpop.xlane.xlu0 %2559
    %v2561 = vsel %vm135, %v2553, 0.0
    %2562 = vadd.xlane.f32.xlu0 %v2561
    %v2563 = vpop.xlane.xlu0 %2562
    %v2564 = vmul.f32 %v2560, %v142
    %v2565 = vmul.f32 %v2563, %v142
    %v2566 = vsub.f32 %v2552, %v2564
    %v2567 = vsub.f32 %v2553, %v2565
    %v2568 = vmul.f32 %v2566, %v2566
    %v2569 = vmul.f32 %v2567, %v2567
    %v2570 = vsel %vm135, %v2568, 0.0
    %2571 = vadd.xlane.f32.xlu0 %v2570
    %v2572 = vpop.xlane.xlu0 %2571
    %v2573 = vsel %vm135, %v2569, 0.0
    %2574 = vadd.xlane.f32.xlu0 %v2573
    %v2575 = vpop.xlane.xlu0 %2574
    %v2576 = vmul.f32 %v2572, %v142
    %v2577 = vmul.f32 %v2575, %v142
    %v2578 = vadd.f32 %v2576, 1e-12
    %v2579 = vadd.f32 %v2577, 1e-12
    %v2580 = vrsqrt.pop %v2578
    %v2581 = vrsqrt.pop %v2579
    %v2582 = vmul.f32 %v2566, %v2580
    %v2583 = vmul.f32 %v2567, %v2581
    %v2585 = vlaneseq
    %v2586 = vshrl.u32 %v2585, 7
    %v2587 = vsub.s32 0, %v2586
    %v2588 = vrot.slane %v2555, %v2587
    %v2590 = vmul.f32 %v2582, %v2588
    %v2591 = vmul.f32 %v2583, %v2588
    %v2593 = vlaneseq
    %v2594 = vshrl.u32 %v2593, 7
    %v2595 = vsub.s32 0, %v2594
    %v2596 = vrot.slane %v2557, %v2595
    %v2598 = vadd.f32 %v2590, %v2596
    %v2599 = vadd.f32 %v2591, %v2596
    %v2601 = vrot.slane %v2599, 7
    %vm2603 = vcmask 1040384
    %v2604 = vsel %vm2603, %v2598, %v2601
    %v2605 = vld [vmem:[%s21] sm:$0xff]
    %v2606 = vld [vmem:[%s21 + $0x8] sm:$0xff]
    %v2607 = vld [vmem:[%s21 + $0x10] sm:$0xff]
    %v2608 = vld [vmem:[%s21 + $0x18] sm:$0xff]
    %v2609 = vld [vmem:[%s22] sm:$0x1]
    %v2611 = vlaneseq
    %v2612 = vshrl.u32 %v2611, 7
    %v2613 = vsub.s32 0, %v2612
    %v2614 = vrot.slane %v2609, %v2613
    %v2617 = vsel %vm135, %v2604, 0
    %2619 = vmatprep.subr.mxu0 0.0
    %2620 = vmatpush1.msra.mxu0 %v2605
    %2621 = vmatprep.subr.mxu0 0.0
    %2622 = vmatpush1.msra.mxu0 %v2606
    %2623 = vmatprep.subr.mxu0 0.0
    %2624 = vmatpush1.msra.mxu0 %v2607
    %2625 = vmatprep.subr.mxu0 0.0
    %2626 = vmatpush1.msra.mxu0 %v2608
    %2627 = vmatprep.subr.mxu0 0.0
    %2628 = vmatpush1.msra.mxu0 0.0
    %2629 = vmatprep.subr.mxu0 0.0
    %2630 = vmatpush1.msra.mxu0 0.0
    %2631 = vmatprep.subr.mxu0 0.0
    %2632 = vmatpush1.msra.mxu0 0.0
    %2633 = vmatprep.subr.mxu0 0.0
    %2634 = vmatpush1.msra.mxu0 0.0
    %2635 = vmatprep.subr.mxu0 0.0
    %2636 = vmatpush1.msra.mxu0 0.0
    %2637 = vmatprep.subr.mxu0 0.0
    %2638 = vmatpush1.msra.mxu0 0.0
    %2639 = vmatprep.subr.mxu0 0.0
    %2640 = vmatpush1.msra.mxu0 0.0
    %2641 = vmatprep.subr.mxu0 0.0
    %2642 = vmatpush1.msra.mxu0 0.0
    %2643 = vmatprep.subr.mxu0 0.0
    %2644 = vmatpush1.msra.mxu0 0.0
    %2645 = vmatprep.subr.mxu0 0.0
    %2646 = vmatpush1.msra.mxu0 0.0
    %2647 = vmatprep.subr.mxu0 0.0
    %2648 = vmatpush1.msra.mxu0 0.0
    %2649 = vmatprep.subr.mxu0 0.0
    %2650 = vmatpush1.msra.mxu0 0.0
    %2651 = vmatprep.subr.mxu0 0.0
    %2652 = vmatpush1.msra.mxu0 0.0
    %2653 = vmatprep.subr.mxu0 0.0
    %2654 = vmatpush1.msra.mxu0 0.0
    %2655 = vmatprep.subr.mxu0 0.0
    %2656 = vmatpush1.msra.mxu0 0.0
    %2657 = vmatprep.subr.mxu0 0.0
    %2658 = vmatpush1.msra.mxu0 0.0
    %2659 = vmatprep.subr.mxu0 0.0
    %2660 = vmatpush1.msra.mxu0 0.0
    %2661 = vmatprep.subr.mxu0 0.0
    %2662 = vmatpush1.msra.mxu0 0.0
    %2663 = vmatprep.subr.mxu0 0.0
    %2664 = vmatpush1.msra.mxu0 0.0
    %2665 = vmatprep.subr.mxu0 0.0
    %2666 = vmatpush1.msra.mxu0 0.0
    %2667 = vmatprep.subr.mxu0 0.0
    %2668 = vmatpush1.msra.mxu0 0.0
    %2669 = vmatprep.subr.mxu0 0.0
    %2670 = vmatpush1.msra.mxu0 0.0
    %2671 = vmatprep.subr.mxu0 0.0
    %2672 = vmatpush1.msra.mxu0 0.0
    %2673 = vmatprep.subr.mxu0 0.0
    %2674 = vmatpush1.msra.mxu0 0.0
    %2675 = vmatprep.subr.mxu0 0.0
    %2676 = vmatpush1.msra.mxu0 0.0
    %2677 = vmatprep.subr.mxu0 0.0
    %2678 = vmatpush1.msra.mxu0 0.0
    %2679 = vmatprep.subr.mxu0 0.0
    %2680 = vmatpush1.msra.mxu0 0.0
    %2681 = vmatprep.subr.mxu0 0.0
    %2682 = vmatpush1.msra.mxu0 0.0
    %2683 = vmatprep.mubr.f32.mxu0 0.0
    %2684 = vmatmul.mubr.f32.gmra.mrb[0].mxu0 %v2617
    %v2685 = vpop.f32.mrb[0].mxu0
    %v2686 = vadd.f32 %v2614, %v2685
    %v2687 = vpop.f32.mrb[0].mxu0
    %2688 = vdwg.mxu0
    %v2689 = vtanh.pop %v2686
    %v2690 = vld [vmem:[%s23] sm:$0xff]
    %v2691 = vld [vmem:[%s23 + $0x8] sm:$0xff]
    %v2692 = vld [vmem:[%s23 + $0x10] sm:$0xff]
    %v2693 = vld [vmem:[%s23 + $0x18] sm:$0xff]
    %v2694 = vld [vmem:[%s24] sm:$0x1]
    %v2696 = vlaneseq
    %v2697 = vshrl.u32 %v2696, 7
    %v2698 = vsub.s32 0, %v2697
    %v2699 = vrot.slane %v2694, %v2698
    %v2702 = vsel %vm135, %v2689, 0
    %2704 = vmatprep.subr.mxu0 0.0
    %2705 = vmatpush1.msra.mxu0 %v2690
    %2706 = vmatprep.subr.mxu0 0.0
    %2707 = vmatpush1.msra.mxu0 %v2691
    %2708 = vmatprep.subr.mxu0 0.0
    %2709 = vmatpush1.msra.mxu0 %v2692
    %2710 = vmatprep.subr.mxu0 0.0
    %2711 = vmatpush1.msra.mxu0 %v2693
    %2712 = vmatprep.subr.mxu0 0.0
    %2713 = vmatpush1.msra.mxu0 0.0
    %2714 = vmatprep.subr.mxu0 0.0
    %2715 = vmatpush1.msra.mxu0 0.0
    %2716 = vmatprep.subr.mxu0 0.0
    %2717 = vmatpush1.msra.mxu0 0.0
    %2718 = vmatprep.subr.mxu0 0.0
    %2719 = vmatpush1.msra.mxu0 0.0
    %2720 = vmatprep.subr.mxu0 0.0
    %2721 = vmatpush1.msra.mxu0 0.0
    %2722 = vmatprep.subr.mxu0 0.0
    %2723 = vmatpush1.msra.mxu0 0.0
    %2724 = vmatprep.subr.mxu0 0.0
    %2725 = vmatpush1.msra.mxu0 0.0
    %2726 = vmatprep.subr.mxu0 0.0
    %2727 = vmatpush1.msra.mxu0 0.0
    %2728 = vmatprep.subr.mxu0 0.0
    %2729 = vmatpush1.msra.mxu0 0.0
    %2730 = vmatprep.subr.mxu0 0.0
    %2731 = vmatpush1.msra.mxu0 0.0
    %2732 = vmatprep.subr.mxu0 0.0
    %2733 = vmatpush1.msra.mxu0 0.0
    %2734 = vmatprep.subr.mxu0 0.0
    %2735 = vmatpush1.msra.mxu0 0.0
    %2736 = vmatprep.subr.mxu0 0.0
    %2737 = vmatpush1.msra.mxu0 0.0
    %2738 = vmatprep.subr.mxu0 0.0
    %2739 = vmatpush1.msra.mxu0 0.0
    %2740 = vmatprep.subr.mxu0 0.0
    %2741 = vmatpush1.msra.mxu0 0.0
    %2742 = vmatprep.subr.mxu0 0.0
    %2743 = vmatpush1.msra.mxu0 0.0
    %2744 = vmatprep.subr.mxu0 0.0
    %2745 = vmatpush1.msra.mxu0 0.0
    %2746 = vmatprep.subr.mxu0 0.0
    %2747 = vmatpush1.msra.mxu0 0.0
    %2748 = vmatprep.subr.mxu0 0.0
    %2749 = vmatpush1.msra.mxu0 0.0
    %2750 = vmatprep.subr.mxu0 0.0
    %2751 = vmatpush1.msra.mxu0 0.0
    %2752 = vmatprep.subr.mxu0 0.0
    %2753 = vmatpush1.msra.mxu0 0.0
    %2754 = vmatprep.subr.mxu0 0.0
    %2755 = vmatpush1.msra.mxu0 0.0
    %2756 = vmatprep.subr.mxu0 0.0
    %2757 = vmatpush1.msra.mxu0 0.0
    %2758 = vmatprep.subr.mxu0 0.0
    %2759 = vmatpush1.msra.mxu0 0.0
    %2760 = vmatprep.subr.mxu0 0.0
    %2761 = vmatpush1.msra.mxu0 0.0
    %2762 = vmatprep.subr.mxu0 0.0
    %2763 = vmatpush1.msra.mxu0 0.0
    %2764 = vmatprep.subr.mxu0 0.0
    %2765 = vmatpush1.msra.mxu0 0.0
    %2766 = vmatprep.subr.mxu0 0.0
    %2767 = vmatpush1.msra.mxu0 0.0
    %2768 = vmatprep.mubr.f32.mxu0 0.0
    %2769 = vmatmul.mubr.f32.gmra.mrb[0].mxu0 %v2702
    %v2770 = vpop.f32.mrb[0].mxu0
    %v2771 = vadd.f32 %v2699, %v2770
    %v2772 = vpop.f32.mrb[0].mxu0
    %2773 = vdwg.mxu0
    %2774 = vst [vmem:[#allocation2] sm:$0x3] %v2771
    // Predicated region
    $region102: #{forward.1} parent=1 // pred_check
      _
    $region103: #{forward.1} parent=1 // pred_check_branch
      %2776 = sbr.rel (0) target = $region105
    $region104: #{forward.1} parent=1 // pred_region
      %s2778 = ssub.s32 32, 32
      %2779 = vsyncadd [#allocation3], %s2778
      %s2781 = sshll.u32 [#allocation2], 4
      %s2782 = int_to_ptr.vmem [resolvable:$true] %s2781
      %2784 = dma.vmem_to_hbm [thread:$0]  %s2782, 32, %s25, [#allocation3]
    $region105: #{forward.1} parent=1 // pred_fallthru
      _
    // Predicated region
    $region106: #{forward.1} parent=1 // pred_check
      _
    $region107: #{forward.1} parent=1 // pred_check_branch
      %2786 = sbr.rel (0) target = $region109
    $region108: #{forward.1} parent=1 // pred_region
      %2787 = dma.done [#allocation3], 32
    $region109: #{forward.1} parent=1 // pred_fallthru
      _
    %2788 = vsyncpa [#allocation3], 1

</llo_original>
